<compile_context>
chip_gen: v5e
topology: v5e:2x2
jax: 0.10.0
libtpu: 0.0.40
codegen_flags: <defaults>
</compile_context>

<pallas_src>
import functools

import jax
import jax.numpy as jnp
import numpy as np
from jax.experimental import pallas as pl
from jax.experimental.pallas import tpu as pltpu


def _cdiv(a, b):
    return -(-a // b)


# ---------------------------------------------------------------------------
# Downscale conv: nn.Conv1d(Ci, Co, kernel=scale+1, stride=scale, padding=1)
# as a row-tiled dense matmul (batch and T_out folded into rows, taps folded
# into the contraction dim, split into "main" and "last" to avoid a concat).
# ---------------------------------------------------------------------------
def _downscale_kernel(main_ref, last_ref, wm_ref, wl_ref, b_ref, o_ref):
    acc = jnp.dot(main_ref[...].astype(jnp.bfloat16), wm_ref[...],
                  preferred_element_type=jnp.float32)
    acc = acc + jnp.dot(last_ref[...].astype(jnp.bfloat16), wl_ref[...],
                        preferred_element_type=jnp.float32)
    acc = acc + b_ref[...]
    o_ref[...] = acc.astype(o_ref.dtype)


def downscale_conv(x, p, *, scale, row_tile=512):
    """x: (B, T, Ci) channels-last.  p: {'wm': (scale*Ci, Co) bf16,
    'wl': (Ci, Co) bf16, 'b': (1, Co) f32}."""
    B, T, Ci = x.shape
    K = scale + 1
    wm, wl, b = p["wm"], p["wl"], p["b"]
    Co = wm.shape[-1]
    T_out = (T + 2 - (K - 1) - 1) // scale + 1
    x_pad = jnp.pad(x, ((0, 0), (1, 1), (0, 0)))
    # taps 0..scale-1: pure frame reshape; tap `scale`: one strided slice.
    main = x_pad[:, :T_out * scale, :].reshape(B, T_out, scale * Ci)
    last = x_pad[:, scale:scale + T_out * scale:scale, :][:, :T_out, :]
    rows = B * T_out
    main2d = main.reshape(rows, scale * Ci)
    last2d = last.reshape(rows, Ci)
    if rows <= row_tile:
        tR, nR = rows, 1
    else:
        tR = row_tile
        nR = _cdiv(rows, tR)
        rp = nR * tR - rows
        if rp:
            main2d = jnp.pad(main2d, ((0, rp), (0, 0)))
            last2d = jnp.pad(last2d, ((0, rp), (0, 0)))
    out = pl.pallas_call(
        _downscale_kernel,
        out_shape=jax.ShapeDtypeStruct((nR * tR, Co), x.dtype),
        grid=(nR,),
        in_specs=[
            pl.BlockSpec((tR, scale * Ci), lambda r: (r, 0)),
            pl.BlockSpec((tR, Ci), lambda r: (r, 0)),
            pl.BlockSpec((scale * Ci, Co), lambda r: (0, 0)),   # resident
            pl.BlockSpec((Ci, Co), lambda r: (0, 0)),           # resident
            pl.BlockSpec((1, Co), lambda r: (0, 0)),            # resident
        ],
        out_specs=pl.BlockSpec((tR, Co), lambda r: (r, 0)),
        compiler_params=pltpu.CompilerParams(dimension_semantics=("parallel",)),
    )(main2d, last2d, wm, wl, b)
    return out[:rows].reshape(B, T_out, Co)


# ---------------------------------------------------------------------------
# Fused MBConv: expand(1x1, SiLU) -> dilated depthwise(K, SiLU)
# -> project(1x1, optional Tanh) -> residual.  Tiled over (B, T-tiles); halo
# rows come from overlapping frames, hidden activations stay in VMEM.
# ---------------------------------------------------------------------------
def _mbconv_kernel(xf_ref, w1_ref, b1_ref, wd_ref, bd_ref, w2_ref, b2_ref,
                   o_ref, *, K, dilation, pad, tile_t, t_total, final_tanh):
    j = pl.program_id(1)
    xp = xf_ref[0, 0]                                  # (tile_t + 2*pad, C)

    # 1x1 expand + SiLU (MXU, bf16 in / f32 acc; w1 already bf16)
    h = jnp.dot(xp.astype(jnp.bfloat16), w1_ref[...],
                preferred_element_type=jnp.float32)
    h = h + b1_ref[...]
    h = h * jax.nn.sigmoid(h)                          # SiLU in f32

    # Rows that correspond to the depthwise conv's zero padding (global
    # sequence boundaries / T padding) must be exactly zero, not silu(b1).
    g0 = j * tile_t
    gi = g0 + jax.lax.broadcasted_iota(jnp.int32, (h.shape[0], 1), 0)
    h = jnp.where((gi >= pad) & (gi < pad + t_total), h, 0.0)

    # dilated depthwise conv: K static shifted slices, VPU accumulate.
    acc = jnp.zeros((tile_t, h.shape[1]), jnp.float32)
    for k in range(K):                                 # K small & static
        off = k * dilation
        acc = acc + h[off:off + tile_t, :] * wd_ref[k]
    acc = acc + bd_ref[...]
    acc = acc * jax.nn.sigmoid(acc)                    # SiLU

    # 1x1 project (+ optional Tanh) + residual (residual in input dtype)
    y = jnp.dot(acc.astype(jnp.bfloat16), w2_ref[...],
                preferred_element_type=jnp.float32)
    y = y + b2_ref[...]
    if final_tanh:
        y = jnp.tanh(y)
    o_ref[0] = (xp[pad:pad + tile_t, :] + y).astype(o_ref.dtype)


def mbconv(x, p, *, K, dilation, final_tanh=False, t_tile=512):
    # TODO(synk): original MBConv source not provided; standard inverted
    # bottleneck (1x1 expand -> dilated depthwise -> 1x1 project, SiLU,
    # residual skip) with `activation` applied after the projection.
    B, T, C = x.shape
    pad = dilation * (K - 1) // 2
    if T <= t_tile:
        tT, nT = T, 1
    else:
        tT = t_tile
        nT = _cdiv(T, tT)
    T_padded = nT * tT
    xp = jnp.pad(x, ((0, 0), (pad, pad + (T_padded - T)), (0, 0)))
    # Overlapping frames supply the depthwise halo rows for each T-tile.
    frames = jnp.stack(
        [xp[:, j * tT:j * tT + tT + 2 * pad, :] for j in range(nT)], axis=1)
    H = p["w1"].shape[1]
    kern = functools.partial(_mbconv_kernel, K=K, dilation=dilation, pad=pad,
                             tile_t=tT, t_total=T, final_tanh=final_tanh)
    out = pl.pallas_call(
        kern,
        out_shape=jax.ShapeDtypeStruct((B, T_padded, C), x.dtype),
        grid=(B, nT),
        in_specs=[
            pl.BlockSpec((1, 1, tT + 2 * pad, C), lambda b, j: (b, j, 0, 0)),
            pl.BlockSpec((C, H), lambda b, j: (0, 0)),        # resident weights
            pl.BlockSpec((1, H), lambda b, j: (0, 0)),
            pl.BlockSpec((K, 1, H), lambda b, j: (0, 0, 0)),
            pl.BlockSpec((1, H), lambda b, j: (0, 0)),
            pl.BlockSpec((H, C), lambda b, j: (0, 0)),
            pl.BlockSpec((1, C), lambda b, j: (0, 0)),
        ],
        out_specs=pl.BlockSpec((1, tT, C), lambda b, j: (b, j, 0)),
        compiler_params=pltpu.CompilerParams(
            dimension_semantics=("parallel", "parallel")),
    )(frames, p["w1"], p["b1"], p["wd"], p["bd"], p["w2"], p["b2"])
    return out if T_padded == T else out[:, :T, :]


# ---------------------------------------------------------------------------
# SQ-VAE quantizer, tiled over N.  Stochastic kernel: distance matmul
# (per-row ||x||^2 constant dropped: softmax/argmax invariant), softmax +
# log-softmax statistics (psum / p*logp accumulated across N-tiles),
# gumbel-softmax sampling and soft-code @ codebook matmul, all fused.
# ---------------------------------------------------------------------------
def _sq_quantize_kernel(x_ref, e_ref, e2_ref, g_ref, z_ref, psum_ref, plp_ref,
                        *, precision, inv_temperature, n_valid, tile_rows):
    i = pl.program_id(0)

    @pl.when(i == 0)
    def _():
        psum_ref[...] = jnp.zeros_like(psum_ref)
        plp_ref[...] = jnp.zeros_like(plp_ref)

    xb = x_ref[...].astype(jnp.bfloat16)
    eb = e_ref[...]                                               # bf16 codebook
    cross = jax.lax.dot_general(xb, eb, (((1,), (1,)), ((), ())),
                                preferred_element_type=jnp.float32)  # (tN, M)
    # logits = -0.5*prec*dist up to a per-row constant (||x||^2 cancels)
    logits = precision * cross - (0.5 * precision) * e2_ref[...]

    # soft-assignment statistics + masked partial reductions
    m = jnp.max(logits, axis=-1, keepdims=True)
    zc = logits - m
    ez = jnp.exp(zc)
    s = jnp.sum(ez, axis=-1, keepdims=True)
    prob = ez / s
    logprob = zc - jnp.log(s)
    rid = i * tile_rows + jax.lax.broadcasted_iota(jnp.int32, (tile_rows, 1), 0)
    valid = (rid < n_valid).astype(jnp.float32)
    pv = prob * valid
    psum_ref[...] += jnp.sum(pv, axis=0, keepdims=True)           # (1, M)
    plp_ref[...] += jnp.sum(pv * logprob, axis=0, keepdims=True)  # (1, M)

    # gumbel-softmax sampling (noise streamed in per tile)
    y = (logits + g_ref[...]) * inv_temperature
    my = jnp.max(y, axis=-1, keepdims=True)
    ey = jnp.exp(y - my)
    enc = ey / jnp.sum(ey, axis=-1, keepdims=True)

    # soft codes @ codebook (MXU)
    z_ref[...] = jnp.dot(enc.astype(jnp.bfloat16), eb,
                         preferred_element_type=jnp.float32).astype(z_ref.dtype)


def quantize_stochastic(x_flat, emb_bf16, emb_sq, gumbel, *, precision,
                        inv_temperature, row_tile=512):
    N, D = x_flat.shape
    M = emb_bf16.shape[0]
    if N <= row_tile:
        tN, nT = N, 1
        xq, gq = x_flat, gumbel
    else:
        tN = row_tile
        nT = _cdiv(N, tN)
        rp = nT * tN - N
        xq = jnp.pad(x_flat, ((0, rp), (0, 0))) if rp else x_flat
        gq = jnp.pad(gumbel, ((0, rp), (0, 0))) if rp else gumbel
    kern = functools.partial(_sq_quantize_kernel, precision=precision,
                             inv_temperature=inv_temperature, n_valid=N,
                             tile_rows=tN)
    z, psum, plp = pl.pallas_call(
        kern,
        out_shape=(jax.ShapeDtypeStruct((nT * tN, D), jnp.float32),
                   jax.ShapeDtypeStruct((1, M), jnp.float32),
                   jax.ShapeDtypeStruct((1, M), jnp.float32)),
        grid=(nT,),
        in_specs=[
            pl.BlockSpec((tN, D), lambda i: (i, 0)),
            pl.BlockSpec((M, D), lambda i: (0, 0)),     # resident codebook
            pl.BlockSpec((1, M), lambda i: (0, 0)),     # resident ||e||^2
            pl.BlockSpec((tN, M), lambda i: (i, 0)),    # gumbel noise tile
        ],
        out_specs=(pl.BlockSpec((tN, D), lambda i: (i, 0)),
                   pl.BlockSpec((1, M), lambda i: (0, 0)),   # accumulators
                   pl.BlockSpec((1, M), lambda i: (0, 0))),
        # N axis carries the psum/plp reduction -> arbitrary.
        compiler_params=pltpu.CompilerParams(dimension_semantics=("arbitrary",)),
    )(xq, emb_bf16, emb_sq, gq)
    return z[:N], psum, plp


def _sq_argmax_kernel(x_ref, e_ref, e2_ref, zq_ref, *, precision):
    # TODO(synk): bf16 cross matmul can flip ties vs. the f32 reference for
    # near-equidistant codes.
    xb = x_ref[...].astype(jnp.bfloat16)
    eb = e_ref[...]
    cross = jax.lax.dot_general(xb, eb, (((1,), (1,)), ((), ())),
                                preferred_element_type=jnp.float32)
    logits = precision * cross - (0.5 * precision) * e2_ref[...]
    m = jnp.max(logits, axis=-1, keepdims=True)
    M = logits.shape[1]
    col = jax.lax.broadcasted_iota(jnp.int32, logits.shape, 1)
    idx = jnp.min(jnp.where(logits >= m, col, M), axis=-1, keepdims=True)
    onehot = (col == idx).astype(jnp.bfloat16)
    zq_ref[...] = jnp.dot(onehot, eb,
                          preferred_element_type=jnp.float32).astype(zq_ref.dtype)


def quantize_deterministic(x_flat, emb_bf16, emb_sq, *, precision, row_tile=512):
    N, D = x_flat.shape
    M = emb_bf16.shape[0]
    if N <= row_tile:
        tN, nT = N, 1
        xq = x_flat
    else:
        tN = row_tile
        nT = _cdiv(N, tN)
        rp = nT * tN - N
        xq = jnp.pad(x_flat, ((0, rp), (0, 0))) if rp else x_flat
    kern = functools.partial(_sq_argmax_kernel, precision=precision)
    zq = pl.pallas_call(
        kern,
        out_shape=jax.ShapeDtypeStruct((nT * tN, D), jnp.float32),
        grid=(nT,),
        in_specs=[
            pl.BlockSpec((tN, D), lambda i: (i, 0)),
            pl.BlockSpec((M, D), lambda i: (0, 0)),
            pl.BlockSpec((1, M), lambda i: (0, 0)),
        ],
        out_specs=pl.BlockSpec((tN, D), lambda i: (i, 0)),
        compiler_params=pltpu.CompilerParams(dimension_semantics=("parallel",)),
    )(xq, emb_bf16, emb_sq)
    return zq[:N]


# ---------------------------------------------------------------------------
# Deterministic parameter construction (no checkpoint loading).
# ---------------------------------------------------------------------------
def _uniform(key, shape, fan_in):
    s = 1.0 / np.sqrt(fan_in)
    return jax.random.uniform(key, shape, jnp.float32, -s, s)


def _downscale_params(key, scale, cin, cout):
    K = scale + 1
    kw, kb = jax.random.split(key)
    w = _uniform(kw, (K, cin, cout), K * cin)
    return {"wm": w[:scale].reshape(scale * cin, cout).astype(jnp.bfloat16),
            "wl": w[scale].astype(jnp.bfloat16),
            "b": _uniform(kb, (1, cout), K * cin)}


def _mbconv_params(key, cin, hidden, cout, K):
    k1, k2, k3, k4, k5, k6 = jax.random.split(key, 6)
    return {"w1": _uniform(k1, (cin, hidden), cin).astype(jnp.bfloat16),
            "b1": _uniform(k2, (1, hidden), cin),
            "wd": _uniform(k3, (K, 1, hidden), K),
            "bd": _uniform(k4, (1, hidden), K),
            "w2": _uniform(k5, (hidden, cout), hidden).astype(jnp.bfloat16),
            "b2": _uniform(k6, (1, cout), hidden)}


class Encoder:
    """Pallas-backed equivalent of the orpheus Encoder (forward pass only)."""

    def __init__(self, key, sequence_length, codebook_width, h_dims, scales,
                 blocks_per_stages, layers_per_blocks, se_ratio=None,
                 log_param_q_init=4.60517018599, kernel=3):
        # TODO(synk): se_ratio (SE block) and AttentionLayer
        # (layers_per_block=None) paths not implemented.
        assert se_ratio is None
        assert all(l is not None for l in layers_per_blocks)
        self.kernel = kernel
        self.stages = []
        n_stages = len(h_dims) - 1
        keys = jax.random.split(key, n_stages + 1)
        for i in range(n_stages):
            cin, cout = h_dims[i], h_dims[i + 1]
            sequence_length = int(sequence_length / scales[i])
            skeys = jax.random.split(keys[i], 2 + blocks_per_stages[i])
            stage = {"scale": scales[i],
                     "down": _downscale_params(skeys[0], scales[i], cin, cout),
                     "blocks": [], "final": None}
            for bidx in range(blocks_per_stages[i]):
                bkeys = jax.random.split(skeys[2 + bidx], layers_per_blocks[i])
                layers = []
                for j in range(layers_per_blocks[i]):
                    dil = 1 if j == 0 else 2 ** j   # dilation_factor = 2
                    layers.append((_mbconv_params(bkeys[j], cout, 2 * cout, cout,
                                                  kernel), dil))
                stage["blocks"].append(layers)
            if i + 1 == n_stages:   # last stage -> final MBConv with Tanh
                stage["final"] = _mbconv_params(skeys[1], cout, 2 * cout, cout,
                                                kernel)
            self.stages.append(stage)
        qk1, qk2 = jax.random.split(keys[-1])
        self.embedding = jax.random.normal(qk1, (codebook_width, h_dims[-1]),
                                           jnp.float32) * 0.5
        self.embedding_bf16 = self.embedding.astype(jnp.bfloat16)
        self.embedding_sq = jnp.sum(self.embedding * self.embedding,
                                    axis=1).reshape(1, -1)        # (1, M) f32
        # TODO(synk): SQEmbedding source not provided; SQ-VAE-style Gaussian
        # stochastic quantizer (precision = 1 / (1 + exp(log_param_q))).
        self.log_param_q = float(log_param_q_init)
        self.precision = float(1.0 / (1.0 + np.exp(log_param_q_init)))
        # TODO(synk): default noise key -> identical gumbel noise when no
        # fresh `rng` is passed to __call__.
        self._noise_key = qk2

    def encode(self, x_btc):
        for st in self.stages:
            x_btc = downscale_conv(x_btc, st["down"], scale=st["scale"])
            for block in st["blocks"]:
                for mb, dil in block:
                    x_btc = mbconv(x_btc, mb, K=self.kernel, dilation=dil)
            if st["final"] is not None:
                x_btc = mbconv(x_btc, st["final"], K=self.kernel, dilation=1,
                               final_tanh=True)
        return x_btc

    def __call__(self, x_nct, deterministic=False, temperature=0.5, rng=None):
        x_btc = jnp.transpose(x_nct, (0, 2, 1))   # NCW -> (B, T, C)
        h_btc = self.encode(x_btc)
        h_nct = jnp.transpose(h_btc, (0, 2, 1))
        B, T, D = h_btc.shape
        h_flat = h_btc.reshape(B * T, D)

        if deterministic:
            q = quantize_deterministic(h_flat, self.embedding_bf16,
                                       self.embedding_sq,
                                       precision=self.precision)
            return h_nct, jnp.transpose(q.reshape(B, T, D), (0, 2, 1))

        if rng is None:
            rng = self._noise_key
        M = self.embedding.shape[0]
        gumbel = jax.random.gumbel(rng, (B * T, M), jnp.float32)
        z_flat, psum, plp = quantize_stochastic(
            h_flat, self.embedding_bf16, self.embedding_sq, gumbel,
            precision=self.precision,
            inv_temperature=float(1.0 / temperature))
        z_nct = jnp.transpose(z_flat.reshape(B, T, D), (0, 2, 1))

        avg_probs = psum[0] / (B * T)
        perplexity = jnp.exp(-jnp.sum(avg_probs * jnp.log(avg_probs + 1e-7)))
        # TODO(synk): reference SQ-VAE loss may also include a precision-
        # weighted distance term; only the negative-entropy term is computed.
        loss = jnp.sum(plp) / B
        return h_nct, z_nct, loss, perplexity


if __name__ == "__main__":
    key = jax.random.PRNGKey(0)
    pkey, xkey, nkey = jax.random.split(key, 3)

    seq_len = 64
    h_dims = (4, 8, 16)
    scales = (2, 2)
    encoder = Encoder(pkey, sequence_length=seq_len, codebook_width=16,
                      h_dims=h_dims, scales=scales,
                      blocks_per_stages=(1, 1), layers_per_blocks=(2, 2),
                      se_ratio=None)

    # PyTorch-style NCW input: (batch=2, channels=4, time=64)
    x = jax.random.normal(xkey, (2, h_dims[0], seq_len), jnp.float32)

    fwd = jax.jit(lambda xx, kk: encoder(xx, rng=kk))
    h, z, loss, perplexity = fwd(x, nkey)
    jax.block_until_ready((h, z, loss, perplexity))

    assert h.shape == (2, 16, 16), h.shape     # (B, C_last, T/4)
    assert z.shape == (2, 16, 16), z.shape
    assert loss.shape == () and perplexity.shape == ()
    assert bool(jnp.all(jnp.isfinite(h))) and bool(jnp.all(jnp.isfinite(z)))
    assert bool(jnp.isfinite(loss)) and bool(jnp.isfinite(perplexity))

    fwd_det = jax.jit(lambda xx: encoder(xx, deterministic=True))
    h_d, q_d = fwd_det(x)
    jax.block_until_ready((h_d, q_d))
    assert h_d.shape == (2, 16, 16) and q_d.shape == (2, 16, 16)
    assert bool(jnp.all(jnp.isfinite(q_d)))

    print("KERNEL_OK")
</pallas_src>

<mosaic_0001>
module attributes {stable_mosaic.version = 11 : i64} {
  func.func @_mbconv_kernel(%arg0: i32, %arg1: i32, %arg2: memref<1x1x36x8xf32, #tpu.memory_space<vmem>>, %arg3: memref<8x16xbf16, #tpu.memory_space<vmem>>, %arg4: memref<1x16xf32, #tpu.memory_space<vmem>>, %arg5: memref<3x1x16xf32, #tpu.memory_space<vmem>>, %arg6: memref<1x16xf32, #tpu.memory_space<vmem>>, %arg7: memref<16x8xbf16, #tpu.memory_space<vmem>>, %arg8: memref<1x8xf32, #tpu.memory_space<vmem>>, %arg9: memref<1x32x8xf32, #tpu.memory_space<vmem>>) attributes {dimension_semantics = [#tpu.dimension_semantics<parallel>, #tpu.dimension_semantics<parallel>], iteration_bounds = array<i64: 2, 1>, scalar_prefetch = 0 : i64, scratch_operands = 0 : i64, tpu.core_type = #tpu.core_type<tc>, window_params = [{transform_indices = @transform_0, window_bounds = array<i64: 1, 1, 36, 8>}, {pipeline_mode = #tpu.pipeline_mode<synchronous>, transform_indices = @transform_1, window_bounds = array<i64: 8, 16>}, {pipeline_mode = #tpu.pipeline_mode<synchronous>, transform_indices = @transform_2, window_bounds = array<i64: 1, 16>}, {pipeline_mode = #tpu.pipeline_mode<synchronous>, transform_indices = @transform_3, window_bounds = array<i64: 3, 1, 16>}, {pipeline_mode = #tpu.pipeline_mode<synchronous>, transform_indices = @transform_4, window_bounds = array<i64: 1, 16>}, {pipeline_mode = #tpu.pipeline_mode<synchronous>, transform_indices = @transform_5, window_bounds = array<i64: 16, 8>}, {pipeline_mode = #tpu.pipeline_mode<synchronous>, transform_indices = @transform_6, window_bounds = array<i64: 1, 8>}, {transform_indices = @transform_7, window_bounds = array<i64: 1, 32, 8>}]} {
    %c0 = arith.constant 0 : index
    %c0_0 = arith.constant 0 : index
    %c0_1 = arith.constant 0 : index
    %c0_2 = arith.constant 0 : index
    %0 = vector.load %arg2[%c0, %c0_0, %c0_1, %c0_2] : memref<1x1x36x8xf32, #tpu.memory_space<vmem>>, vector<1x1x36x8xf32>
    %1 = vector.shape_cast %0 : vector<1x1x36x8xf32> to vector<36x8xf32>
    %2 = arith.truncf %1 : vector<36x8xf32> to vector<36x8xbf16>
    %c0_3 = arith.constant 0 : index
    %c0_4 = arith.constant 0 : index
    %3 = vector.load %arg3[%c0_3, %c0_4] : memref<8x16xbf16, #tpu.memory_space<vmem>>, vector<8x16xbf16>
    %cst = arith.constant dense<0.000000e+00> : vector<36x16xf32>
    %4 = tpu.matmul %2, %3, %cst {dimension_numbers = #tpu.dot_dimension_numbers<[1], [0], [0], [1], [0, 0, 1, 1], [], []>} : vector<36x8xbf16>, vector<8x16xbf16>, vector<36x16xf32> -> vector<36x16xf32>
    %c0_5 = arith.constant 0 : index
    %c0_6 = arith.constant 0 : index
    %5 = vector.load %arg4[%c0_5, %c0_6] : memref<1x16xf32, #tpu.memory_space<vmem>>, vector<1x16xf32>
    %6 = vector.broadcast %5 : vector<1x16xf32> to vector<36x16xf32>
    %7 = arith.addf %4, %6 : vector<36x16xf32>
    %8 = arith.negf %7 : vector<36x16xf32>
    %9 = math.exp %8 : vector<36x16xf32>
    %cst_7 = arith.constant 1.000000e+00 : f32
    %10 = vector.broadcast %cst_7 : f32 to vector<36x16xf32>
    %11 = arith.addf %10, %9 : vector<36x16xf32>
    %12 = arith.divf %10, %11 : vector<36x16xf32>
    %13 = arith.mulf %7, %12 : vector<36x16xf32>
    %c32_i32 = arith.constant 32 : i32
    %14 = arith.muli %arg1, %c32_i32 : i32
    %15 = tpu.iota {dimensions = array<i32: 0>} : vector<36x1xi32>
    %16 = vector.broadcast %14 : i32 to vector<36x1xi32>
    %17 = arith.addi %16, %15 : vector<36x1xi32>
    %c2_i32 = arith.constant 2 : i32
    %18 = vector.broadcast %c2_i32 : i32 to vector<36x1xi32>
    %19 = arith.cmpi sge, %17, %18 : vector<36x1xi32>
    %c34_i32 = arith.constant 34 : i32
    %20 = vector.broadcast %c34_i32 : i32 to vector<36x1xi32>
    %21 = arith.cmpi slt, %17, %20 : vector<36x1xi32>
    %22 = arith.andi %19, %21 : vector<36x1xi1>
    %cst_8 = arith.constant 0.000000e+00 : f32
    %23 = vector.shape_cast %22 : vector<36x1xi1> to vector<36x1xi1>
    %24 = vector.broadcast %23 : vector<36x1xi1> to vector<36x16xi1>
    %25 = vector.broadcast %cst_8 : f32 to vector<36x16xf32>
    %26 = arith.select %24, %13, %25 : vector<36x16xi1>, vector<36x16xf32>
    %cst_9 = arith.constant 0.000000e+00 : f32
    %27 = vector.broadcast %cst_9 : f32 to vector<32x16xf32>
    %28 = vector.extract_strided_slice %26 {offsets = [0, 0], sizes = [32, 16], strides = [1, 1]} : vector<36x16xf32> to vector<32x16xf32>
    %c0_10 = arith.constant 0 : index
    %c0_11 = arith.constant 0 : index
    %c0_12 = arith.constant 0 : index
    %29 = vector.load %arg5[%c0_10, %c0_11, %c0_12] : memref<3x1x16xf32, #tpu.memory_space<vmem>>, vector<1x1x16xf32>
    %30 = vector.shape_cast %29 : vector<1x1x16xf32> to vector<1x16xf32>
    %31 = vector.broadcast %30 : vector<1x16xf32> to vector<32x16xf32>
    %32 = arith.mulf %28, %31 : vector<32x16xf32>
    %33 = arith.addf %27, %32 : vector<32x16xf32>
    %34 = vector.extract_strided_slice %26 {offsets = [2, 0], sizes = [32, 16], strides = [1, 1]} : vector<36x16xf32> to vector<32x16xf32>
    %c1 = arith.constant 1 : index
    %c0_13 = arith.constant 0 : index
    %c0_14 = arith.constant 0 : index
    %35 = vector.load %arg5[%c1, %c0_13, %c0_14] : memref<3x1x16xf32, #tpu.memory_space<vmem>>, vector<1x1x16xf32>
    %36 = vector.shape_cast %35 : vector<1x1x16xf32> to vector<1x16xf32>
    %37 = vector.broadcast %36 : vector<1x16xf32> to vector<32x16xf32>
    %38 = arith.mulf %34, %37 : vector<32x16xf32>
    %39 = arith.addf %33, %38 : vector<32x16xf32>
    %40 = vector.extract_strided_slice %26 {offsets = [4, 0], sizes = [32, 16], strides = [1, 1]} : vector<36x16xf32> to vector<32x16xf32>
    %c2 = arith.constant 2 : index
    %c0_15 = arith.constant 0 : index
    %c0_16 = arith.constant 0 : index
    %41 = vector.load %arg5[%c2, %c0_15, %c0_16] : memref<3x1x16xf32, #tpu.memory_space<vmem>>, vector<1x1x16xf32>
    %42 = vector.shape_cast %41 : vector<1x1x16xf32> to vector<1x16xf32>
    %43 = vector.broadcast %42 : vector<1x16xf32> to vector<32x16xf32>
    %44 = arith.mulf %40, %43 : vector<32x16xf32>
    %45 = arith.addf %39, %44 : vector<32x16xf32>
    %c0_17 = arith.constant 0 : index
    %c0_18 = arith.constant 0 : index
    %46 = vector.load %arg6[%c0_17, %c0_18] : memref<1x16xf32, #tpu.memory_space<vmem>>, vector<1x16xf32>
    %47 = vector.broadcast %46 : vector<1x16xf32> to vector<32x16xf32>
    %48 = arith.addf %45, %47 : vector<32x16xf32>
    %49 = arith.negf %48 : vector<32x16xf32>
    %50 = math.exp %49 : vector<32x16xf32>
    %cst_19 = arith.constant 1.000000e+00 : f32
    %51 = vector.broadcast %cst_19 : f32 to vector<32x16xf32>
    %52 = arith.addf %51, %50 : vector<32x16xf32>
    %53 = arith.divf %51, %52 : vector<32x16xf32>
    %54 = arith.mulf %48, %53 : vector<32x16xf32>
    %55 = arith.truncf %54 : vector<32x16xf32> to vector<32x16xbf16>
    %c0_20 = arith.constant 0 : index
    %c0_21 = arith.constant 0 : index
    %56 = vector.load %arg7[%c0_20, %c0_21] : memref<16x8xbf16, #tpu.memory_space<vmem>>, vector<16x8xbf16>
    %cst_22 = arith.constant dense<0.000000e+00> : vector<32x8xf32>
    %57 = tpu.matmul %55, %56, %cst_22 {dimension_numbers = #tpu.dot_dimension_numbers<[1], [0], [0], [1], [0, 0, 1, 1], [], []>} : vector<32x16xbf16>, vector<16x8xbf16>, vector<32x8xf32> -> vector<32x8xf32>
    %c0_23 = arith.constant 0 : index
    %c0_24 = arith.constant 0 : index
    %58 = vector.load %arg8[%c0_23, %c0_24] : memref<1x8xf32, #tpu.memory_space<vmem>>, vector<1x8xf32>
    %59 = vector.broadcast %58 : vector<1x8xf32> to vector<32x8xf32>
    %60 = arith.addf %57, %59 : vector<32x8xf32>
    %61 = vector.extract_strided_slice %1 {offsets = [2, 0], sizes = [32, 8], strides = [1, 1]} : vector<36x8xf32> to vector<32x8xf32>
    %62 = arith.addf %61, %60 : vector<32x8xf32>
    %c0_25 = arith.constant 0 : index
    %c0_26 = arith.constant 0 : index
    %c0_27 = arith.constant 0 : index
    %63 = vector.load %arg9[%c0_25, %c0_26, %c0_27] : memref<1x32x8xf32, #tpu.memory_space<vmem>>, vector<1x32x8xf32>
    %64 = vector.shape_cast %63 : vector<1x32x8xf32> to vector<32x8xf32>
    %65 = vector.shape_cast %62 : vector<32x8xf32> to vector<1x32x8xf32>
    tpu.vector_store %arg9[%c0_25, %c0_26, %c0_27], %65 {strides = array<i32>} : memref<1x32x8xf32, #tpu.memory_space<vmem>>, vector<1x32x8xf32>,
    return
  }
  func.func @transform_0(%arg0: i32, %arg1: i32) -> (i32, i32, i32, i32) {
    %c0_i32 = arith.constant 0 : i32
    %c0_i32_0 = arith.constant 0 : i32
    %c0_i32_1 = arith.constant 0 : i32
    return %arg0, %arg1, %c0_i32, %c0_i32_0 : i32, i32, i32, i32
  }
  func.func @transform_1(%arg0: i32, %arg1: i32) -> (i32, i32) {
    %c0_i32 = arith.constant 0 : i32
    %c0_i32_0 = arith.constant 0 : i32
    %c0_i32_1 = arith.constant 0 : i32
    return %c0_i32, %c0_i32_0 : i32, i32
  }
  func.func @transform_2(%arg0: i32, %arg1: i32) -> (i32, i32) {
    %c0_i32 = arith.constant 0 : i32
    %c0_i32_0 = arith.constant 0 : i32
    %c0_i32_1 = arith.constant 0 : i32
    return %c0_i32, %c0_i32_0 : i32, i32
  }
  func.func @transform_3(%arg0: i32, %arg1: i32) -> (i32, i32, i32) {
    %c0_i32 = arith.constant 0 : i32
    %c0_i32_0 = arith.constant 0 : i32
    %c0_i32_1 = arith.constant 0 : i32
    %c0_i32_2 = arith.constant 0 : i32
    return %c0_i32, %c0_i32_0, %c0_i32_1 : i32, i32, i32
  }
  func.func @transform_4(%arg0: i32, %arg1: i32) -> (i32, i32) {
    %c0_i32 = arith.constant 0 : i32
    %c0_i32_0 = arith.constant 0 : i32
    %c0_i32_1 = arith.constant 0 : i32
    return %c0_i32, %c0_i32_0 : i32, i32
  }
  func.func @transform_5(%arg0: i32, %arg1: i32) -> (i32, i32) {
    %c0_i32 = arith.constant 0 : i32
    %c0_i32_0 = arith.constant 0 : i32
    %c0_i32_1 = arith.constant 0 : i32
    return %c0_i32, %c0_i32_0 : i32, i32
  }
  func.func @transform_6(%arg0: i32, %arg1: i32) -> (i32, i32) {
    %c0_i32 = arith.constant 0 : i32
    %c0_i32_0 = arith.constant 0 : i32
    %c0_i32_1 = arith.constant 0 : i32
    return %c0_i32, %c0_i32_0 : i32, i32
  }
  func.func @transform_7(%arg0: i32, %arg1: i32) -> (i32, i32, i32) {
    %c0_i32 = arith.constant 0 : i32
    %c0_i32_0 = arith.constant 0 : i32
    return %arg0, %arg1, %c0_i32 : i32, i32, i32
  }
}

module attributes {stable_mosaic.version = 11 : i64} {
  func.func @_downscale_kernel(%arg0: i32, %arg1: memref<64x8xf32, #tpu.memory_space<vmem>>, %arg2: memref<64x4xf32, #tpu.memory_space<vmem>>, %arg3: memref<8x8xbf16, #tpu.memory_space<vmem>>, %arg4: memref<4x8xbf16, #tpu.memory_space<vmem>>, %arg5: memref<1x8xf32, #tpu.memory_space<vmem>>, %arg6: memref<64x8xf32, #tpu.memory_space<vmem>>) attributes {dimension_semantics = [#tpu.dimension_semantics<parallel>], iteration_bounds = array<i64: 1>, scalar_prefetch = 0 : i64, scratch_operands = 0 : i64, tpu.core_type = #tpu.core_type<tc>, window_params = [{transform_indices = @transform_0, window_bounds = array<i64: 64, 8>}, {transform_indices = @transform_1, window_bounds = array<i64: 64, 4>}, {pipeline_mode = #tpu.pipeline_mode<synchronous>, transform_indices = @transform_2, window_bounds = array<i64: 8, 8>}, {pipeline_mode = #tpu.pipeline_mode<synchronous>, transform_indices = @transform_3, window_bounds = array<i64: 4, 8>}, {pipeline_mode = #tpu.pipeline_mode<synchronous>, transform_indices = @transform_4, window_bounds = array<i64: 1, 8>}, {transform_indices = @transform_5, window_bounds = array<i64: 64, 8>}]} {
    %c0 = arith.constant 0 : index
    %c0_0 = arith.constant 0 : index
    %0 = vector.load %arg1[%c0, %c0_0] : memref<64x8xf32, #tpu.memory_space<vmem>>, vector<64x8xf32>
    %1 = arith.truncf %0 : vector<64x8xf32> to vector<64x8xbf16>
    %c0_1 = arith.constant 0 : index
    %c0_2 = arith.constant 0 : index
    %2 = vector.load %arg3[%c0_1, %c0_2] : memref<8x8xbf16, #tpu.memory_space<vmem>>, vector<8x8xbf16>
    %cst = arith.constant dense<0.000000e+00> : vector<64x8xf32>
    %3 = tpu.matmul %1, %2, %cst {dimension_numbers = #tpu.dot_dimension_numbers<[1], [0], [0], [1], [0, 0, 1, 1], [], []>} : vector<64x8xbf16>, vector<8x8xbf16>, vector<64x8xf32> -> vector<64x8xf32>
    %c0_3 = arith.constant 0 : index
    %c0_4 = arith.constant 0 : index
    %4 = vector.load %arg2[%c0_3, %c0_4] : memref<64x4xf32, #tpu.memory_space<vmem>>, vector<64x4xf32>
    %5 = arith.truncf %4 : vector<64x4xf32> to vector<64x4xbf16>
    %c0_5 = arith.constant 0 : index
    %c0_6 = arith.constant 0 : index
    %6 = vector.load %arg4[%c0_5, %c0_6] : memref<4x8xbf16, #tpu.memory_space<vmem>>, vector<4x8xbf16>
    %cst_7 = arith.constant dense<0.000000e+00> : vector<64x8xf32>
    %7 = tpu.matmul %5, %6, %cst_7 {dimension_numbers = #tpu.dot_dimension_numbers<[1], [0], [0], [1], [0, 0, 1, 1], [], []>} : vector<64x4xbf16>, vector<4x8xbf16>, vector<64x8xf32> -> vector<64x8xf32>
    %8 = arith.addf %3, %7 : vector<64x8xf32>
    %c0_8 = arith.constant 0 : index
    %c0_9 = arith.constant 0 : index
    %9 = vector.load %arg5[%c0_8, %c0_9] : memref<1x8xf32, #tpu.memory_space<vmem>>, vector<1x8xf32>
    %10 = vector.broadcast %9 : vector<1x8xf32> to vector<64x8xf32>
    %11 = arith.addf %8, %10 : vector<64x8xf32>
    %c0_10 = arith.constant 0 : index
    %c0_11 = arith.constant 0 : index
    %12 = vector.load %arg6[%c0_10, %c0_11] : memref<64x8xf32, #tpu.memory_space<vmem>>, vector<64x8xf32>
    tpu.vector_store %arg6[%c0_10, %c0_11], %11 {strides = array<i32>} : memref<64x8xf32, #tpu.memory_space<vmem>>, vector<64x8xf32>,
    return
  }
  func.func @transform_0(%arg0: i32) -> (i32, i32) {
    %c0_i32 = arith.constant 0 : i32
    %c0_i32_0 = arith.constant 0 : i32
    return %arg0, %c0_i32 : i32, i32
  }
  func.func @transform_1(%arg0: i32) -> (i32, i32) {
    %c0_i32 = arith.constant 0 : i32
    %c0_i32_0 = arith.constant 0 : i32
    return %arg0, %c0_i32 : i32, i32
  }
  func.func @transform_2(%arg0: i32) -> (i32, i32) {
    %c0_i32 = arith.constant 0 : i32
    %c0_i32_0 = arith.constant 0 : i32
    %c0_i32_1 = arith.constant 0 : i32
    return %c0_i32, %c0_i32_0 : i32, i32
  }
  func.func @transform_3(%arg0: i32) -> (i32, i32) {
    %c0_i32 = arith.constant 0 : i32
    %c0_i32_0 = arith.constant 0 : i32
    %c0_i32_1 = arith.constant 0 : i32
    return %c0_i32, %c0_i32_0 : i32, i32
  }
  func.func @transform_4(%arg0: i32) -> (i32, i32) {
    %c0_i32 = arith.constant 0 : i32
    %c0_i32_0 = arith.constant 0 : i32
    %c0_i32_1 = arith.constant 0 : i32
    return %c0_i32, %c0_i32_0 : i32, i32
  }
  func.func @transform_5(%arg0: i32) -> (i32, i32) {
    %c0_i32 = arith.constant 0 : i32
    %c0_i32_0 = arith.constant 0 : i32
    return %arg0, %c0_i32 : i32, i32
  }
}

module attributes {stable_mosaic.version = 11 : i64} {
  func.func @_mbconv_kernel(%arg0: i32, %arg1: i32, %arg2: memref<1x1x34x8xf32, #tpu.memory_space<vmem>>, %arg3: memref<8x16xbf16, #tpu.memory_space<vmem>>, %arg4: memref<1x16xf32, #tpu.memory_space<vmem>>, %arg5: memref<3x1x16xf32, #tpu.memory_space<vmem>>, %arg6: memref<1x16xf32, #tpu.memory_space<vmem>>, %arg7: memref<16x8xbf16, #tpu.memory_space<vmem>>, %arg8: memref<1x8xf32, #tpu.memory_space<vmem>>, %arg9: memref<1x32x8xf32, #tpu.memory_space<vmem>>) attributes {dimension_semantics = [#tpu.dimension_semantics<parallel>, #tpu.dimension_semantics<parallel>], iteration_bounds = array<i64: 2, 1>, scalar_prefetch = 0 : i64, scratch_operands = 0 : i64, tpu.core_type = #tpu.core_type<tc>, window_params = [{transform_indices = @transform_0, window_bounds = array<i64: 1, 1, 34, 8>}, {pipeline_mode = #tpu.pipeline_mode<synchronous>, transform_indices = @transform_1, window_bounds = array<i64: 8, 16>}, {pipeline_mode = #tpu.pipeline_mode<synchronous>, transform_indices = @transform_2, window_bounds = array<i64: 1, 16>}, {pipeline_mode = #tpu.pipeline_mode<synchronous>, transform_indices = @transform_3, window_bounds = array<i64: 3, 1, 16>}, {pipeline_mode = #tpu.pipeline_mode<synchronous>, transform_indices = @transform_4, window_bounds = array<i64: 1, 16>}, {pipeline_mode = #tpu.pipeline_mode<synchronous>, transform_indices = @transform_5, window_bounds = array<i64: 16, 8>}, {pipeline_mode = #tpu.pipeline_mode<synchronous>, transform_indices = @transform_6, window_bounds = array<i64: 1, 8>}, {transform_indices = @transform_7, window_bounds = array<i64: 1, 32, 8>}]} {
    %c0 = arith.constant 0 : index
    %c0_0 = arith.constant 0 : index
    %c0_1 = arith.constant 0 : index
    %c0_2 = arith.constant 0 : index
    %0 = vector.load %arg2[%c0, %c0_0, %c0_1, %c0_2] : memref<1x1x34x8xf32, #tpu.memory_space<vmem>>, vector<1x1x34x8xf32>
    %1 = vector.shape_cast %0 : vector<1x1x34x8xf32> to vector<34x8xf32>
    %2 = arith.truncf %1 : vector<34x8xf32> to vector<34x8xbf16>
    %c0_3 = arith.constant 0 : index
    %c0_4 = arith.constant 0 : index
    %3 = vector.load %arg3[%c0_3, %c0_4] : memref<8x16xbf16, #tpu.memory_space<vmem>>, vector<8x16xbf16>
    %cst = arith.constant dense<0.000000e+00> : vector<34x16xf32>
    %4 = tpu.matmul %2, %3, %cst {dimension_numbers = #tpu.dot_dimension_numbers<[1], [0], [0], [1], [0, 0, 1, 1], [], []>} : vector<34x8xbf16>, vector<8x16xbf16>, vector<34x16xf32> -> vector<34x16xf32>
    %c0_5 = arith.constant 0 : index
    %c0_6 = arith.constant 0 : index
    %5 = vector.load %arg4[%c0_5, %c0_6] : memref<1x16xf32, #tpu.memory_space<vmem>>, vector<1x16xf32>
    %6 = vector.broadcast %5 : vector<1x16xf32> to vector<34x16xf32>
    %7 = arith.addf %4, %6 : vector<34x16xf32>
    %8 = arith.negf %7 : vector<34x16xf32>
    %9 = math.exp %8 : vector<34x16xf32>
    %cst_7 = arith.constant 1.000000e+00 : f32
    %10 = vector.broadcast %cst_7 : f32 to vector<34x16xf32>
    %11 = arith.addf %10, %9 : vector<34x16xf32>
    %12 = arith.divf %10, %11 : vector<34x16xf32>
    %13 = arith.mulf %7, %12 : vector<34x16xf32>
    %c32_i32 = arith.constant 32 : i32
    %14 = arith.muli %arg1, %c32_i32 : i32
    %15 = tpu.iota {dimensions = array<i32: 0>} : vector<34x1xi32>
    %16 = vector.broadcast %14 : i32 to vector<34x1xi32>
    %17 = arith.addi %16, %15 : vector<34x1xi32>
    %c1_i32 = arith.constant 1 : i32
    %18 = vector.broadcast %c1_i32 : i32 to vector<34x1xi32>
    %19 = arith.cmpi sge, %17, %18 : vector<34x1xi32>
    %c33_i32 = arith.constant 33 : i32
    %20 = vector.broadcast %c33_i32 : i32 to vector<34x1xi32>
    %21 = arith.cmpi slt, %17, %20 : vector<34x1xi32>
    %22 = arith.andi %19, %21 : vector<34x1xi1>
    %cst_8 = arith.constant 0.000000e+00 : f32
    %23 = vector.shape_cast %22 : vector<34x1xi1> to vector<34x1xi1>
    %24 = vector.broadcast %23 : vector<34x1xi1> to vector<34x16xi1>
    %25 = vector.broadcast %cst_8 : f32 to vector<34x16xf32>
    %26 = arith.select %24, %13, %25 : vector<34x16xi1>, vector<34x16xf32>
    %cst_9 = arith.constant 0.000000e+00 : f32
    %27 = vector.broadcast %cst_9 : f32 to vector<32x16xf32>
    %28 = vector.extract_strided_slice %26 {offsets = [0, 0], sizes = [32, 16], strides = [1, 1]} : vector<34x16xf32> to vector<32x16xf32>
    %c0_10 = arith.constant 0 : index
    %c0_11 = arith.constant 0 : index
    %c0_12 = arith.constant 0 : index
    %29 = vector.load %arg5[%c0_10, %c0_11, %c0_12] : memref<3x1x16xf32, #tpu.memory_space<vmem>>, vector<1x1x16xf32>
    %30 = vector.shape_cast %29 : vector<1x1x16xf32> to vector<1x16xf32>
    %31 = vector.broadcast %30 : vector<1x16xf32> to vector<32x16xf32>
    %32 = arith.mulf %28, %31 : vector<32x16xf32>
    %33 = arith.addf %27, %32 : vector<32x16xf32>
    %34 = vector.extract_strided_slice %26 {offsets = [1, 0], sizes = [32, 16], strides = [1, 1]} : vector<34x16xf32> to vector<32x16xf32>
    %c1 = arith.constant 1 : index
    %c0_13 = arith.constant 0 : index
    %c0_14 = arith.constant 0 : index
    %35 = vector.load %arg5[%c1, %c0_13, %c0_14] : memref<3x1x16xf32, #tpu.memory_space<vmem>>, vector<1x1x16xf32>
    %36 = vector.shape_cast %35 : vector<1x1x16xf32> to vector<1x16xf32>
    %37 = vector.broadcast %36 : vector<1x16xf32> to vector<32x16xf32>
    %38 = arith.mulf %34, %37 : vector<32x16xf32>
    %39 = arith.addf %33, %38 : vector<32x16xf32>
    %40 = vector.extract_strided_slice %26 {offsets = [2, 0], sizes = [32, 16], strides = [1, 1]} : vector<34x16xf32> to vector<32x16xf32>
    %c2 = arith.constant 2 : index
    %c0_15 = arith.constant 0 : index
    %c0_16 = arith.constant 0 : index
    %41 = vector.load %arg5[%c2, %c0_15, %c0_16] : memref<3x1x16xf32, #tpu.memory_space<vmem>>, vector<1x1x16xf32>
    %42 = vector.shape_cast %41 : vector<1x1x16xf32> to vector<1x16xf32>
    %43 = vector.broadcast %42 : vector<1x16xf32> to vector<32x16xf32>
    %44 = arith.mulf %40, %43 : vector<32x16xf32>
    %45 = arith.addf %39, %44 : vector<32x16xf32>
    %c0_17 = arith.constant 0 : index
    %c0_18 = arith.constant 0 : index
    %46 = vector.load %arg6[%c0_17, %c0_18] : memref<1x16xf32, #tpu.memory_space<vmem>>, vector<1x16xf32>
    %47 = vector.broadcast %46 : vector<1x16xf32> to vector<32x16xf32>
    %48 = arith.addf %45, %47 : vector<32x16xf32>
    %49 = arith.negf %48 : vector<32x16xf32>
    %50 = math.exp %49 : vector<32x16xf32>
    %cst_19 = arith.constant 1.000000e+00 : f32
    %51 = vector.broadcast %cst_19 : f32 to vector<32x16xf32>
    %52 = arith.addf %51, %50 : vector<32x16xf32>
    %53 = arith.divf %51, %52 : vector<32x16xf32>
    %54 = arith.mulf %48, %53 : vector<32x16xf32>
    %55 = arith.truncf %54 : vector<32x16xf32> to vector<32x16xbf16>
    %c0_20 = arith.constant 0 : index
    %c0_21 = arith.constant 0 : index
    %56 = vector.load %arg7[%c0_20, %c0_21] : memref<16x8xbf16, #tpu.memory_space<vmem>>, vector<16x8xbf16>
    %cst_22 = arith.constant dense<0.000000e+00> : vector<32x8xf32>
    %57 = tpu.matmul %55, %56, %cst_22 {dimension_numbers = #tpu.dot_dimension_numbers<[1], [0], [0], [1], [0, 0, 1, 1], [], []>} : vector<32x16xbf16>, vector<16x8xbf16>, vector<32x8xf32> -> vector<32x8xf32>
    %c0_23 = arith.constant 0 : index
    %c0_24 = arith.constant 0 : index
    %58 = vector.load %arg8[%c0_23, %c0_24] : memref<1x8xf32, #tpu.memory_space<vmem>>, vector<1x8xf32>
    %59 = vector.broadcast %58 : vector<1x8xf32> to vector<32x8xf32>
    %60 = arith.addf %57, %59 : vector<32x8xf32>
    %61 = vector.extract_strided_slice %1 {offsets = [1, 0], sizes = [32, 8], strides = [1, 1]} : vector<34x8xf32> to vector<32x8xf32>
    %62 = arith.addf %61, %60 : vector<32x8xf32>
    %c0_25 = arith.constant 0 : index
    %c0_26 = arith.constant 0 : index
    %c0_27 = arith.constant 0 : index
    %63 = vector.load %arg9[%c0_25, %c0_26, %c0_27] : memref<1x32x8xf32, #tpu.memory_space<vmem>>, vector<1x32x8xf32>
    %64 = vector.shape_cast %63 : vector<1x32x8xf32> to vector<32x8xf32>
    %65 = vector.shape_cast %62 : vector<32x8xf32> to vector<1x32x8xf32>
    tpu.vector_store %arg9[%c0_25, %c0_26, %c0_27], %65 {strides = array<i32>} : memref<1x32x8xf32, #tpu.memory_space<vmem>>, vector<1x32x8xf32>,
    return
  }
  func.func @transform_0(%arg0: i32, %arg1: i32) -> (i32, i32, i32, i32) {
    %c0_i32 = arith.constant 0 : i32
    %c0_i32_0 = arith.constant 0 : i32
    %c0_i32_1 = arith.constant 0 : i32
    return %arg0, %arg1, %c0_i32, %c0_i32_0 : i32, i32, i32, i32
  }
  func.func @transform_1(%arg0: i32, %arg1: i32) -> (i32, i32) {
    %c0_i32 = arith.constant 0 : i32
    %c0_i32_0 = arith.constant 0 : i32
    %c0_i32_1 = arith.constant 0 : i32
    return %c0_i32, %c0_i32_0 : i32, i32
  }
  func.func @transform_2(%arg0: i32, %arg1: i32) -> (i32, i32) {
    %c0_i32 = arith.constant 0 : i32
    %c0_i32_0 = arith.constant 0 : i32
    %c0_i32_1 = arith.constant 0 : i32
    return %c0_i32, %c0_i32_0 : i32, i32
  }
  func.func @transform_3(%arg0: i32, %arg1: i32) -> (i32, i32, i32) {
    %c0_i32 = arith.constant 0 : i32
    %c0_i32_0 = arith.constant 0 : i32
    %c0_i32_1 = arith.constant 0 : i32
    %c0_i32_2 = arith.constant 0 : i32
    return %c0_i32, %c0_i32_0, %c0_i32_1 : i32, i32, i32
  }
  func.func @transform_4(%arg0: i32, %arg1: i32) -> (i32, i32) {
    %c0_i32 = arith.constant 0 : i32
    %c0_i32_0 = arith.constant 0 : i32
    %c0_i32_1 = arith.constant 0 : i32
    return %c0_i32, %c0_i32_0 : i32, i32
  }
  func.func @transform_5(%arg0: i32, %arg1: i32) -> (i32, i32) {
    %c0_i32 = arith.constant 0 : i32
    %c0_i32_0 = arith.constant 0 : i32
    %c0_i32_1 = arith.constant 0 : i32
    return %c0_i32, %c0_i32_0 : i32, i32
  }
  func.func @transform_6(%arg0: i32, %arg1: i32) -> (i32, i32) {
    %c0_i32 = arith.constant 0 : i32
    %c0_i32_0 = arith.constant 0 : i32
    %c0_i32_1 = arith.constant 0 : i32
    return %c0_i32, %c0_i32_0 : i32, i32
  }
  func.func @transform_7(%arg0: i32, %arg1: i32) -> (i32, i32, i32) {
    %c0_i32 = arith.constant 0 : i32
    %c0_i32_0 = arith.constant 0 : i32
    return %arg0, %arg1, %c0_i32 : i32, i32, i32
  }
}

module attributes {stable_mosaic.version = 11 : i64} {
  func.func @_downscale_kernel(%arg0: i32, %arg1: memref<32x16xf32, #tpu.memory_space<vmem>>, %arg2: memref<32x8xf32, #tpu.memory_space<vmem>>, %arg3: memref<16x16xbf16, #tpu.memory_space<vmem>>, %arg4: memref<8x16xbf16, #tpu.memory_space<vmem>>, %arg5: memref<1x16xf32, #tpu.memory_space<vmem>>, %arg6: memref<32x16xf32, #tpu.memory_space<vmem>>) attributes {dimension_semantics = [#tpu.dimension_semantics<parallel>], iteration_bounds = array<i64: 1>, scalar_prefetch = 0 : i64, scratch_operands = 0 : i64, tpu.core_type = #tpu.core_type<tc>, window_params = [{transform_indices = @transform_0, window_bounds = array<i64: 32, 16>}, {transform_indices = @transform_1, window_bounds = array<i64: 32, 8>}, {pipeline_mode = #tpu.pipeline_mode<synchronous>, transform_indices = @transform_2, window_bounds = array<i64: 16, 16>}, {pipeline_mode = #tpu.pipeline_mode<synchronous>, transform_indices = @transform_3, window_bounds = array<i64: 8, 16>}, {pipeline_mode = #tpu.pipeline_mode<synchronous>, transform_indices = @transform_4, window_bounds = array<i64: 1, 16>}, {transform_indices = @transform_5, window_bounds = array<i64: 32, 16>}]} {
    %c0 = arith.constant 0 : index
    %c0_0 = arith.constant 0 : index
    %0 = vector.load %arg1[%c0, %c0_0] : memref<32x16xf32, #tpu.memory_space<vmem>>, vector<32x16xf32>
    %1 = arith.truncf %0 : vector<32x16xf32> to vector<32x16xbf16>
    %c0_1 = arith.constant 0 : index
    %c0_2 = arith.constant 0 : index
    %2 = vector.load %arg3[%c0_1, %c0_2] : memref<16x16xbf16, #tpu.memory_space<vmem>>, vector<16x16xbf16>
    %cst = arith.constant dense<0.000000e+00> : vector<32x16xf32>
    %3 = tpu.matmul %1, %2, %cst {dimension_numbers = #tpu.dot_dimension_numbers<[1], [0], [0], [1], [0, 0, 1, 1], [], []>} : vector<32x16xbf16>, vector<16x16xbf16>, vector<32x16xf32> -> vector<32x16xf32>
    %c0_3 = arith.constant 0 : index
    %c0_4 = arith.constant 0 : index
    %4 = vector.load %arg2[%c0_3, %c0_4] : memref<32x8xf32, #tpu.memory_space<vmem>>, vector<32x8xf32>
    %5 = arith.truncf %4 : vector<32x8xf32> to vector<32x8xbf16>
    %c0_5 = arith.constant 0 : index
    %c0_6 = arith.constant 0 : index
    %6 = vector.load %arg4[%c0_5, %c0_6] : memref<8x16xbf16, #tpu.memory_space<vmem>>, vector<8x16xbf16>
    %cst_7 = arith.constant dense<0.000000e+00> : vector<32x16xf32>
    %7 = tpu.matmul %5, %6, %cst_7 {dimension_numbers = #tpu.dot_dimension_numbers<[1], [0], [0], [1], [0, 0, 1, 1], [], []>} : vector<32x8xbf16>, vector<8x16xbf16>, vector<32x16xf32> -> vector<32x16xf32>
    %8 = arith.addf %3, %7 : vector<32x16xf32>
    %c0_8 = arith.constant 0 : index
    %c0_9 = arith.constant 0 : index
    %9 = vector.load %arg5[%c0_8, %c0_9] : memref<1x16xf32, #tpu.memory_space<vmem>>, vector<1x16xf32>
    %10 = vector.broadcast %9 : vector<1x16xf32> to vector<32x16xf32>
    %11 = arith.addf %8, %10 : vector<32x16xf32>
    %c0_10 = arith.constant 0 : index
    %c0_11 = arith.constant 0 : index
    %12 = vector.load %arg6[%c0_10, %c0_11] : memref<32x16xf32, #tpu.memory_space<vmem>>, vector<32x16xf32>
    tpu.vector_store %arg6[%c0_10, %c0_11], %11 {strides = array<i32>} : memref<32x16xf32, #tpu.memory_space<vmem>>, vector<32x16xf32>,
    return
  }
  func.func @transform_0(%arg0: i32) -> (i32, i32) {
    %c0_i32 = arith.constant 0 : i32
    %c0_i32_0 = arith.constant 0 : i32
    return %arg0, %c0_i32 : i32, i32
  }
  func.func @transform_1(%arg0: i32) -> (i32, i32) {
    %c0_i32 = arith.constant 0 : i32
    %c0_i32_0 = arith.constant 0 : i32
    return %arg0, %c0_i32 : i32, i32
  }
  func.func @transform_2(%arg0: i32) -> (i32, i32) {
    %c0_i32 = arith.constant 0 : i32
    %c0_i32_0 = arith.constant 0 : i32
    %c0_i32_1 = arith.constant 0 : i32
    return %c0_i32, %c0_i32_0 : i32, i32
  }
  func.func @transform_3(%arg0: i32) -> (i32, i32) {
    %c0_i32 = arith.constant 0 : i32
    %c0_i32_0 = arith.constant 0 : i32
    %c0_i32_1 = arith.constant 0 : i32
    return %c0_i32, %c0_i32_0 : i32, i32
  }
  func.func @transform_4(%arg0: i32) -> (i32, i32) {
    %c0_i32 = arith.constant 0 : i32
    %c0_i32_0 = arith.constant 0 : i32
    %c0_i32_1 = arith.constant 0 : i32
    return %c0_i32, %c0_i32_0 : i32, i32
  }
  func.func @transform_5(%arg0: i32) -> (i32, i32) {
    %c0_i32 = arith.constant 0 : i32
    %c0_i32_0 = arith.constant 0 : i32
    return %arg0, %c0_i32 : i32, i32
  }
}

module attributes {stable_mosaic.version = 11 : i64} {
  func.func @_mbconv_kernel(%arg0: i32, %arg1: i32, %arg2: memref<1x1x18x16xf32, #tpu.memory_space<vmem>>, %arg3: memref<16x32xbf16, #tpu.memory_space<vmem>>, %arg4: memref<1x32xf32, #tpu.memory_space<vmem>>, %arg5: memref<3x1x32xf32, #tpu.memory_space<vmem>>, %arg6: memref<1x32xf32, #tpu.memory_space<vmem>>, %arg7: memref<32x16xbf16, #tpu.memory_space<vmem>>, %arg8: memref<1x16xf32, #tpu.memory_space<vmem>>, %arg9: memref<1x16x16xf32, #tpu.memory_space<vmem>>) attributes {dimension_semantics = [#tpu.dimension_semantics<parallel>, #tpu.dimension_semantics<parallel>], iteration_bounds = array<i64: 2, 1>, scalar_prefetch = 0 : i64, scratch_operands = 0 : i64, tpu.core_type = #tpu.core_type<tc>, window_params = [{transform_indices = @transform_0, window_bounds = array<i64: 1, 1, 18, 16>}, {pipeline_mode = #tpu.pipeline_mode<synchronous>, transform_indices = @transform_1, window_bounds = array<i64: 16, 32>}, {pipeline_mode = #tpu.pipeline_mode<synchronous>, transform_indices = @transform_2, window_bounds = array<i64: 1, 32>}, {pipeline_mode = #tpu.pipeline_mode<synchronous>, transform_indices = @transform_3, window_bounds = array<i64: 3, 1, 32>}, {pipeline_mode = #tpu.pipeline_mode<synchronous>, transform_indices = @transform_4, window_bounds = array<i64: 1, 32>}, {pipeline_mode = #tpu.pipeline_mode<synchronous>, transform_indices = @transform_5, window_bounds = array<i64: 32, 16>}, {pipeline_mode = #tpu.pipeline_mode<synchronous>, transform_indices = @transform_6, window_bounds = array<i64: 1, 16>}, {transform_indices = @transform_7, window_bounds = array<i64: 1, 16, 16>}]} {
    %c0 = arith.constant 0 : index
    %c0_0 = arith.constant 0 : index
    %c0_1 = arith.constant 0 : index
    %c0_2 = arith.constant 0 : index
    %0 = vector.load %arg2[%c0, %c0_0, %c0_1, %c0_2] : memref<1x1x18x16xf32, #tpu.memory_space<vmem>>, vector<1x1x18x16xf32>
    %1 = vector.shape_cast %0 : vector<1x1x18x16xf32> to vector<18x16xf32>
    %2 = arith.truncf %1 : vector<18x16xf32> to vector<18x16xbf16>
    %c0_3 = arith.constant 0 : index
    %c0_4 = arith.constant 0 : index
    %3 = vector.load %arg3[%c0_3, %c0_4] : memref<16x32xbf16, #tpu.memory_space<vmem>>, vector<16x32xbf16>
    %cst = arith.constant dense<0.000000e+00> : vector<18x32xf32>
    %4 = tpu.matmul %2, %3, %cst {dimension_numbers = #tpu.dot_dimension_numbers<[1], [0], [0], [1], [0, 0, 1, 1], [], []>} : vector<18x16xbf16>, vector<16x32xbf16>, vector<18x32xf32> -> vector<18x32xf32>
    %c0_5 = arith.constant 0 : index
    %c0_6 = arith.constant 0 : index
    %5 = vector.load %arg4[%c0_5, %c0_6] : memref<1x32xf32, #tpu.memory_space<vmem>>, vector<1x32xf32>
    %6 = vector.broadcast %5 : vector<1x32xf32> to vector<18x32xf32>
    %7 = arith.addf %4, %6 : vector<18x32xf32>
    %8 = arith.negf %7 : vector<18x32xf32>
    %9 = math.exp %8 : vector<18x32xf32>
    %cst_7 = arith.constant 1.000000e+00 : f32
    %10 = vector.broadcast %cst_7 : f32 to vector<18x32xf32>
    %11 = arith.addf %10, %9 : vector<18x32xf32>
    %12 = arith.divf %10, %11 : vector<18x32xf32>
    %13 = arith.mulf %7, %12 : vector<18x32xf32>
    %c16_i32 = arith.constant 16 : i32
    %14 = arith.muli %arg1, %c16_i32 : i32
    %15 = tpu.iota {dimensions = array<i32: 0>} : vector<18x1xi32>
    %16 = vector.broadcast %14 : i32 to vector<18x1xi32>
    %17 = arith.addi %16, %15 : vector<18x1xi32>
    %c1_i32 = arith.constant 1 : i32
    %18 = vector.broadcast %c1_i32 : i32 to vector<18x1xi32>
    %19 = arith.cmpi sge, %17, %18 : vector<18x1xi32>
    %c17_i32 = arith.constant 17 : i32
    %20 = vector.broadcast %c17_i32 : i32 to vector<18x1xi32>
    %21 = arith.cmpi slt, %17, %20 : vector<18x1xi32>
    %22 = arith.andi %19, %21 : vector<18x1xi1>
    %cst_8 = arith.constant 0.000000e+00 : f32
    %23 = vector.shape_cast %22 : vector<18x1xi1> to vector<18x1xi1>
    %24 = vector.broadcast %23 : vector<18x1xi1> to vector<18x32xi1>
    %25 = vector.broadcast %cst_8 : f32 to vector<18x32xf32>
    %26 = arith.select %24, %13, %25 : vector<18x32xi1>, vector<18x32xf32>
    %cst_9 = arith.constant 0.000000e+00 : f32
    %27 = vector.broadcast %cst_9 : f32 to vector<16x32xf32>
    %28 = vector.extract_strided_slice %26 {offsets = [0, 0], sizes = [16, 32], strides = [1, 1]} : vector<18x32xf32> to vector<16x32xf32>
    %c0_10 = arith.constant 0 : index
    %c0_11 = arith.constant 0 : index
    %c0_12 = arith.constant 0 : index
    %29 = vector.load %arg5[%c0_10, %c0_11, %c0_12] : memref<3x1x32xf32, #tpu.memory_space<vmem>>, vector<1x1x32xf32>
    %30 = vector.shape_cast %29 : vector<1x1x32xf32> to vector<1x32xf32>
    %31 = vector.broadcast %30 : vector<1x32xf32> to vector<16x32xf32>
    %32 = arith.mulf %28, %31 : vector<16x32xf32>
    %33 = arith.addf %27, %32 : vector<16x32xf32>
    %34 = vector.extract_strided_slice %26 {offsets = [1, 0], sizes = [16, 32], strides = [1, 1]} : vector<18x32xf32> to vector<16x32xf32>
    %c1 = arith.constant 1 : index
    %c0_13 = arith.constant 0 : index
    %c0_14 = arith.constant 0 : index
    %35 = vector.load %arg5[%c1, %c0_13, %c0_14] : memref<3x1x32xf32, #tpu.memory_space<vmem>>, vector<1x1x32xf32>
    %36 = vector.shape_cast %35 : vector<1x1x32xf32> to vector<1x32xf32>
    %37 = vector.broadcast %36 : vector<1x32xf32> to vector<16x32xf32>
    %38 = arith.mulf %34, %37 : vector<16x32xf32>
    %39 = arith.addf %33, %38 : vector<16x32xf32>
    %40 = vector.extract_strided_slice %26 {offsets = [2, 0], sizes = [16, 32], strides = [1, 1]} : vector<18x32xf32> to vector<16x32xf32>
    %c2 = arith.constant 2 : index
    %c0_15 = arith.constant 0 : index
    %c0_16 = arith.constant 0 : index
    %41 = vector.load %arg5[%c2, %c0_15, %c0_16] : memref<3x1x32xf32, #tpu.memory_space<vmem>>, vector<1x1x32xf32>
    %42 = vector.shape_cast %41 : vector<1x1x32xf32> to vector<1x32xf32>
    %43 = vector.broadcast %42 : vector<1x32xf32> to vector<16x32xf32>
    %44 = arith.mulf %40, %43 : vector<16x32xf32>
    %45 = arith.addf %39, %44 : vector<16x32xf32>
    %c0_17 = arith.constant 0 : index
    %c0_18 = arith.constant 0 : index
    %46 = vector.load %arg6[%c0_17, %c0_18] : memref<1x32xf32, #tpu.memory_space<vmem>>, vector<1x32xf32>
    %47 = vector.broadcast %46 : vector<1x32xf32> to vector<16x32xf32>
    %48 = arith.addf %45, %47 : vector<16x32xf32>
    %49 = arith.negf %48 : vector<16x32xf32>
    %50 = math.exp %49 : vector<16x32xf32>
    %cst_19 = arith.constant 1.000000e+00 : f32
    %51 = vector.broadcast %cst_19 : f32 to vector<16x32xf32>
    %52 = arith.addf %51, %50 : vector<16x32xf32>
    %53 = arith.divf %51, %52 : vector<16x32xf32>
    %54 = arith.mulf %48, %53 : vector<16x32xf32>
    %55 = arith.truncf %54 : vector<16x32xf32> to vector<16x32xbf16>
    %c0_20 = arith.constant 0 : index
    %c0_21 = arith.constant 0 : index
    %56 = vector.load %arg7[%c0_20, %c0_21] : memref<32x16xbf16, #tpu.memory_space<vmem>>, vector<32x16xbf16>
    %cst_22 = arith.constant dense<0.000000e+00> : vector<16x16xf32>
    %57 = tpu.matmul %55, %56, %cst_22 {dimension_numbers = #tpu.dot_dimension_numbers<[1], [0], [0], [1], [0, 0, 1, 1], [], []>} : vector<16x32xbf16>, vector<32x16xbf16>, vector<16x16xf32> -> vector<16x16xf32>
    %c0_23 = arith.constant 0 : index
    %c0_24 = arith.constant 0 : index
    %58 = vector.load %arg8[%c0_23, %c0_24] : memref<1x16xf32, #tpu.memory_space<vmem>>, vector<1x16xf32>
    %59 = vector.broadcast %58 : vector<1x16xf32> to vector<16x16xf32>
    %60 = arith.addf %57, %59 : vector<16x16xf32>
    %61 = vector.extract_strided_slice %1 {offsets = [1, 0], sizes = [16, 16], strides = [1, 1]} : vector<18x16xf32> to vector<16x16xf32>
    %62 = arith.addf %61, %60 : vector<16x16xf32>
    %c0_25 = arith.constant 0 : index
    %c0_26 = arith.constant 0 : index
    %c0_27 = arith.constant 0 : index
    %63 = vector.load %arg9[%c0_25, %c0_26, %c0_27] : memref<1x16x16xf32, #tpu.memory_space<vmem>>, vector<1x16x16xf32>
    %64 = vector.shape_cast %63 : vector<1x16x16xf32> to vector<16x16xf32>
    %65 = vector.shape_cast %62 : vector<16x16xf32> to vector<1x16x16xf32>
    tpu.vector_store %arg9[%c0_25, %c0_26, %c0_27], %65 {strides = array<i32>} : memref<1x16x16xf32, #tpu.memory_space<vmem>>, vector<1x16x16xf32>,
    return
  }
  func.func @transform_0(%arg0: i32, %arg1: i32) -> (i32, i32, i32, i32) {
    %c0_i32 = arith.constant 0 : i32
    %c0_i32_0 = arith.constant 0 : i32
    %c0_i32_1 = arith.constant 0 : i32
    return %arg0, %arg1, %c0_i32, %c0_i32_0 : i32, i32, i32, i32
  }
  func.func @transform_1(%arg0: i32, %arg1: i32) -> (i32, i32) {
    %c0_i32 = arith.constant 0 : i32
    %c0_i32_0 = arith.constant 0 : i32
    %c0_i32_1 = arith.constant 0 : i32
    return %c0_i32, %c0_i32_0 : i32, i32
  }
  func.func @transform_2(%arg0: i32, %arg1: i32) -> (i32, i32) {
    %c0_i32 = arith.constant 0 : i32
    %c0_i32_0 = arith.constant 0 : i32
    %c0_i32_1 = arith.constant 0 : i32
    return %c0_i32, %c0_i32_0 : i32, i32
  }
  func.func @transform_3(%arg0: i32, %arg1: i32) -> (i32, i32, i32) {
    %c0_i32 = arith.constant 0 : i32
    %c0_i32_0 = arith.constant 0 : i32
    %c0_i32_1 = arith.constant 0 : i32
    %c0_i32_2 = arith.constant 0 : i32
    return %c0_i32, %c0_i32_0, %c0_i32_1 : i32, i32, i32
  }
  func.func @transform_4(%arg0: i32, %arg1: i32) -> (i32, i32) {
    %c0_i32 = arith.constant 0 : i32
    %c0_i32_0 = arith.constant 0 : i32
    %c0_i32_1 = arith.constant 0 : i32
    return %c0_i32, %c0_i32_0 : i32, i32
  }
  func.func @transform_5(%arg0: i32, %arg1: i32) -> (i32, i32) {
    %c0_i32 = arith.constant 0 : i32
    %c0_i32_0 = arith.constant 0 : i32
    %c0_i32_1 = arith.constant 0 : i32
    return %c0_i32, %c0_i32_0 : i32, i32
  }
  func.func @transform_6(%arg0: i32, %arg1: i32) -> (i32, i32) {
    %c0_i32 = arith.constant 0 : i32
    %c0_i32_0 = arith.constant 0 : i32
    %c0_i32_1 = arith.constant 0 : i32
    return %c0_i32, %c0_i32_0 : i32, i32
  }
  func.func @transform_7(%arg0: i32, %arg1: i32) -> (i32, i32, i32) {
    %c0_i32 = arith.constant 0 : i32
    %c0_i32_0 = arith.constant 0 : i32
    return %arg0, %arg1, %c0_i32 : i32, i32, i32
  }
}

module attributes {stable_mosaic.version = 11 : i64} {
  func.func @_mbconv_kernel(%arg0: i32, %arg1: i32, %arg2: memref<1x1x18x16xf32, #tpu.memory_space<vmem>>, %arg3: memref<16x32xbf16, #tpu.memory_space<vmem>>, %arg4: memref<1x32xf32, #tpu.memory_space<vmem>>, %arg5: memref<3x1x32xf32, #tpu.memory_space<vmem>>, %arg6: memref<1x32xf32, #tpu.memory_space<vmem>>, %arg7: memref<32x16xbf16, #tpu.memory_space<vmem>>, %arg8: memref<1x16xf32, #tpu.memory_space<vmem>>, %arg9: memref<1x16x16xf32, #tpu.memory_space<vmem>>) attributes {dimension_semantics = [#tpu.dimension_semantics<parallel>, #tpu.dimension_semantics<parallel>], iteration_bounds = array<i64: 2, 1>, scalar_prefetch = 0 : i64, scratch_operands = 0 : i64, tpu.core_type = #tpu.core_type<tc>, window_params = [{transform_indices = @transform_0, window_bounds = array<i64: 1, 1, 18, 16>}, {pipeline_mode = #tpu.pipeline_mode<synchronous>, transform_indices = @transform_1, window_bounds = array<i64: 16, 32>}, {pipeline_mode = #tpu.pipeline_mode<synchronous>, transform_indices = @transform_2, window_bounds = array<i64: 1, 32>}, {pipeline_mode = #tpu.pipeline_mode<synchronous>, transform_indices = @transform_3, window_bounds = array<i64: 3, 1, 32>}, {pipeline_mode = #tpu.pipeline_mode<synchronous>, transform_indices = @transform_4, window_bounds = array<i64: 1, 32>}, {pipeline_mode = #tpu.pipeline_mode<synchronous>, transform_indices = @transform_5, window_bounds = array<i64: 32, 16>}, {pipeline_mode = #tpu.pipeline_mode<synchronous>, transform_indices = @transform_6, window_bounds = array<i64: 1, 16>}, {transform_indices = @transform_7, window_bounds = array<i64: 1, 16, 16>}]} {
    %c0 = arith.constant 0 : index
    %c0_0 = arith.constant 0 : index
    %c0_1 = arith.constant 0 : index
    %c0_2 = arith.constant 0 : index
    %0 = vector.load %arg2[%c0, %c0_0, %c0_1, %c0_2] : memref<1x1x18x16xf32, #tpu.memory_space<vmem>>, vector<1x1x18x16xf32>
    %1 = vector.shape_cast %0 : vector<1x1x18x16xf32> to vector<18x16xf32>
    %2 = arith.truncf %1 : vector<18x16xf32> to vector<18x16xbf16>
    %c0_3 = arith.constant 0 : index
    %c0_4 = arith.constant 0 : index
    %3 = vector.load %arg3[%c0_3, %c0_4] : memref<16x32xbf16, #tpu.memory_space<vmem>>, vector<16x32xbf16>
    %cst = arith.constant dense<0.000000e+00> : vector<18x32xf32>
    %4 = tpu.matmul %2, %3, %cst {dimension_numbers = #tpu.dot_dimension_numbers<[1], [0], [0], [1], [0, 0, 1, 1], [], []>} : vector<18x16xbf16>, vector<16x32xbf16>, vector<18x32xf32> -> vector<18x32xf32>
    %c0_5 = arith.constant 0 : index
    %c0_6 = arith.constant 0 : index
    %5 = vector.load %arg4[%c0_5, %c0_6] : memref<1x32xf32, #tpu.memory_space<vmem>>, vector<1x32xf32>
    %6 = vector.broadcast %5 : vector<1x32xf32> to vector<18x32xf32>
    %7 = arith.addf %4, %6 : vector<18x32xf32>
    %8 = arith.negf %7 : vector<18x32xf32>
    %9 = math.exp %8 : vector<18x32xf32>
    %cst_7 = arith.constant 1.000000e+00 : f32
    %10 = vector.broadcast %cst_7 : f32 to vector<18x32xf32>
    %11 = arith.addf %10, %9 : vector<18x32xf32>
    %12 = arith.divf %10, %11 : vector<18x32xf32>
    %13 = arith.mulf %7, %12 : vector<18x32xf32>
    %c16_i32 = arith.constant 16 : i32
    %14 = arith.muli %arg1, %c16_i32 : i32
    %15 = tpu.iota {dimensions = array<i32: 0>} : vector<18x1xi32>
    %16 = vector.broadcast %14 : i32 to vector<18x1xi32>
    %17 = arith.addi %16, %15 : vector<18x1xi32>
    %c1_i32 = arith.constant 1 : i32
    %18 = vector.broadcast %c1_i32 : i32 to vector<18x1xi32>
    %19 = arith.cmpi sge, %17, %18 : vector<18x1xi32>
    %c17_i32 = arith.constant 17 : i32
    %20 = vector.broadcast %c17_i32 : i32 to vector<18x1xi32>
    %21 = arith.cmpi slt, %17, %20 : vector<18x1xi32>
    %22 = arith.andi %19, %21 : vector<18x1xi1>
    %cst_8 = arith.constant 0.000000e+00 : f32
    %23 = vector.shape_cast %22 : vector<18x1xi1> to vector<18x1xi1>
    %24 = vector.broadcast %23 : vector<18x1xi1> to vector<18x32xi1>
    %25 = vector.broadcast %cst_8 : f32 to vector<18x32xf32>
    %26 = arith.select %24, %13, %25 : vector<18x32xi1>, vector<18x32xf32>
    %cst_9 = arith.constant 0.000000e+00 : f32
    %27 = vector.broadcast %cst_9 : f32 to vector<16x32xf32>
    %28 = vector.extract_strided_slice %26 {offsets = [0, 0], sizes = [16, 32], strides = [1, 1]} : vector<18x32xf32> to vector<16x32xf32>
    %c0_10 = arith.constant 0 : index
    %c0_11 = arith.constant 0 : index
    %c0_12 = arith.constant 0 : index
    %29 = vector.load %arg5[%c0_10, %c0_11, %c0_12] : memref<3x1x32xf32, #tpu.memory_space<vmem>>, vector<1x1x32xf32>
    %30 = vector.shape_cast %29 : vector<1x1x32xf32> to vector<1x32xf32>
    %31 = vector.broadcast %30 : vector<1x32xf32> to vector<16x32xf32>
    %32 = arith.mulf %28, %31 : vector<16x32xf32>
    %33 = arith.addf %27, %32 : vector<16x32xf32>
    %34 = vector.extract_strided_slice %26 {offsets = [1, 0], sizes = [16, 32], strides = [1, 1]} : vector<18x32xf32> to vector<16x32xf32>
    %c1 = arith.constant 1 : index
    %c0_13 = arith.constant 0 : index
    %c0_14 = arith.constant 0 : index
    %35 = vector.load %arg5[%c1, %c0_13, %c0_14] : memref<3x1x32xf32, #tpu.memory_space<vmem>>, vector<1x1x32xf32>
    %36 = vector.shape_cast %35 : vector<1x1x32xf32> to vector<1x32xf32>
    %37 = vector.broadcast %36 : vector<1x32xf32> to vector<16x32xf32>
    %38 = arith.mulf %34, %37 : vector<16x32xf32>
    %39 = arith.addf %33, %38 : vector<16x32xf32>
    %40 = vector.extract_strided_slice %26 {offsets = [2, 0], sizes = [16, 32], strides = [1, 1]} : vector<18x32xf32> to vector<16x32xf32>
    %c2 = arith.constant 2 : index
    %c0_15 = arith.constant 0 : index
    %c0_16 = arith.constant 0 : index
    %41 = vector.load %arg5[%c2, %c0_15, %c0_16] : memref<3x1x32xf32, #tpu.memory_space<vmem>>, vector<1x1x32xf32>
    %42 = vector.shape_cast %41 : vector<1x1x32xf32> to vector<1x32xf32>
    %43 = vector.broadcast %42 : vector<1x32xf32> to vector<16x32xf32>
    %44 = arith.mulf %40, %43 : vector<16x32xf32>
    %45 = arith.addf %39, %44 : vector<16x32xf32>
    %c0_17 = arith.constant 0 : index
    %c0_18 = arith.constant 0 : index
    %46 = vector.load %arg6[%c0_17, %c0_18] : memref<1x32xf32, #tpu.memory_space<vmem>>, vector<1x32xf32>
    %47 = vector.broadcast %46 : vector<1x32xf32> to vector<16x32xf32>
    %48 = arith.addf %45, %47 : vector<16x32xf32>
    %49 = arith.negf %48 : vector<16x32xf32>
    %50 = math.exp %49 : vector<16x32xf32>
    %cst_19 = arith.constant 1.000000e+00 : f32
    %51 = vector.broadcast %cst_19 : f32 to vector<16x32xf32>
    %52 = arith.addf %51, %50 : vector<16x32xf32>
    %53 = arith.divf %51, %52 : vector<16x32xf32>
    %54 = arith.mulf %48, %53 : vector<16x32xf32>
    %55 = arith.truncf %54 : vector<16x32xf32> to vector<16x32xbf16>
    %c0_20 = arith.constant 0 : index
    %c0_21 = arith.constant 0 : index
    %56 = vector.load %arg7[%c0_20, %c0_21] : memref<32x16xbf16, #tpu.memory_space<vmem>>, vector<32x16xbf16>
    %cst_22 = arith.constant dense<0.000000e+00> : vector<16x16xf32>
    %57 = tpu.matmul %55, %56, %cst_22 {dimension_numbers = #tpu.dot_dimension_numbers<[1], [0], [0], [1], [0, 0, 1, 1], [], []>} : vector<16x32xbf16>, vector<32x16xbf16>, vector<16x16xf32> -> vector<16x16xf32>
    %c0_23 = arith.constant 0 : index
    %c0_24 = arith.constant 0 : index
    %58 = vector.load %arg8[%c0_23, %c0_24] : memref<1x16xf32, #tpu.memory_space<vmem>>, vector<1x16xf32>
    %59 = vector.broadcast %58 : vector<1x16xf32> to vector<16x16xf32>
    %60 = arith.addf %57, %59 : vector<16x16xf32>
    %61 = math.tanh %60 : vector<16x16xf32>
    %62 = vector.extract_strided_slice %1 {offsets = [1, 0], sizes = [16, 16], strides = [1, 1]} : vector<18x16xf32> to vector<16x16xf32>
    %63 = arith.addf %62, %61 : vector<16x16xf32>
    %c0_25 = arith.constant 0 : index
    %c0_26 = arith.constant 0 : index
    %c0_27 = arith.constant 0 : index
    %64 = vector.load %arg9[%c0_25, %c0_26, %c0_27] : memref<1x16x16xf32, #tpu.memory_space<vmem>>, vector<1x16x16xf32>
    %65 = vector.shape_cast %64 : vector<1x16x16xf32> to vector<16x16xf32>
    %66 = vector.shape_cast %63 : vector<16x16xf32> to vector<1x16x16xf32>
    tpu.vector_store %arg9[%c0_25, %c0_26, %c0_27], %66 {strides = array<i32>} : memref<1x16x16xf32, #tpu.memory_space<vmem>>, vector<1x16x16xf32>,
    return
  }
  func.func @transform_0(%arg0: i32, %arg1: i32) -> (i32, i32, i32, i32) {
    %c0_i32 = arith.constant 0 : i32
    %c0_i32_0 = arith.constant 0 : i32
    %c0_i32_1 = arith.constant 0 : i32
    return %arg0, %arg1, %c0_i32, %c0_i32_0 : i32, i32, i32, i32
  }
  func.func @transform_1(%arg0: i32, %arg1: i32) -> (i32, i32) {
    %c0_i32 = arith.constant 0 : i32
    %c0_i32_0 = arith.constant 0 : i32
    %c0_i32_1 = arith.constant 0 : i32
    return %c0_i32, %c0_i32_0 : i32, i32
  }
  func.func @transform_2(%arg0: i32, %arg1: i32) -> (i32, i32) {
    %c0_i32 = arith.constant 0 : i32
    %c0_i32_0 = arith.constant 0 : i32
    %c0_i32_1 = arith.constant 0 : i32
    return %c0_i32, %c0_i32_0 : i32, i32
  }
  func.func @transform_3(%arg0: i32, %arg1: i32) -> (i32, i32, i32) {
    %c0_i32 = arith.constant 0 : i32
    %c0_i32_0 = arith.constant 0 : i32
    %c0_i32_1 = arith.constant 0 : i32
    %c0_i32_2 = arith.constant 0 : i32
    return %c0_i32, %c0_i32_0, %c0_i32_1 : i32, i32, i32
  }
  func.func @transform_4(%arg0: i32, %arg1: i32) -> (i32, i32) {
    %c0_i32 = arith.constant 0 : i32
    %c0_i32_0 = arith.constant 0 : i32
    %c0_i32_1 = arith.constant 0 : i32
    return %c0_i32, %c0_i32_0 : i32, i32
  }
  func.func @transform_5(%arg0: i32, %arg1: i32) -> (i32, i32) {
    %c0_i32 = arith.constant 0 : i32
    %c0_i32_0 = arith.constant 0 : i32
    %c0_i32_1 = arith.constant 0 : i32
    return %c0_i32, %c0_i32_0 : i32, i32
  }
  func.func @transform_6(%arg0: i32, %arg1: i32) -> (i32, i32) {
    %c0_i32 = arith.constant 0 : i32
    %c0_i32_0 = arith.constant 0 : i32
    %c0_i32_1 = arith.constant 0 : i32
    return %c0_i32, %c0_i32_0 : i32, i32
  }
  func.func @transform_7(%arg0: i32, %arg1: i32) -> (i32, i32, i32) {
    %c0_i32 = arith.constant 0 : i32
    %c0_i32_0 = arith.constant 0 : i32
    return %arg0, %arg1, %c0_i32 : i32, i32, i32
  }
}

module attributes {stable_mosaic.version = 11 : i64} {
  func.func @_mbconv_kernel(%arg0: i32, %arg1: i32, %arg2: memref<1x1x20x16xf32, #tpu.memory_space<vmem>>, %arg3: memref<16x32xbf16, #tpu.memory_space<vmem>>, %arg4: memref<1x32xf32, #tpu.memory_space<vmem>>, %arg5: memref<3x1x32xf32, #tpu.memory_space<vmem>>, %arg6: memref<1x32xf32, #tpu.memory_space<vmem>>, %arg7: memref<32x16xbf16, #tpu.memory_space<vmem>>, %arg8: memref<1x16xf32, #tpu.memory_space<vmem>>, %arg9: memref<1x16x16xf32, #tpu.memory_space<vmem>>) attributes {dimension_semantics = [#tpu.dimension_semantics<parallel>, #tpu.dimension_semantics<parallel>], iteration_bounds = array<i64: 2, 1>, scalar_prefetch = 0 : i64, scratch_operands = 0 : i64, tpu.core_type = #tpu.core_type<tc>, window_params = [{transform_indices = @transform_0, window_bounds = array<i64: 1, 1, 20, 16>}, {pipeline_mode = #tpu.pipeline_mode<synchronous>, transform_indices = @transform_1, window_bounds = array<i64: 16, 32>}, {pipeline_mode = #tpu.pipeline_mode<synchronous>, transform_indices = @transform_2, window_bounds = array<i64: 1, 32>}, {pipeline_mode = #tpu.pipeline_mode<synchronous>, transform_indices = @transform_3, window_bounds = array<i64: 3, 1, 32>}, {pipeline_mode = #tpu.pipeline_mode<synchronous>, transform_indices = @transform_4, window_bounds = array<i64: 1, 32>}, {pipeline_mode = #tpu.pipeline_mode<synchronous>, transform_indices = @transform_5, window_bounds = array<i64: 32, 16>}, {pipeline_mode = #tpu.pipeline_mode<synchronous>, transform_indices = @transform_6, window_bounds = array<i64: 1, 16>}, {transform_indices = @transform_7, window_bounds = array<i64: 1, 16, 16>}]} {
    %c0 = arith.constant 0 : index
    %c0_0 = arith.constant 0 : index
    %c0_1 = arith.constant 0 : index
    %c0_2 = arith.constant 0 : index
    %0 = vector.load %arg2[%c0, %c0_0, %c0_1, %c0_2] : memref<1x1x20x16xf32, #tpu.memory_space<vmem>>, vector<1x1x20x16xf32>
    %1 = vector.shape_cast %0 : vector<1x1x20x16xf32> to vector<20x16xf32>
    %2 = arith.truncf %1 : vector<20x16xf32> to vector<20x16xbf16>
    %c0_3 = arith.constant 0 : index
    %c0_4 = arith.constant 0 : index
    %3 = vector.load %arg3[%c0_3, %c0_4] : memref<16x32xbf16, #tpu.memory_space<vmem>>, vector<16x32xbf16>
    %cst = arith.constant dense<0.000000e+00> : vector<20x32xf32>
    %4 = tpu.matmul %2, %3, %cst {dimension_numbers = #tpu.dot_dimension_numbers<[1], [0], [0], [1], [0, 0, 1, 1], [], []>} : vector<20x16xbf16>, vector<16x32xbf16>, vector<20x32xf32> -> vector<20x32xf32>
    %c0_5 = arith.constant 0 : index
    %c0_6 = arith.constant 0 : index
    %5 = vector.load %arg4[%c0_5, %c0_6] : memref<1x32xf32, #tpu.memory_space<vmem>>, vector<1x32xf32>
    %6 = vector.broadcast %5 : vector<1x32xf32> to vector<20x32xf32>
    %7 = arith.addf %4, %6 : vector<20x32xf32>
    %8 = arith.negf %7 : vector<20x32xf32>
    %9 = math.exp %8 : vector<20x32xf32>
    %cst_7 = arith.constant 1.000000e+00 : f32
    %10 = vector.broadcast %cst_7 : f32 to vector<20x32xf32>
    %11 = arith.addf %10, %9 : vector<20x32xf32>
    %12 = arith.divf %10, %11 : vector<20x32xf32>
    %13 = arith.mulf %7, %12 : vector<20x32xf32>
    %c16_i32 = arith.constant 16 : i32
    %14 = arith.muli %arg1, %c16_i32 : i32
    %15 = tpu.iota {dimensions = array<i32: 0>} : vector<20x1xi32>
    %16 = vector.broadcast %14 : i32 to vector<20x1xi32>
    %17 = arith.addi %16, %15 : vector<20x1xi32>
    %c2_i32 = arith.constant 2 : i32
    %18 = vector.broadcast %c2_i32 : i32 to vector<20x1xi32>
    %19 = arith.cmpi sge, %17, %18 : vector<20x1xi32>
    %c18_i32 = arith.constant 18 : i32
    %20 = vector.broadcast %c18_i32 : i32 to vector<20x1xi32>
    %21 = arith.cmpi slt, %17, %20 : vector<20x1xi32>
    %22 = arith.andi %19, %21 : vector<20x1xi1>
    %cst_8 = arith.constant 0.000000e+00 : f32
    %23 = vector.shape_cast %22 : vector<20x1xi1> to vector<20x1xi1>
    %24 = vector.broadcast %23 : vector<20x1xi1> to vector<20x32xi1>
    %25 = vector.broadcast %cst_8 : f32 to vector<20x32xf32>
    %26 = arith.select %24, %13, %25 : vector<20x32xi1>, vector<20x32xf32>
    %cst_9 = arith.constant 0.000000e+00 : f32
    %27 = vector.broadcast %cst_9 : f32 to vector<16x32xf32>
    %28 = vector.extract_strided_slice %26 {offsets = [0, 0], sizes = [16, 32], strides = [1, 1]} : vector<20x32xf32> to vector<16x32xf32>
    %c0_10 = arith.constant 0 : index
    %c0_11 = arith.constant 0 : index
    %c0_12 = arith.constant 0 : index
    %29 = vector.load %arg5[%c0_10, %c0_11, %c0_12] : memref<3x1x32xf32, #tpu.memory_space<vmem>>, vector<1x1x32xf32>
    %30 = vector.shape_cast %29 : vector<1x1x32xf32> to vector<1x32xf32>
    %31 = vector.broadcast %30 : vector<1x32xf32> to vector<16x32xf32>
    %32 = arith.mulf %28, %31 : vector<16x32xf32>
    %33 = arith.addf %27, %32 : vector<16x32xf32>
    %34 = vector.extract_strided_slice %26 {offsets = [2, 0], sizes = [16, 32], strides = [1, 1]} : vector<20x32xf32> to vector<16x32xf32>
    %c1 = arith.constant 1 : index
    %c0_13 = arith.constant 0 : index
    %c0_14 = arith.constant 0 : index
    %35 = vector.load %arg5[%c1, %c0_13, %c0_14] : memref<3x1x32xf32, #tpu.memory_space<vmem>>, vector<1x1x32xf32>
    %36 = vector.shape_cast %35 : vector<1x1x32xf32> to vector<1x32xf32>
    %37 = vector.broadcast %36 : vector<1x32xf32> to vector<16x32xf32>
    %38 = arith.mulf %34, %37 : vector<16x32xf32>
    %39 = arith.addf %33, %38 : vector<16x32xf32>
    %40 = vector.extract_strided_slice %26 {offsets = [4, 0], sizes = [16, 32], strides = [1, 1]} : vector<20x32xf32> to vector<16x32xf32>
    %c2 = arith.constant 2 : index
    %c0_15 = arith.constant 0 : index
    %c0_16 = arith.constant 0 : index
    %41 = vector.load %arg5[%c2, %c0_15, %c0_16] : memref<3x1x32xf32, #tpu.memory_space<vmem>>, vector<1x1x32xf32>
    %42 = vector.shape_cast %41 : vector<1x1x32xf32> to vector<1x32xf32>
    %43 = vector.broadcast %42 : vector<1x32xf32> to vector<16x32xf32>
    %44 = arith.mulf %40, %43 : vector<16x32xf32>
    %45 = arith.addf %39, %44 : vector<16x32xf32>
    %c0_17 = arith.constant 0 : index
    %c0_18 = arith.constant 0 : index
    %46 = vector.load %arg6[%c0_17, %c0_18] : memref<1x32xf32, #tpu.memory_space<vmem>>, vector<1x32xf32>
    %47 = vector.broadcast %46 : vector<1x32xf32> to vector<16x32xf32>
    %48 = arith.addf %45, %47 : vector<16x32xf32>
    %49 = arith.negf %48 : vector<16x32xf32>
    %50 = math.exp %49 : vector<16x32xf32>
    %cst_19 = arith.constant 1.000000e+00 : f32
    %51 = vector.broadcast %cst_19 : f32 to vector<16x32xf32>
    %52 = arith.addf %51, %50 : vector<16x32xf32>
    %53 = arith.divf %51, %52 : vector<16x32xf32>
    %54 = arith.mulf %48, %53 : vector<16x32xf32>
    %55 = arith.truncf %54 : vector<16x32xf32> to vector<16x32xbf16>
    %c0_20 = arith.constant 0 : index
    %c0_21 = arith.constant 0 : index
    %56 = vector.load %arg7[%c0_20, %c0_21] : memref<32x16xbf16, #tpu.memory_space<vmem>>, vector<32x16xbf16>
    %cst_22 = arith.constant dense<0.000000e+00> : vector<16x16xf32>
    %57 = tpu.matmul %55, %56, %cst_22 {dimension_numbers = #tpu.dot_dimension_numbers<[1], [0], [0], [1], [0, 0, 1, 1], [], []>} : vector<16x32xbf16>, vector<32x16xbf16>, vector<16x16xf32> -> vector<16x16xf32>
    %c0_23 = arith.constant 0 : index
    %c0_24 = arith.constant 0 : index
    %58 = vector.load %arg8[%c0_23, %c0_24] : memref<1x16xf32, #tpu.memory_space<vmem>>, vector<1x16xf32>
    %59 = vector.broadcast %58 : vector<1x16xf32> to vector<16x16xf32>
    %60 = arith.addf %57, %59 : vector<16x16xf32>
    %61 = vector.extract_strided_slice %1 {offsets = [2, 0], sizes = [16, 16], strides = [1, 1]} : vector<20x16xf32> to vector<16x16xf32>
    %62 = arith.addf %61, %60 : vector<16x16xf32>
    %c0_25 = arith.constant 0 : index
    %c0_26 = arith.constant 0 : index
    %c0_27 = arith.constant 0 : index
    %63 = vector.load %arg9[%c0_25, %c0_26, %c0_27] : memref<1x16x16xf32, #tpu.memory_space<vmem>>, vector<1x16x16xf32>
    %64 = vector.shape_cast %63 : vector<1x16x16xf32> to vector<16x16xf32>
    %65 = vector.shape_cast %62 : vector<16x16xf32> to vector<1x16x16xf32>
    tpu.vector_store %arg9[%c0_25, %c0_26, %c0_27], %65 {strides = array<i32>} : memref<1x16x16xf32, #tpu.memory_space<vmem>>, vector<1x16x16xf32>,
    return
  }
  func.func @transform_0(%arg0: i32, %arg1: i32) -> (i32, i32, i32, i32) {
    %c0_i32 = arith.constant 0 : i32
    %c0_i32_0 = arith.constant 0 : i32
    %c0_i32_1 = arith.constant 0 : i32
    return %arg0, %arg1, %c0_i32, %c0_i32_0 : i32, i32, i32, i32
  }
  func.func @transform_1(%arg0: i32, %arg1: i32) -> (i32, i32) {
    %c0_i32 = arith.constant 0 : i32
    %c0_i32_0 = arith.constant 0 : i32
    %c0_i32_1 = arith.constant 0 : i32
    return %c0_i32, %c0_i32_0 : i32, i32
  }
  func.func @transform_2(%arg0: i32, %arg1: i32) -> (i32, i32) {
    %c0_i32 = arith.constant 0 : i32
    %c0_i32_0 = arith.constant 0 : i32
    %c0_i32_1 = arith.constant 0 : i32
    return %c0_i32, %c0_i32_0 : i32, i32
  }
  func.func @transform_3(%arg0: i32, %arg1: i32) -> (i32, i32, i32) {
    %c0_i32 = arith.constant 0 : i32
    %c0_i32_0 = arith.constant 0 : i32
    %c0_i32_1 = arith.constant 0 : i32
    %c0_i32_2 = arith.constant 0 : i32
    return %c0_i32, %c0_i32_0, %c0_i32_1 : i32, i32, i32
  }
  func.func @transform_4(%arg0: i32, %arg1: i32) -> (i32, i32) {
    %c0_i32 = arith.constant 0 : i32
    %c0_i32_0 = arith.constant 0 : i32
    %c0_i32_1 = arith.constant 0 : i32
    return %c0_i32, %c0_i32_0 : i32, i32
  }
  func.func @transform_5(%arg0: i32, %arg1: i32) -> (i32, i32) {
    %c0_i32 = arith.constant 0 : i32
    %c0_i32_0 = arith.constant 0 : i32
    %c0_i32_1 = arith.constant 0 : i32
    return %c0_i32, %c0_i32_0 : i32, i32
  }
  func.func @transform_6(%arg0: i32, %arg1: i32) -> (i32, i32) {
    %c0_i32 = arith.constant 0 : i32
    %c0_i32_0 = arith.constant 0 : i32
    %c0_i32_1 = arith.constant 0 : i32
    return %c0_i32, %c0_i32_0 : i32, i32
  }
  func.func @transform_7(%arg0: i32, %arg1: i32) -> (i32, i32, i32) {
    %c0_i32 = arith.constant 0 : i32
    %c0_i32_0 = arith.constant 0 : i32
    return %arg0, %arg1, %c0_i32 : i32, i32, i32
  }
}

module attributes {stable_mosaic.version = 11 : i64} {
  func.func @_sq_quantize_kernel(%arg0: i32, %arg1: memref<32x16xf32, #tpu.memory_space<vmem>>, %arg2: memref<16x16xbf16, #tpu.memory_space<vmem>>, %arg3: memref<1x16xf32, #tpu.memory_space<vmem>>, %arg4: memref<32x16xf32, #tpu.memory_space<vmem>>, %arg5: memref<32x16xf32, #tpu.memory_space<vmem>>, %arg6: memref<1x16xf32, #tpu.memory_space<vmem>>, %arg7: memref<1x16xf32, #tpu.memory_space<vmem>>) attributes {dimension_semantics = [#tpu.dimension_semantics<arbitrary>], iteration_bounds = array<i64: 1>, scalar_prefetch = 0 : i64, scratch_operands = 0 : i64, tpu.core_type = #tpu.core_type<tc>, window_params = [{transform_indices = @transform_0, window_bounds = array<i64: 32, 16>}, {pipeline_mode = #tpu.pipeline_mode<synchronous>, transform_indices = @transform_1, window_bounds = array<i64: 16, 16>}, {pipeline_mode = #tpu.pipeline_mode<synchronous>, transform_indices = @transform_2, window_bounds = array<i64: 1, 16>}, {transform_indices = @transform_3, window_bounds = array<i64: 32, 16>}, {transform_indices = @transform_4, window_bounds = array<i64: 32, 16>}, {pipeline_mode = #tpu.pipeline_mode<synchronous>, transform_indices = @transform_5, window_bounds = array<i64: 1, 16>}, {pipeline_mode = #tpu.pipeline_mode<synchronous>, transform_indices = @transform_6, window_bounds = array<i64: 1, 16>}]} {
    %c0_i32 = arith.constant 0 : i32
    %0 = arith.cmpi eq, %arg0, %c0_i32 : i32
    %1 = arith.extui %0 : i1 to i32
    %c0_i32_0 = arith.constant 0 : i32
    %2 = arith.cmpi ne, %1, %c0_i32_0 : i32
    scf.if %2 {
      %cst_29 = arith.constant 0.000000e+00 : f32
      %63 = vector.broadcast %cst_29 : f32 to vector<1x16xf32>
      %c0_30 = arith.constant 0 : index
      %c0_31 = arith.constant 0 : index
      %64 = vector.load %arg6[%c0_30, %c0_31] : memref<1x16xf32, #tpu.memory_space<vmem>>, vector<1x16xf32>
      tpu.vector_store %arg6[%c0_30, %c0_31], %63 {strides = array<i32>} : memref<1x16xf32, #tpu.memory_space<vmem>>, vector<1x16xf32>,
      %cst_32 = arith.constant 0.000000e+00 : f32
      %65 = vector.broadcast %cst_32 : f32 to vector<1x16xf32>
      %c0_33 = arith.constant 0 : index
      %c0_34 = arith.constant 0 : index
      %66 = vector.load %arg7[%c0_33, %c0_34] : memref<1x16xf32, #tpu.memory_space<vmem>>, vector<1x16xf32>
      tpu.vector_store %arg7[%c0_33, %c0_34], %65 {strides = array<i32>} : memref<1x16xf32, #tpu.memory_space<vmem>>, vector<1x16xf32>,
    } else {
    }
    %c0 = arith.constant 0 : index
    %c0_1 = arith.constant 0 : index
    %3 = vector.load %arg1[%c0, %c0_1] : memref<32x16xf32, #tpu.memory_space<vmem>>, vector<32x16xf32>
    %4 = arith.truncf %3 : vector<32x16xf32> to vector<32x16xbf16>
    %c0_2 = arith.constant 0 : index
    %c0_3 = arith.constant 0 : index
    %5 = vector.load %arg2[%c0_2, %c0_3] : memref<16x16xbf16, #tpu.memory_space<vmem>>, vector<16x16xbf16>
    %cst = arith.constant dense<0.000000e+00> : vector<32x16xf32>
    %6 = tpu.matmul %4, %5, %cst {dimension_numbers = #tpu.dot_dimension_numbers<[1], [1], [0], [0], [0, 0, 1, 0], [], []>} : vector<32x16xbf16>, vector<16x16xbf16>, vector<32x16xf32> -> vector<32x16xf32>
    %cst_4 = arith.constant 9.900990e-03 : f32
    %7 = vector.broadcast %cst_4 : f32 to vector<32x16xf32>
    %8 = arith.mulf %7, %6 : vector<32x16xf32>
    %c0_5 = arith.constant 0 : index
    %c0_6 = arith.constant 0 : index
    %9 = vector.load %arg3[%c0_5, %c0_6] : memref<1x16xf32, #tpu.memory_space<vmem>>, vector<1x16xf32>
    %cst_7 = arith.constant 0.00495049497 : f32
    %10 = vector.broadcast %cst_7 : f32 to vector<1x16xf32>
    %11 = arith.mulf %10, %9 : vector<1x16xf32>
    %12 = vector.broadcast %11 : vector<1x16xf32> to vector<32x16xf32>
    %13 = arith.subf %8, %12 : vector<32x16xf32>
    %cst_8 = arith.constant dense<0xFF800000> : vector<32xf32>
    %14 = vector.multi_reduction <maximumf>, %13, %cst_8 [1] : vector<32x16xf32> to vector<32xf32>
    %15 = vector.shape_cast %14 : vector<32xf32> to vector<32x1xf32>
    %16 = vector.broadcast %15 : vector<32x1xf32> to vector<32x16xf32>
    %17 = arith.subf %13, %16 : vector<32x16xf32>
    %18 = math.exp %17 : vector<32x16xf32>
    %cst_9 = arith.constant dense<0.000000e+00> : vector<32xf32>
    %19 = vector.multi_reduction <add>, %18, %cst_9 [1] : vector<32x16xf32> to vector<32xf32>
    %20 = vector.shape_cast %19 : vector<32xf32> to vector<32x1xf32>
    %21 = vector.broadcast %20 : vector<32x1xf32> to vector<32x16xf32>
    %22 = arith.divf %18, %21 : vector<32x16xf32>
    %23 = math.log %20 : vector<32x1xf32>
    %24 = vector.broadcast %23 : vector<32x1xf32> to vector<32x16xf32>
    %25 = arith.subf %17, %24 : vector<32x16xf32>
    %c32_i32 = arith.constant 32 : i32
    %26 = arith.muli %arg0, %c32_i32 : i32
    %27 = tpu.iota {dimensions = array<i32: 0>} : vector<32x1xi32>
    %28 = vector.broadcast %26 : i32 to vector<32x1xi32>
    %29 = arith.addi %28, %27 : vector<32x1xi32>
    %c32_i32_10 = arith.constant 32 : i32
    %30 = vector.broadcast %c32_i32_10 : i32 to vector<32x1xi32>
    %31 = arith.cmpi slt, %29, %30 : vector<32x1xi32>
    %32 = arith.extui %31 : vector<32x1xi1> to vector<32x1xi32>
    %33 = arith.sitofp %32 : vector<32x1xi32> to vector<32x1xf32>
    %34 = vector.broadcast %33 : vector<32x1xf32> to vector<32x16xf32>
    %35 = arith.mulf %22, %34 : vector<32x16xf32>
    %c0_11 = arith.constant 0 : index
    %c0_12 = arith.constant 0 : index
    %36 = vector.load %arg6[%c0_11, %c0_12] : memref<1x16xf32, #tpu.memory_space<vmem>>, vector<1x16xf32>
    %cst_13 = arith.constant dense<0.000000e+00> : vector<16xf32>
    %37 = vector.multi_reduction <add>, %35, %cst_13 [0] : vector<32x16xf32> to vector<16xf32>
    %38 = vector.shape_cast %37 : vector<16xf32> to vector<1x16xf32>
    %39 = arith.addf %36, %38 : vector<1x16xf32>
    %c0_14 = arith.constant 0 : index
    %c0_15 = arith.constant 0 : index
    %40 = vector.load %arg6[%c0_14, %c0_15] : memref<1x16xf32, #tpu.memory_space<vmem>>, vector<1x16xf32>
    tpu.vector_store %arg6[%c0_14, %c0_15], %39 {strides = array<i32>} : memref<1x16xf32, #tpu.memory_space<vmem>>, vector<1x16xf32>,
    %c0_16 = arith.constant 0 : index
    %c0_17 = arith.constant 0 : index
    %41 = vector.load %arg7[%c0_16, %c0_17] : memref<1x16xf32, #tpu.memory_space<vmem>>, vector<1x16xf32>
    %42 = arith.mulf %35, %25 : vector<32x16xf32>
    %cst_18 = arith.constant dense<0.000000e+00> : vector<16xf32>
    %43 = vector.multi_reduction <add>, %42, %cst_18 [0] : vector<32x16xf32> to vector<16xf32>
    %44 = vector.shape_cast %43 : vector<16xf32> to vector<1x16xf32>
    %45 = arith.addf %41, %44 : vector<1x16xf32>
    %c0_19 = arith.constant 0 : index
    %c0_20 = arith.constant 0 : index
    %46 = vector.load %arg7[%c0_19, %c0_20] : memref<1x16xf32, #tpu.memory_space<vmem>>, vector<1x16xf32>
    tpu.vector_store %arg7[%c0_19, %c0_20], %45 {strides = array<i32>} : memref<1x16xf32, #tpu.memory_space<vmem>>, vector<1x16xf32>,
    %c0_21 = arith.constant 0 : index
    %c0_22 = arith.constant 0 : index
    %47 = vector.load %arg4[%c0_21, %c0_22] : memref<32x16xf32, #tpu.memory_space<vmem>>, vector<32x16xf32>
    %48 = arith.addf %13, %47 : vector<32x16xf32>
    %cst_23 = arith.constant 2.000000e+00 : f32
    %49 = vector.broadcast %cst_23 : f32 to vector<32x16xf32>
    %50 = arith.mulf %48, %49 : vector<32x16xf32>
    %cst_24 = arith.constant dense<0xFF800000> : vector<32xf32>
    %51 = vector.multi_reduction <maximumf>, %50, %cst_24 [1] : vector<32x16xf32> to vector<32xf32>
    %52 = vector.shape_cast %51 : vector<32xf32> to vector<32x1xf32>
    %53 = vector.broadcast %52 : vector<32x1xf32> to vector<32x16xf32>
    %54 = arith.subf %50, %53 : vector<32x16xf32>
    %55 = math.exp %54 : vector<32x16xf32>
    %cst_25 = arith.constant dense<0.000000e+00> : vector<32xf32>
    %56 = vector.multi_reduction <add>, %55, %cst_25 [1] : vector<32x16xf32> to vector<32xf32>
    %57 = vector.shape_cast %56 : vector<32xf32> to vector<32x1xf32>
    %58 = vector.broadcast %57 : vector<32x1xf32> to vector<32x16xf32>
    %59 = arith.divf %55, %58 : vector<32x16xf32>
    %60 = arith.truncf %59 : vector<32x16xf32> to vector<32x16xbf16>
    %cst_26 = arith.constant dense<0.000000e+00> : vector<32x16xf32>
    %61 = tpu.matmul %60, %5, %cst_26 {dimension_numbers = #tpu.dot_dimension_numbers<[1], [0], [0], [1], [0, 0, 1, 1], [], []>} : vector<32x16xbf16>, vector<16x16xbf16>, vector<32x16xf32> -> vector<32x16xf32>
    %c0_27 = arith.constant 0 : index
    %c0_28 = arith.constant 0 : index
    %62 = vector.load %arg5[%c0_27, %c0_28] : memref<32x16xf32, #tpu.memory_space<vmem>>, vector<32x16xf32>
    tpu.vector_store %arg5[%c0_27, %c0_28], %61 {strides = array<i32>} : memref<32x16xf32, #tpu.memory_space<vmem>>, vector<32x16xf32>,
    return
  }
  func.func @transform_0(%arg0: i32) -> (i32, i32) {
    %c0_i32 = arith.constant 0 : i32
    %c0_i32_0 = arith.constant 0 : i32
    return %arg0, %c0_i32 : i32, i32
  }
  func.func @transform_1(%arg0: i32) -> (i32, i32) {
    %c0_i32 = arith.constant 0 : i32
    %c0_i32_0 = arith.constant 0 : i32
    %c0_i32_1 = arith.constant 0 : i32
    return %c0_i32, %c0_i32_0 : i32, i32
  }
  func.func @transform_2(%arg0: i32) -> (i32, i32) {
    %c0_i32 = arith.constant 0 : i32
    %c0_i32_0 = arith.constant 0 : i32
    %c0_i32_1 = arith.constant 0 : i32
    return %c0_i32, %c0_i32_0 : i32, i32
  }
  func.func @transform_3(%arg0: i32) -> (i32, i32) {
    %c0_i32 = arith.constant 0 : i32
    %c0_i32_0 = arith.constant 0 : i32
    return %arg0, %c0_i32 : i32, i32
  }
  func.func @transform_4(%arg0: i32) -> (i32, i32) {
    %c0_i32 = arith.constant 0 : i32
    %c0_i32_0 = arith.constant 0 : i32
    return %arg0, %c0_i32 : i32, i32
  }
  func.func @transform_5(%arg0: i32) -> (i32, i32) {
    %c0_i32 = arith.constant 0 : i32
    %c0_i32_0 = arith.constant 0 : i32
    %c0_i32_1 = arith.constant 0 : i32
    return %c0_i32, %c0_i32_0 : i32, i32
  }
  func.func @transform_6(%arg0: i32) -> (i32, i32) {
    %c0_i32 = arith.constant 0 : i32
    %c0_i32_0 = arith.constant 0 : i32
    %c0_i32_1 = arith.constant 0 : i32
    return %c0_i32, %c0_i32_0 : i32, i32
  }
}

</mosaic_0001>

<llo_original>
// kernel: _lambda_.11
$region0: #{_lambda_.11}
  #allocation0 [shape = 'u32[]', space=smem, size = 0x4, offset = 0x4, fixed_abs, tag = 'smem constant byte address 0x4 - core index']
  #allocation1 [shape = 'u32[72,128]{1,0:T(1,128)}', space=vmem, size = 0x9000, scoped, tag = 'internal scratch']
  %s0 = inlined_call_operand.vmem [shape: f32[32,16], index: 0, kind: input, shape index: {}]
  %s1 = inlined_call_operand.vmem [shape: f32[32,8], index: 1, kind: input, shape index: {}]
  %s2 = inlined_call_operand.vmem [shape: bf16[16,16], index: 2, kind: input, shape index: {}]
  %s3 = inlined_call_operand.vmem [shape: bf16[8,16], index: 3, kind: input, shape index: {}]
  %s4 = inlined_call_operand.vmem [shape: f32[1,16], index: 4, kind: input, shape index: {}]
  %s5 = inlined_call_operand.vmem [shape: f32[32,16], index: 5, kind: output, shape index: {}]
  %s6 = sld [smem:[#allocation0]]
  $region30: #{_lambda_.11} parent=0
    _
  %s8 = ssub.s32 1, %s6
  %s9 = scalar_select 0, %s8, %s6
  // Predicated region
  $region2: #{_lambda_.11} parent=0 // pred_check
    _
  $region3: #{_lambda_.11} parent=0 // pred_check_branch
    %11 = sbr.rel (0) target = $region5
  $region4: #{_lambda_.11} parent=0 // pred_region
    _
  $region5: #{_lambda_.11} parent=0 // pred_fallthru
    _
  // Predicated region
  $region6: #{_lambda_.11} parent=0 // pred_check
    _
  $region7: #{_lambda_.11} parent=0 // pred_check_branch
    %13 = sbr.rel (0) target = $region9
  $region8: #{_lambda_.11} parent=0 // pred_region
    _
  $region9: #{_lambda_.11} parent=0 // pred_fallthru
    _
  // Predicated region
  $region10: #{_lambda_.11} parent=0 // pred_check
    _
  $region11: #{_lambda_.11} parent=0 // pred_check_branch
    %15 = sbr.rel (0) target = $region13
  $region12: #{_lambda_.11} parent=0 // pred_region
    _
  $region13: #{_lambda_.11} parent=0 // pred_fallthru
    _
  // Predicated region
  $region14: #{_lambda_.11} parent=0 // pred_check
    _
  $region15: #{_lambda_.11} parent=0 // pred_check_branch
    %17 = sbr.rel (0) target = $region17
  $region16: #{_lambda_.11} parent=0 // pred_region
    _
  $region17: #{_lambda_.11} parent=0 // pred_fallthru
    _
  // Predicated region
  $region18: #{_lambda_.11} parent=0 // pred_check
    _
  $region19: #{_lambda_.11} parent=0 // pred_check_branch
    %19 = sbr.rel (0) target = $region21
  $region20: #{_lambda_.11} parent=0 // pred_region
    _
  $region21: #{_lambda_.11} parent=0 // pred_fallthru
    _
  %v21 = vld [vmem:[%s0] sm:$0xff]
  %v22 = vld [vmem:[%s0 + $0x8] sm:$0xff]
  %v23 = vld [vmem:[%s0 + $0x10] sm:$0xff]
  %v24 = vld [vmem:[%s0 + $0x18] sm:$0xff]
  %v25 = vpack.c.bf16 %v22, %v21
  %v26 = vpack.c.bf16 %v24, %v23
  %v27 = vld [vmem:[%s2] sm:$0xf]
  %v28 = vld [vmem:[%s2 + $0x4] sm:$0xf]
  %v29 = vld [vmem:[%s1] sm:$0xff]
  %v30 = vld [vmem:[%s1 + $0x8] sm:$0xff]
  %v31 = vld [vmem:[%s1 + $0x10] sm:$0xff]
  %v32 = vld [vmem:[%s1 + $0x18] sm:$0xff]
  %v33 = vpack.c.bf16 %v30, %v29
  %v34 = vpack.c.bf16 %v32, %v31
  %v35 = vld [vmem:[%s3] sm:$0xf]
  %vm36 = vcmask 64512
  %v38 = vsel %vm36, %v33, 0
  %v41 = vsel %vm36, %v34, 0
  %vm43 = vcmask 1043456
  %v45 = vsel %vm43, %v35, 0
  %47 = vmatpush.bf16.msra.mxu0 0
  %48 = vmatpush.bf16.msra.mxu0 0
  %49 = vmatpush.bf16.msra.mxu0 0
  %50 = vmatpush.bf16.msra.mxu0 0
  %51 = vmatpush.bf16.msra.mxu0 0
  %52 = vmatpush.bf16.msra.mxu0 0
  %53 = vmatpush.bf16.msra.mxu0 0
  %54 = vmatpush.bf16.msra.mxu0 %v45
  %55 = vmatmul.bf16.gmra.mxu0 %v38
  %v56 = vpop.f32.mrf.mxu0
  %v57 = vadd.f32 0.0, %v56
  %v58 = vpop.f32.mrf.mxu0
  %v59 = vadd.f32 0.0, %v58
  %60 = vmatmul.bf16.gmra.mxu0 %v41
  %v61 = vpop.f32.mrf.mxu0
  %v62 = vadd.f32 0.0, %v61
  %v63 = vpop.f32.mrf.mxu0
  %v64 = vadd.f32 0.0, %v63
  %65 = vdwg.mxu0
  %v68 = vunpack.c.l.b16 %v27
  %v69 = vunpack.c.l.b16 %v28
  %v70 = vpack.c.b16 %v69, %v68
  %vm72 = vcmask 130048
  %v74 = vsel %vm72, %v25, 0
  %v77 = vsel %vm72, %v26, 0
  %79 = vmatpush.bf16.msra.mxu0 0
  %80 = vmatpush.bf16.msra.mxu0 0
  %81 = vmatpush.bf16.msra.mxu0 0
  %82 = vmatpush.bf16.msra.mxu0 0
  %83 = vmatpush.bf16.msra.mxu0 0
  %84 = vmatpush.bf16.msra.mxu0 0
  %85 = vmatpush.bf16.msra.mxu0 0
  %86 = vmatpush.bf16.msra.mxu0 %v70
  %87 = vmatmul.bf16.gmra.mxu0 %v74
  %v88 = vpop.f32.mrf.mxu0
  %v89 = vadd.f32 %v57, %v88
  %v90 = vpop.f32.mrf.mxu0
  %v91 = vadd.f32 %v59, %v90
  %92 = vmatmul.bf16.gmra.mxu0 %v77
  %v93 = vpop.f32.mrf.mxu0
  %v94 = vadd.f32 %v62, %v93
  %v95 = vpop.f32.mrf.mxu0
  %v96 = vadd.f32 %v64, %v95
  %97 = vdwg.mxu0
  %v98 = vld [vmem:[%s4] sm:$0x1]
  %v100 = vperm.slane %v98, 0
  %v102 = vadd.f32 %v89, %v100
  %v103 = vadd.f32 %v91, %v100
  %v104 = vadd.f32 %v94, %v100
  %v105 = vadd.f32 %v96, %v100
  %106 = vst.msk [vmem:[%s5] sm:$0xff] %vm72, %v102
  %107 = vst.msk [vmem:[%s5 + $0x8] sm:$0xff] %vm72, %v103
  %108 = vst.msk [vmem:[%s5 + $0x10] sm:$0xff] %vm72, %v104
  %109 = vst.msk [vmem:[%s5 + $0x18] sm:$0xff] %vm72, %v105
  // Predicated region
  $region22: #{_lambda_.11} parent=0 // pred_check
    _
  $region23: #{_lambda_.11} parent=0 // pred_check_branch
    %111 = sbr.rel (0) target = $region25
  $region24: #{_lambda_.11} parent=0 // pred_region
    _
  $region25: #{_lambda_.11} parent=0 // pred_fallthru
    _
  // Predicated region
  $region26: #{_lambda_.11} parent=0 // pred_check
    _
  $region27: #{_lambda_.11} parent=0 // pred_check_branch
    %113 = sbr.rel (0) target = $region29
  $region28: #{_lambda_.11} parent=0 // pred_region
    _
  $region29: #{_lambda_.11} parent=0 // pred_fallthru
    _

// kernel: _lambda_.10
$region0: #{_lambda_.10}
  #allocation0 [shape = 'u32[]', space=smem, size = 0x4, offset = 0x4, fixed_abs, tag = 'smem constant byte address 0x4 - core index']
  #allocation1 [shape = 'u32[72,128]{1,0:T(1,128)}', space=vmem, size = 0x9000, scoped, tag = 'internal scratch']
  %s0 = inlined_call_operand.vmem [shape: f32[2,1,36,8], index: 0, kind: input, shape index: {}]
  %s1 = inlined_call_operand.vmem [shape: bf16[8,16], index: 1, kind: input, shape index: {}]
  %s2 = inlined_call_operand.vmem [shape: f32[1,16], index: 2, kind: input, shape index: {}]
  %s3 = inlined_call_operand.vmem [shape: f32[3,1,16], index: 3, kind: input, shape index: {}]
  %s4 = inlined_call_operand.vmem [shape: f32[1,16], index: 4, kind: input, shape index: {}]
  %s5 = inlined_call_operand.vmem [shape: bf16[16,8], index: 5, kind: input, shape index: {}]
  %s6 = inlined_call_operand.vmem [shape: f32[1,8], index: 6, kind: input, shape index: {}]
  %s7 = inlined_call_operand.vmem [shape: f32[2,32,8], index: 7, kind: output, shape index: {}]
  %s8 = sld [smem:[#allocation0]]
  $region61: #{_lambda_.10} parent=0
    _
  %s10 = ssub.s32 1, %s8
  %s11 = scalar_select 0, %s10, %s8
  loop: start=0, step=1, limit=4
  $region2: #{_lambda_.10} parent=0 // loop_pre_header
    _
  $region3: #{_lambda_.10} parent=0 // loop_header
    %s13 = sphi 0, %s17
    %p14 = scmp.ge.s32.totalorder %s13, 4
    %s20 = sphi 0, %s32
    %s21 = sphi 0, %s28
    %s22 = sphi 0, %s20
    %s23 = sphi 0, %s21
    %s24 = sphi 0, %s22
    %s25 = sphi 0, %s23
    %s37 = sphi 0, %s39
    %s40 = sphi 0, %s37
    %s41 = sphi 0, %s40
    %s57 = sphi 0, %s41
    %s61 = sphi 0, %s61
    %s63 = sphi 0, %s61
    %s64 = sphi 0, %s63
    %s78 = sphi 0, %s64
    %s82 = sphi 0, %s82
    %s84 = sphi 0, %s82
    %s85 = sphi 0, %s84
    %s99 = sphi 0, %s85
    %s103 = sphi 0, %s103
    %s105 = sphi 0, %s103
    %s106 = sphi 0, %s105
    %s120 = sphi 0, %s106
    %s124 = sphi 0, %s124
    %s126 = sphi 0, %s124
    %s127 = sphi 0, %s126
    %s141 = sphi 0, %s127
    %s145 = sphi 0, %s145
    %s147 = sphi 0, %s145
    %s148 = sphi 0, %s147
    %s162 = sphi 0, %s148
    %s166 = sphi 0, %s166
    %s168 = sphi 0, %s166
    %s169 = sphi 0, %s168
    %s183 = sphi 0, %s169
    %s191 = sphi 0, %s193
    %s194 = sphi 0, %s191
    %s195 = sphi 0, %s194
    %s211 = sphi 0, %s195
  $region4: #{_lambda_.10} parent=0 // loop_header_branch
    %16 = sbr.rel (%p14) target = $region8
  $region5: #{_lambda_.10} parent=0 // loop_body
    %s18 = ssub.s32 %s13, 1
    %s19 = ssub.s32 %s13, 2
    %s26 = sadd.s32 1, %s21
    %p27 = scmp.ge.s32.totalorder %s26, 1
    %s28 = scalar_select %p27, 0, %s26
    %s29 = sadd.s32 1, %s20
    %s30 = scalar_select %p27, %s29, %s20
    %p31 = scmp.ge.s32.totalorder %s30, 2
    %s32 = scalar_select %p31, 0, %s30
    %s33 = ssub.s32 %s20, %s32
    %s34 = ssub.s32 %s21, %s28
    %s35 = sor.u32 %s33, %s34
    %p36 = scmp.eq.s32.totalorder %s35, 0
    %s38 = sadd.s32 %s37, 1
    %s39 = scalar_select %p36, %s37, %s38
    %p42 = pneg %p36
    %p43 = scmp.eq.s32.totalorder %s13, 1
    %p44 = por %p42, %p43
    %p45 = scmp.ne.s32.totalorder %s37, %s40
    %p46 = scmp.eq.s32.totalorder %s13, 0
    %p47 = por %p45, %p46
    %p48 = scmp.ne.s32.totalorder %s37, %s40
    %p49 = scmp.eq.s32.totalorder %s18, 1
    %p50 = por %p48, %p49
    %p51 = scmp.ne.s32.totalorder %s40, %s41
    %p52 = scmp.eq.s32.totalorder %s18, 0
    %p53 = por %p51, %p52
    %p54 = scmp.ne.s32.totalorder %s40, %s41
    %p55 = scmp.eq.s32.totalorder %s19, 1
    %p56 = por %p54, %p55
    %p58 = scmp.ne.s32.totalorder %s41, %s57
    %p59 = scmp.eq.s32.totalorder %s19, 0
    %p60 = por %p58, %p59
    %s62 = sadd.s32 %s61, 1
    %p65 = scmp.eq.s32.totalorder %s13, 1
    %p66 = scmp.ne.s32.totalorder %s61, %s63
    %p67 = scmp.eq.s32.totalorder %s13, 0
    %p68 = por %p66, %p67
    %p69 = scmp.ne.s32.totalorder %s61, %s63
    %p70 = scmp.eq.s32.totalorder %s18, 1
    %p71 = por %p69, %p70
    %p72 = scmp.ne.s32.totalorder %s63, %s64
    %p73 = scmp.eq.s32.totalorder %s18, 0
    %p74 = por %p72, %p73
    %p75 = scmp.ne.s32.totalorder %s63, %s64
    %p76 = scmp.eq.s32.totalorder %s19, 1
    %p77 = por %p75, %p76
    %p79 = scmp.ne.s32.totalorder %s64, %s78
    %p80 = scmp.eq.s32.totalorder %s19, 0
    %p81 = por %p79, %p80
    %s83 = sadd.s32 %s82, 1
    %p86 = scmp.eq.s32.totalorder %s13, 1
    %p87 = scmp.ne.s32.totalorder %s82, %s84
    %p88 = scmp.eq.s32.totalorder %s13, 0
    %p89 = por %p87, %p88
    %p90 = scmp.ne.s32.totalorder %s82, %s84
    %p91 = scmp.eq.s32.totalorder %s18, 1
    %p92 = por %p90, %p91
    %p93 = scmp.ne.s32.totalorder %s84, %s85
    %p94 = scmp.eq.s32.totalorder %s18, 0
    %p95 = por %p93, %p94
    %p96 = scmp.ne.s32.totalorder %s84, %s85
    %p97 = scmp.eq.s32.totalorder %s19, 1
    %p98 = por %p96, %p97
    %p100 = scmp.ne.s32.totalorder %s85, %s99
    %p101 = scmp.eq.s32.totalorder %s19, 0
    %p102 = por %p100, %p101
    %s104 = sadd.s32 %s103, 1
    %p107 = scmp.eq.s32.totalorder %s13, 1
    %p108 = scmp.ne.s32.totalorder %s103, %s105
    %p109 = scmp.eq.s32.totalorder %s13, 0
    %p110 = por %p108, %p109
    %p111 = scmp.ne.s32.totalorder %s103, %s105
    %p112 = scmp.eq.s32.totalorder %s18, 1
    %p113 = por %p111, %p112
    %p114 = scmp.ne.s32.totalorder %s105, %s106
    %p115 = scmp.eq.s32.totalorder %s18, 0
    %p116 = por %p114, %p115
    %p117 = scmp.ne.s32.totalorder %s105, %s106
    %p118 = scmp.eq.s32.totalorder %s19, 1
    %p119 = por %p117, %p118
    %p121 = scmp.ne.s32.totalorder %s106, %s120
    %p122 = scmp.eq.s32.totalorder %s19, 0
    %p123 = por %p121, %p122
    %s125 = sadd.s32 %s124, 1
    %p128 = scmp.eq.s32.totalorder %s13, 1
    %p129 = scmp.ne.s32.totalorder %s124, %s126
    %p130 = scmp.eq.s32.totalorder %s13, 0
    %p131 = por %p129, %p130
    %p132 = scmp.ne.s32.totalorder %s124, %s126
    %p133 = scmp.eq.s32.totalorder %s18, 1
    %p134 = por %p132, %p133
    %p135 = scmp.ne.s32.totalorder %s126, %s127
    %p136 = scmp.eq.s32.totalorder %s18, 0
    %p137 = por %p135, %p136
    %p138 = scmp.ne.s32.totalorder %s126, %s127
    %p139 = scmp.eq.s32.totalorder %s19, 1
    %p140 = por %p138, %p139
    %p142 = scmp.ne.s32.totalorder %s127, %s141
    %p143 = scmp.eq.s32.totalorder %s19, 0
    %p144 = por %p142, %p143
    %s146 = sadd.s32 %s145, 1
    %p149 = scmp.eq.s32.totalorder %s13, 1
    %p150 = scmp.ne.s32.totalorder %s145, %s147
    %p151 = scmp.eq.s32.totalorder %s13, 0
    %p152 = por %p150, %p151
    %p153 = scmp.ne.s32.totalorder %s145, %s147
    %p154 = scmp.eq.s32.totalorder %s18, 1
    %p155 = por %p153, %p154
    %p156 = scmp.ne.s32.totalorder %s147, %s148
    %p157 = scmp.eq.s32.totalorder %s18, 0
    %p158 = por %p156, %p157
    %p159 = scmp.ne.s32.totalorder %s147, %s148
    %p160 = scmp.eq.s32.totalorder %s19, 1
    %p161 = por %p159, %p160
    %p163 = scmp.ne.s32.totalorder %s148, %s162
    %p164 = scmp.eq.s32.totalorder %s19, 0
    %p165 = por %p163, %p164
    %s167 = sadd.s32 %s166, 1
    %p170 = scmp.eq.s32.totalorder %s13, 1
    %p171 = scmp.ne.s32.totalorder %s166, %s168
    %p172 = scmp.eq.s32.totalorder %s13, 0
    %p173 = por %p171, %p172
    %p174 = scmp.ne.s32.totalorder %s166, %s168
    %p175 = scmp.eq.s32.totalorder %s18, 1
    %p176 = por %p174, %p175
    %p177 = scmp.ne.s32.totalorder %s168, %s169
    %p178 = scmp.eq.s32.totalorder %s18, 0
    %p179 = por %p177, %p178
    %p180 = scmp.ne.s32.totalorder %s168, %s169
    %p181 = scmp.eq.s32.totalorder %s19, 1
    %p182 = por %p180, %p181
    %p184 = scmp.ne.s32.totalorder %s169, %s183
    %p185 = scmp.eq.s32.totalorder %s19, 0
    %p186 = por %p184, %p185
    %s187 = ssub.s32 %s20, %s32
    %s188 = ssub.s32 %s21, %s28
    %s189 = sor.u32 %s187, %s188
    %p190 = scmp.eq.s32.totalorder %s189, 0
    %s192 = sadd.s32 %s191, 1
    %s193 = scalar_select %p190, %s191, %s192
    %p196 = pneg %p190
    %p197 = scmp.eq.s32.totalorder %s13, 1
    %p198 = por %p196, %p197
    %p199 = scmp.ne.s32.totalorder %s191, %s194
    %p200 = scmp.eq.s32.totalorder %s13, 0
    %p201 = por %p199, %p200
    %p202 = scmp.ne.s32.totalorder %s191, %s194
    %p203 = scmp.eq.s32.totalorder %s18, 1
    %p204 = por %p202, %p203
    %p205 = scmp.ne.s32.totalorder %s194, %s195
    %p206 = scmp.eq.s32.totalorder %s18, 0
    %p207 = por %p205, %p206
    %p208 = scmp.ne.s32.totalorder %s194, %s195
    %p209 = scmp.eq.s32.totalorder %s19, 1
    %p210 = por %p208, %p209
    %p212 = scmp.ne.s32.totalorder %s195, %s211
    %p213 = scmp.eq.s32.totalorder %s19, 0
    %p214 = por %p212, %p213
    %p215 = scmp.le.s32.totalorder 1, %s13
    %p216 = scmp.lt.s32.totalorder %s13, 3
    %p217 = pnand %p215, %p216
    %p218 = pneg %p217
    // Predicated region
    $region9: #{_lambda_.10} parent=5 // pred_check
      _
    $region10: #{_lambda_.10} parent=5 // pred_check_branch
      %220 = sbr.rel (%p217) target = $region12
    $region11: #{_lambda_.10} parent=5 // pred_region
      %s221 = ssub.s32 %s13, 1
      // Predicated region
      $region13: #{_lambda_.10} parent=11 // pred_check
        %p222 = pneg %p74
      $region14: #{_lambda_.10} parent=11 // pred_check_branch
        %224 = sbr.rel (%p222) target = $region16
      $region15: #{_lambda_.10} parent=11 // pred_region
        _
      $region16: #{_lambda_.10} parent=11 // pred_fallthru
        _
      // Predicated region
      $region17: #{_lambda_.10} parent=11 // pred_check
        %p225 = pneg %p95
      $region18: #{_lambda_.10} parent=11 // pred_check_branch
        %227 = sbr.rel (%p225) target = $region20
      $region19: #{_lambda_.10} parent=11 // pred_region
        _
      $region20: #{_lambda_.10} parent=11 // pred_fallthru
        _
      // Predicated region
      $region21: #{_lambda_.10} parent=11 // pred_check
        %p228 = pneg %p116
      $region22: #{_lambda_.10} parent=11 // pred_check_branch
        %230 = sbr.rel (%p228) target = $region24
      $region23: #{_lambda_.10} parent=11 // pred_region
        _
      $region24: #{_lambda_.10} parent=11 // pred_fallthru
        _
      // Predicated region
      $region25: #{_lambda_.10} parent=11 // pred_check
        %p231 = pneg %p137
      $region26: #{_lambda_.10} parent=11 // pred_check_branch
        %233 = sbr.rel (%p231) target = $region28
      $region27: #{_lambda_.10} parent=11 // pred_region
        _
      $region28: #{_lambda_.10} parent=11 // pred_fallthru
        _
      // Predicated region
      $region29: #{_lambda_.10} parent=11 // pred_check
        %p234 = pneg %p158
      $region30: #{_lambda_.10} parent=11 // pred_check_branch
        %236 = sbr.rel (%p234) target = $region32
      $region31: #{_lambda_.10} parent=11 // pred_region
        _
      $region32: #{_lambda_.10} parent=11 // pred_fallthru
        _
      // Predicated region
      $region33: #{_lambda_.10} parent=11 // pred_check
        %p237 = pneg %p179
      $region34: #{_lambda_.10} parent=11 // pred_check_branch
        %239 = sbr.rel (%p237) target = $region36
      $region35: #{_lambda_.10} parent=11 // pred_region
        _
      $region36: #{_lambda_.10} parent=11 // pred_fallthru
        _
    $region12: #{_lambda_.10} parent=5 // pred_fallthru
      _
    %p240 = scmp.lt.s32.totalorder %s13, 2
    // Predicated region
    $region37: #{_lambda_.10} parent=5 // pred_check
      %p241 = pneg %p240
    $region38: #{_lambda_.10} parent=5 // pred_check_branch
      %243 = sbr.rel (%p241) target = $region40
    $region39: #{_lambda_.10} parent=5 // pred_region
      // Predicated region
      $region41: #{_lambda_.10} parent=39 // pred_check
        %p244 = pneg %p47
      $region42: #{_lambda_.10} parent=39 // pred_check_branch
        %246 = sbr.rel (%p244) target = $region44
      $region43: #{_lambda_.10} parent=39 // pred_region
        %p247 = scmp.lt.s32.totalorder %s20, 1
        %s248 = scalar_select %p247, %s20, 1
        %p249 = scmp.lt.s32.totalorder %s21, 0
        %s250 = scalar_select %p249, %s21, 0
        %s251 = smul.addr %s250, 5
        %s252 = smul.addr %s248, 5
        %s253 = sadd.s32 %s251, %s252
        %s254 = smul.addr %s253, 8
        %s255 = scalar_lea.vmem %s0, %s254
      $region44: #{_lambda_.10} parent=39 // pred_fallthru
        _
    $region40: #{_lambda_.10} parent=5 // pred_fallthru
      _
    %p256 = scmp.le.s32.totalorder 1, %s13
    %p257 = scmp.lt.s32.totalorder %s13, 3
    %p258 = pnand %p256, %p257
    %p259 = pneg %p258
    // Predicated region
    $region45: #{_lambda_.10} parent=5 // pred_check
      _
    $region46: #{_lambda_.10} parent=5 // pred_check_branch
      %261 = sbr.rel (%p258) target = $region48
    $region47: #{_lambda_.10} parent=5 // pred_region
      %s262 = ssub.s32 %s13, 1
      %p263 = scmp.lt.s32.totalorder %s22, 1
      %s264 = scalar_select %p263, %s22, 1
      %p265 = scmp.lt.s32.totalorder %s23, 0
      %s266 = scalar_select %p265, %s23, 0
      %s267 = smul.addr %s266, 5
      %s268 = smul.addr %s264, 5
      %s269 = sadd.s32 %s267, %s268
      %s270 = smul.addr %s269, 8
      %s271 = scalar_lea.vmem %s0, %s270
      %p272 = pneg %p53
      %p273 = pneg %p50
      %p274 = pneg %p74
      %p275 = pneg %p71
      %p276 = pneg %p95
      %p277 = pneg %p92
      %p278 = pneg %p116
      %p279 = pneg %p113
      %p280 = pneg %p137
      %p281 = pneg %p134
      %p282 = pneg %p158
      %p283 = pneg %p155
      %p284 = pneg %p179
      %p285 = pneg %p176
      %p286 = pneg %p207
      %p287 = pneg %p204
      %s288 = smul.u32 4, %s23
      %p289 = scmp.lt.s32.totalorder %s22, 1
      %s290 = scalar_select %p289, %s22, 1
      %p291 = scmp.lt.s32.totalorder %s288, 3
      %s292 = scalar_select %p291, %s288, 3
      %s293 = smul.addr %s290, 4
      %s294 = sadd.s32 %s292, %s293
      %s295 = smul.addr %s294, 8
      %s296 = scalar_lea.vmem %s7, %s295
      %p297 = scmp.lt.s32.totalorder %s22, 1
      %s298 = scalar_select %p297, %s22, 1
      %p299 = scmp.lt.s32.totalorder %s23, 0
      %s300 = scalar_select %p299, %s23, 0
      %s301 = smul.addr %s300, 5
      %s302 = smul.addr %s298, 5
      %s303 = sadd.s32 %s301, %s302
      %s304 = smul.addr %s303, 8
      %s305 = scalar_lea.vmem %s0, %s304
      %s306 = smul.u32 4, %s23
      %p307 = scmp.lt.s32.totalorder %s22, 1
      %s308 = scalar_select %p307, %s22, 1
      %p309 = scmp.lt.s32.totalorder %s306, 3
      %s310 = scalar_select %p309, %s306, 3
      %s311 = smul.addr %s308, 4
      %s312 = sadd.s32 %s310, %s311
      %s313 = smul.addr %s312, 8
      %s314 = scalar_lea.vmem %s7, %s313
      %s315 = smul.u32 4, %s23
      %v317 = vld [vmem:[%s305] sm:$0xff]
      %v318 = vld [vmem:[%s305 + $0x8] sm:$0xff]
      %v319 = vld [vmem:[%s305 + $0x10] sm:$0xff]
      %v320 = vld [vmem:[%s305 + $0x18] sm:$0xff]
      %v321 = vld [vmem:[%s305 + $0x20] sm:$0xf]
      %v322 = vpack.c.bf16 %v318, %v317
      %v323 = vpack.c.bf16 %v320, %v319
      %v324 = vpack.c.bf16 %v321, %v321
      %v325 = vld [vmem:[%s1] sm:$0xf]
      %v326 = vld [vmem:[%s2] sm:$0x1]
      %v328 = vperm.slane %v326, 0
      %vm330 = vcmask 64512
      %v332 = vsel %vm330, %v322, 0
      %v335 = vsel %vm330, %v323, 0
      %v338 = vsel %vm330, %v324, 0
      %vm340 = vcmask 1043456
      %v342 = vsel %vm340, %v325, 0
      %344 = vmatpush.bf16.msra.mxu0 0
      %345 = vmatpush.bf16.msra.mxu0 0
      %346 = vmatpush.bf16.msra.mxu0 0
      %347 = vmatpush.bf16.msra.mxu0 0
      %348 = vmatpush.bf16.msra.mxu0 0
      %349 = vmatpush.bf16.msra.mxu0 0
      %350 = vmatpush.bf16.msra.mxu0 0
      %351 = vmatpush.bf16.msra.mxu0 %v342
      %352 = vmatmul.bf16.gmra.mxu0 %v332
      %v353 = vpop.f32.mrf.mxu0
      %v354 = vadd.f32 %v328, %v353
      %v355 = vpop.f32.mrf.mxu0
      %v356 = vadd.f32 %v328, %v355
      %357 = vmatmul.bf16.gmra.mxu0 %v335
      %v358 = vpop.f32.mrf.mxu0
      %v359 = vadd.f32 %v328, %v358
      %v360 = vpop.f32.mrf.mxu0
      %v361 = vadd.f32 %v328, %v360
      %362 = vmatmul.bf16.gmra.mxu0 %v338
      %v363 = vpop.f32.mrf.mxu0
      %v364 = vadd.f32 %v328, %v363
      %v365 = vpop.f32.mrf.mxu0
      %366 = vdwg.mxu0
      %v367 = vxor.u32 %v354, 2147483648
      %v368 = vxor.u32 %v356, 2147483648
      %v369 = vxor.u32 %v359, 2147483648
      %v370 = vxor.u32 %v361, 2147483648
      %v371 = vxor.u32 %v364, 2147483648
      %v372 = vmul.f32 %v367, 1.442695
      %v373 = vpow.pop %v372
      %v374 = vmul.f32 %v368, 1.442695
      %v375 = vpow.pop %v374
      %v376 = vmul.f32 %v369, 1.442695
      %v377 = vpow.pop %v376
      %v378 = vmul.f32 %v370, 1.442695
      %v379 = vpow.pop %v378
      %v380 = vmul.f32 %v371, 1.442695
      %v381 = vpow.pop %v380
      %v382 = vadd.f32 %v373, 1.0
      %v383 = vadd.f32 %v375, 1.0
      %v384 = vadd.f32 %v377, 1.0
      %v385 = vadd.f32 %v379, 1.0
      %v386 = vadd.f32 %v381, 1.0
      %v387 = vrcp.pop %v382
      %v388 = vmul.f32 %v382, %v387
      %v389 = vsub.f32 1.0, %v388
      %v390 = vmul.f32 %v387, %v389
      %v391 = vadd.f32 %v387, %v390
      %vm392 = vweird.f32 %v382
      %vm393 = vweird.f32 %v387
      %vm394 = vmor %vm392, %vm393
      %v395 = vsel %vm394, %v387, %v391
      %v396 = vand.u32 2147483647, %v382
      %vm397 = vcmp.eq.f32.partialorder %v396, 8.507059e+37
      %v398 = vand.u32 %v382, 2147483648
      %v399 = vor.u32 1.1754944e-38, %v398
      %v400 = vsel %vm397, %v399, %v395
      %v401 = vmul.f32 1.0, %v400
      %v402 = vrcp.pop %v383
      %v403 = vmul.f32 %v383, %v402
      %v404 = vsub.f32 1.0, %v403
      %v405 = vmul.f32 %v402, %v404
      %v406 = vadd.f32 %v402, %v405
      %vm407 = vweird.f32 %v383
      %vm408 = vweird.f32 %v402
      %vm409 = vmor %vm407, %vm408
      %v410 = vsel %vm409, %v402, %v406
      %v411 = vand.u32 2147483647, %v383
      %vm412 = vcmp.eq.f32.partialorder %v411, 8.507059e+37
      %v413 = vand.u32 %v383, 2147483648
      %v414 = vor.u32 1.1754944e-38, %v413
      %v415 = vsel %vm412, %v414, %v410
      %v416 = vmul.f32 1.0, %v415
      %v417 = vrcp.pop %v384
      %v418 = vmul.f32 %v384, %v417
      %v419 = vsub.f32 1.0, %v418
      %v420 = vmul.f32 %v417, %v419
      %v421 = vadd.f32 %v417, %v420
      %vm422 = vweird.f32 %v384
      %vm423 = vweird.f32 %v417
      %vm424 = vmor %vm422, %vm423
      %v425 = vsel %vm424, %v417, %v421
      %v426 = vand.u32 2147483647, %v384
      %vm427 = vcmp.eq.f32.partialorder %v426, 8.507059e+37
      %v428 = vand.u32 %v384, 2147483648
      %v429 = vor.u32 1.1754944e-38, %v428
      %v430 = vsel %vm427, %v429, %v425
      %v431 = vmul.f32 1.0, %v430
      %v432 = vrcp.pop %v385
      %v433 = vmul.f32 %v385, %v432
      %v434 = vsub.f32 1.0, %v433
      %v435 = vmul.f32 %v432, %v434
      %v436 = vadd.f32 %v432, %v435
      %vm437 = vweird.f32 %v385
      %vm438 = vweird.f32 %v432
      %vm439 = vmor %vm437, %vm438
      %v440 = vsel %vm439, %v432, %v436
      %v441 = vand.u32 2147483647, %v385
      %vm442 = vcmp.eq.f32.partialorder %v441, 8.507059e+37
      %v443 = vand.u32 %v385, 2147483648
      %v444 = vor.u32 1.1754944e-38, %v443
      %v445 = vsel %vm442, %v444, %v440
      %v446 = vmul.f32 1.0, %v445
      %v447 = vrcp.pop %v386
      %v448 = vmul.f32 %v386, %v447
      %v449 = vsub.f32 1.0, %v448
      %v450 = vmul.f32 %v447, %v449
      %v451 = vadd.f32 %v447, %v450
      %vm452 = vweird.f32 %v386
      %vm453 = vweird.f32 %v447
      %vm454 = vmor %vm452, %vm453
      %v455 = vsel %vm454, %v447, %v451
      %v456 = vand.u32 2147483647, %v386
      %vm457 = vcmp.eq.f32.partialorder %v456, 8.507059e+37
      %v458 = vand.u32 %v386, 2147483648
      %v459 = vor.u32 1.1754944e-38, %v458
      %v460 = vsel %vm457, %v459, %v455
      %v461 = vmul.f32 1.0, %v460
      %v462 = vmul.f32 %v354, %v401
      %v463 = vmul.f32 %v356, %v416
      %v464 = vmul.f32 %v359, %v431
      %v465 = vmul.f32 %v361, %v446
      %v466 = vmul.f32 %v364, %v461
      %s467 = smul.u32 %s23, 32
      %v468 = vlaneseq
      %v469 = vshrl.u32 %v468, 7
      %v470 = vadd.s32 %v469, 8
      %v471 = vadd.s32 %v469, 16
      %v472 = vadd.s32 %v469, 24
      %v473 = vadd.s32 %v469, 32
      %v474 = vstv %s467
      %v475 = vadd.s32 %v474, %v469
      %v476 = vadd.s32 %v474, %v470
      %v477 = vadd.s32 %v474, %v471
      %v478 = vadd.s32 %v474, %v472
      %v479 = vadd.s32 %v474, %v473
      %vm480 = vcmp.ge.s32.totalorder %v475, 2
      %vm481 = vcmp.ge.s32.totalorder %v476, 2
      %vm482 = vcmp.ge.s32.totalorder %v477, 2
      %vm483 = vcmp.ge.s32.totalorder %v478, 2
      %vm484 = vcmp.ge.s32.totalorder %v479, 2
      %vm485 = vcmp.lt.s32.totalorder %v475, 34
      %vm486 = vcmp.lt.s32.totalorder %v476, 34
      %vm487 = vcmp.lt.s32.totalorder %v477, 34
      %vm488 = vcmp.lt.s32.totalorder %v478, 34
      %vm489 = vcmp.lt.s32.totalorder %v479, 34
      %vm490 = vmand %vm480, %vm485
      %vm491 = vmand %vm481, %vm486
      %vm492 = vmand %vm482, %vm487
      %vm493 = vmand %vm483, %vm488
      %vm494 = vmand %vm484, %vm489
      %v495 = vsel %vm490, 1, 0
      %v496 = vsel %vm491, 1, 0
      %v497 = vsel %vm492, 1, 0
      %v498 = vsel %vm493, 1, 0
      %v499 = vsel %vm494, 1, 0
      %vm500 = vcmp.eq.s32.totalorder %v495, 1
      %vm501 = vcmp.eq.s32.totalorder %v496, 1
      %vm502 = vcmp.eq.s32.totalorder %v497, 1
      %vm503 = vcmp.eq.s32.totalorder %v498, 1
      %vm504 = vcmp.eq.s32.totalorder %v499, 1
      %v505 = vsel %vm500, %v462, 0.0
      %v506 = vsel %vm501, %v463, 0.0
      %v507 = vsel %vm502, %v464, 0.0
      %v508 = vsel %vm503, %v465, 0.0
      %v509 = vsel %vm504, %v466, 0.0
      %v510 = vld [vmem:[%s3] sm:$0x1]
      %v512 = vperm.slane %v510, 0
      %v514 = vmul.f32 %v505, %v512
      %v515 = vmul.f32 %v506, %v512
      %v516 = vmul.f32 %v507, %v512
      %v517 = vmul.f32 %v508, %v512
      %v518 = vadd.f32 %v514, 0.0
      %v519 = vadd.f32 %v515, 0.0
      %v520 = vadd.f32 %v516, 0.0
      %v521 = vadd.f32 %v517, 0.0
      %s522 = scalar_lea.vmem %s3, 1
      %v523 = vld [vmem:[%s522] sm:$0x1]
      %v525 = vperm.slane %v523, 0
      %v527 = vmul.f32 %v505, %v525
      %v528 = vmul.f32 %v506, %v525
      %v529 = vmul.f32 %v507, %v525
      %v530 = vmul.f32 %v508, %v525
      %v531 = vmul.f32 %v509, %v525
      %vm537 = vcmask 1045504
      %v538 = vrot.slane %v527, 2
      %v539 = vrot.slane %v528, 2
      %v540 = vsel %vm537, %v538, %v539
      %v541 = vrot.slane %v529, 2
      %v542 = vsel %vm537, %v539, %v541
      %v543 = vrot.slane %v530, 2
      %v544 = vsel %vm537, %v541, %v543
      %v545 = vrot.slane %v531, 2
      %v546 = vsel %vm537, %v543, %v545
      %v551 = vadd.f32 %v518, %v540
      %v552 = vadd.f32 %v519, %v542
      %v553 = vadd.f32 %v520, %v544
      %v554 = vadd.f32 %v521, %v546
      %s555 = scalar_lea.vmem %s3, 2
      %v556 = vld [vmem:[%s555] sm:$0x1]
      %v558 = vperm.slane %v556, 0
      %v560 = vmul.f32 %v505, %v558
      %v561 = vmul.f32 %v506, %v558
      %v562 = vmul.f32 %v507, %v558
      %v563 = vmul.f32 %v508, %v558
      %v564 = vmul.f32 %v509, %v558
      %v570 = vrot.slane %v560, 4
      %v571 = vrot.slane %v561, 4
      %v572 = vsel %vm340, %v570, %v571
      %v573 = vrot.slane %v562, 4
      %v574 = vsel %vm340, %v571, %v573
      %v575 = vrot.slane %v563, 4
      %v576 = vsel %vm340, %v573, %v575
      %v577 = vrot.slane %v564, 4
      %v578 = vsel %vm340, %v575, %v577
      %v583 = vadd.f32 %v551, %v572
      %v584 = vadd.f32 %v552, %v574
      %v585 = vadd.f32 %v553, %v576
      %v586 = vadd.f32 %v554, %v578
      %v587 = vld [vmem:[%s4] sm:$0x1]
      %v589 = vperm.slane %v587, 0
      %v591 = vadd.f32 %v583, %v589
      %v592 = vadd.f32 %v584, %v589
      %v593 = vadd.f32 %v585, %v589
      %v594 = vadd.f32 %v586, %v589
      %v595 = vxor.u32 %v591, 2147483648
      %v596 = vxor.u32 %v592, 2147483648
      %v597 = vxor.u32 %v593, 2147483648
      %v598 = vxor.u32 %v594, 2147483648
      %v599 = vmul.f32 %v595, 1.442695
      %v600 = vpow.pop %v599
      %v601 = vmul.f32 %v596, 1.442695
      %v602 = vpow.pop %v601
      %v603 = vmul.f32 %v597, 1.442695
      %v604 = vpow.pop %v603
      %v605 = vmul.f32 %v598, 1.442695
      %v606 = vpow.pop %v605
      %v607 = vadd.f32 %v600, 1.0
      %v608 = vadd.f32 %v602, 1.0
      %v609 = vadd.f32 %v604, 1.0
      %v610 = vadd.f32 %v606, 1.0
      %v611 = vrcp.pop %v607
      %v612 = vmul.f32 %v607, %v611
      %v613 = vsub.f32 1.0, %v612
      %v614 = vmul.f32 %v611, %v613
      %v615 = vadd.f32 %v611, %v614
      %vm616 = vweird.f32 %v607
      %vm617 = vweird.f32 %v611
      %vm618 = vmor %vm616, %vm617
      %v619 = vsel %vm618, %v611, %v615
      %v620 = vand.u32 2147483647, %v607
      %vm621 = vcmp.eq.f32.partialorder %v620, 8.507059e+37
      %v622 = vand.u32 %v607, 2147483648
      %v623 = vor.u32 1.1754944e-38, %v622
      %v624 = vsel %vm621, %v623, %v619
      %v625 = vmul.f32 1.0, %v624
      %v626 = vrcp.pop %v608
      %v627 = vmul.f32 %v608, %v626
      %v628 = vsub.f32 1.0, %v627
      %v629 = vmul.f32 %v626, %v628
      %v630 = vadd.f32 %v626, %v629
      %vm631 = vweird.f32 %v608
      %vm632 = vweird.f32 %v626
      %vm633 = vmor %vm631, %vm632
      %v634 = vsel %vm633, %v626, %v630
      %v635 = vand.u32 2147483647, %v608
      %vm636 = vcmp.eq.f32.partialorder %v635, 8.507059e+37
      %v637 = vand.u32 %v608, 2147483648
      %v638 = vor.u32 1.1754944e-38, %v637
      %v639 = vsel %vm636, %v638, %v634
      %v640 = vmul.f32 1.0, %v639
      %v641 = vrcp.pop %v609
      %v642 = vmul.f32 %v609, %v641
      %v643 = vsub.f32 1.0, %v642
      %v644 = vmul.f32 %v641, %v643
      %v645 = vadd.f32 %v641, %v644
      %vm646 = vweird.f32 %v609
      %vm647 = vweird.f32 %v641
      %vm648 = vmor %vm646, %vm647
      %v649 = vsel %vm648, %v641, %v645
      %v650 = vand.u32 2147483647, %v609
      %vm651 = vcmp.eq.f32.partialorder %v650, 8.507059e+37
      %v652 = vand.u32 %v609, 2147483648
      %v653 = vor.u32 1.1754944e-38, %v652
      %v654 = vsel %vm651, %v653, %v649
      %v655 = vmul.f32 1.0, %v654
      %v656 = vrcp.pop %v610
      %v657 = vmul.f32 %v610, %v656
      %v658 = vsub.f32 1.0, %v657
      %v659 = vmul.f32 %v656, %v658
      %v660 = vadd.f32 %v656, %v659
      %vm661 = vweird.f32 %v610
      %vm662 = vweird.f32 %v656
      %vm663 = vmor %vm661, %vm662
      %v664 = vsel %vm663, %v656, %v660
      %v665 = vand.u32 2147483647, %v610
      %vm666 = vcmp.eq.f32.partialorder %v665, 8.507059e+37
      %v667 = vand.u32 %v610, 2147483648
      %v668 = vor.u32 1.1754944e-38, %v667
      %v669 = vsel %vm666, %v668, %v664
      %v670 = vmul.f32 1.0, %v669
      %v671 = vmul.f32 %v591, %v625
      %v672 = vmul.f32 %v592, %v640
      %v673 = vmul.f32 %v593, %v655
      %v674 = vmul.f32 %v594, %v670
      %v675 = vpack.c.bf16 %v672, %v671
      %v676 = vpack.c.bf16 %v674, %v673
      %v677 = vld [vmem:[%s5] sm:$0xf]
      %v678 = vld [vmem:[%s5 + $0x4] sm:$0xf]
      %v679 = vld [vmem:[%s6] sm:$0x1]
      %v681 = vperm.slane %v679, 0
      %v685 = vunpack.c.l.b16 %v677
      %v686 = vunpack.c.l.b16 %v678
      %v687 = vpack.c.b16 %v686, %v685
      %vm689 = vcmask 130048
      %v691 = vsel %vm689, %v675, 0
      %v694 = vsel %vm689, %v676, 0
      %696 = vmatpush.bf16.msra.mxu0 0
      %697 = vmatpush.bf16.msra.mxu0 0
      %698 = vmatpush.bf16.msra.mxu0 0
      %699 = vmatpush.bf16.msra.mxu0 0
      %700 = vmatpush.bf16.msra.mxu0 0
      %701 = vmatpush.bf16.msra.mxu0 0
      %702 = vmatpush.bf16.msra.mxu0 0
      %703 = vmatpush.bf16.msra.mxu0 %v687
      %704 = vmatmul.bf16.gmra.mxu0 %v691
      %v705 = vpop.f32.mrf.mxu0
      %v706 = vadd.f32 %v681, %v705
      %v707 = vpop.f32.mrf.mxu0
      %v708 = vadd.f32 %v681, %v707
      %709 = vmatmul.bf16.gmra.mxu0 %v694
      %v710 = vpop.f32.mrf.mxu0
      %v711 = vadd.f32 %v681, %v710
      %v712 = vpop.f32.mrf.mxu0
      %v713 = vadd.f32 %v681, %v712
      %714 = vdwg.mxu0
      %vm719 = vcmask 1041408
      %v720 = vrot.slane %v706, 6
      %v721 = vrot.slane %v708, 6
      %v722 = vsel %vm719, %v720, %v721
      %v723 = vrot.slane %v711, 6
      %v724 = vsel %vm719, %v721, %v723
      %v725 = vrot.slane %v713, 6
      %v726 = vsel %vm719, %v723, %v725
      %v732 = vadd.f32 %v317, %v720
      %v733 = vadd.f32 %v318, %v722
      %v734 = vadd.f32 %v319, %v724
      %v735 = vadd.f32 %v320, %v726
      %v736 = vadd.f32 %v321, %v725
      %vm737 = vcmask 64514
      %738 = vst.msk [vmem:[%s314 - $0x2] sm:$0xfc] %vm737, %v732
      %739 = vst.msk [vmem:[%s314 + $0x6] sm:$0xff] %vm330, %v733
      %740 = vst.msk [vmem:[%s314 + $0xe] sm:$0xff] %vm330, %v734
      %741 = vst.msk [vmem:[%s314 + $0x16] sm:$0xff] %vm330, %v735
      %vm742 = vcmask 58368
      %743 = vst.msk [vmem:[%s314 + $0x1e] sm:$0x3] %vm742, %v736
      %s744 = smul.u32 4, %s23
      %p745 = scmp.lt.s32.totalorder %s22, 1
      %s746 = scalar_select %p745, %s22, 1
      %p747 = scmp.lt.s32.totalorder %s744, 3
      %s748 = scalar_select %p747, %s744, 3
      %s749 = smul.addr %s746, 4
      %s750 = sadd.s32 %s748, %s749
      %s751 = smul.addr %s750, 8
      %s752 = scalar_lea.vmem %s7, %s751
      // Predicated region
      $region49: #{_lambda_.10} parent=47 // pred_check
        %p753 = pneg %p204
      $region50: #{_lambda_.10} parent=47 // pred_check_branch
        %755 = sbr.rel (%p753) target = $region52
      $region51: #{_lambda_.10} parent=47 // pred_region
        %s756 = smul.u32 4, %s23
      $region52: #{_lambda_.10} parent=47 // pred_fallthru
        _
    $region48: #{_lambda_.10} parent=5 // pred_fallthru
      _
    %p757 = scmp.le.s32.totalorder 2, %s13
    // Predicated region
    $region53: #{_lambda_.10} parent=5 // pred_check
      %p758 = pneg %p757
    $region54: #{_lambda_.10} parent=5 // pred_check_branch
      %760 = sbr.rel (%p758) target = $region56
    $region55: #{_lambda_.10} parent=5 // pred_region
      %s761 = ssub.s32 %s13, 2
      // Predicated region
      $region57: #{_lambda_.10} parent=55 // pred_check
        %p762 = pneg %p210
      $region58: #{_lambda_.10} parent=55 // pred_check_branch
        %764 = sbr.rel (%p762) target = $region60
      $region59: #{_lambda_.10} parent=55 // pred_region
        %s765 = smul.u32 4, %s25
        %p766 = scmp.lt.s32.totalorder %s24, 1
        %s767 = scalar_select %p766, %s24, 1
        %p768 = scmp.lt.s32.totalorder %s765, 3
        %s769 = scalar_select %p768, %s765, 3
        %s770 = smul.addr %s767, 4
        %s771 = sadd.s32 %s769, %s770
        %s772 = smul.addr %s771, 8
        %s773 = scalar_lea.vmem %s7, %s772
      $region60: #{_lambda_.10} parent=55 // pred_fallthru
        _
    $region56: #{_lambda_.10} parent=5 // pred_fallthru
      _
  $region6: #{_lambda_.10} parent=0 // loop_footer
    %s17 = sadd.s32 1, %s13
  $region7: #{_lambda_.10} parent=0 // loop_footer_branch
    %12 = sbr.rel target = $region3
  $region8: #{_lambda_.10} parent=0 // loop_exit
    _

// kernel: _lambda_.8
$region0: #{_lambda_.8}
  #allocation0 [shape = 'u32[]', space=smem, size = 0x4, offset = 0x4, fixed_abs, tag = 'smem constant byte address 0x4 - core index']
  #allocation1 [shape = 'u32[72,128]{1,0:T(1,128)}', space=vmem, size = 0x9000, scoped, tag = 'internal scratch']
  %s0 = inlined_call_operand.vmem [shape: f32[64,8], index: 0, kind: input, shape index: {}]
  %s1 = inlined_call_operand.vmem [shape: f32[64,4], index: 1, kind: input, shape index: {}]
  %s2 = inlined_call_operand.vmem [shape: bf16[8,8], index: 2, kind: input, shape index: {}]
  %s3 = inlined_call_operand.vmem [shape: bf16[4,8], index: 3, kind: input, shape index: {}]
  %s4 = inlined_call_operand.vmem [shape: f32[1,8], index: 4, kind: input, shape index: {}]
  %s5 = inlined_call_operand.vmem [shape: f32[64,8], index: 5, kind: output, shape index: {}]
  %s6 = sld [smem:[#allocation0]]
  $region30: #{_lambda_.8} parent=0
    _
  %s8 = ssub.s32 1, %s6
  %s9 = scalar_select 0, %s8, %s6
  // Predicated region
  $region2: #{_lambda_.8} parent=0 // pred_check
    _
  $region3: #{_lambda_.8} parent=0 // pred_check_branch
    %11 = sbr.rel (0) target = $region5
  $region4: #{_lambda_.8} parent=0 // pred_region
    _
  $region5: #{_lambda_.8} parent=0 // pred_fallthru
    _
  // Predicated region
  $region6: #{_lambda_.8} parent=0 // pred_check
    _
  $region7: #{_lambda_.8} parent=0 // pred_check_branch
    %13 = sbr.rel (0) target = $region9
  $region8: #{_lambda_.8} parent=0 // pred_region
    _
  $region9: #{_lambda_.8} parent=0 // pred_fallthru
    _
  // Predicated region
  $region10: #{_lambda_.8} parent=0 // pred_check
    _
  $region11: #{_lambda_.8} parent=0 // pred_check_branch
    %15 = sbr.rel (0) target = $region13
  $region12: #{_lambda_.8} parent=0 // pred_region
    _
  $region13: #{_lambda_.8} parent=0 // pred_fallthru
    _
  // Predicated region
  $region14: #{_lambda_.8} parent=0 // pred_check
    _
  $region15: #{_lambda_.8} parent=0 // pred_check_branch
    %17 = sbr.rel (0) target = $region17
  $region16: #{_lambda_.8} parent=0 // pred_region
    _
  $region17: #{_lambda_.8} parent=0 // pred_fallthru
    _
  // Predicated region
  $region18: #{_lambda_.8} parent=0 // pred_check
    _
  $region19: #{_lambda_.8} parent=0 // pred_check_branch
    %19 = sbr.rel (0) target = $region21
  $region20: #{_lambda_.8} parent=0 // pred_region
    _
  $region21: #{_lambda_.8} parent=0 // pred_fallthru
    _
  %v21 = vld [vmem:[%s0] sm:$0xff]
  %v22 = vld [vmem:[%s0 + $0x8] sm:$0xff]
  %v23 = vld [vmem:[%s0 + $0x10] sm:$0xff]
  %v24 = vld [vmem:[%s0 + $0x18] sm:$0xff]
  %v25 = vld [vmem:[%s0 + $0x20] sm:$0xff]
  %v26 = vld [vmem:[%s0 + $0x28] sm:$0xff]
  %v27 = vld [vmem:[%s0 + $0x30] sm:$0xff]
  %v28 = vld [vmem:[%s0 + $0x38] sm:$0xff]
  %v29 = vpack.c.bf16 %v22, %v21
  %v30 = vpack.c.bf16 %v24, %v23
  %v31 = vpack.c.bf16 %v26, %v25
  %v32 = vpack.c.bf16 %v28, %v27
  %v33 = vld [vmem:[%s2] sm:$0xf]
  %v34 = vld [vmem:[%s1] sm:$0xff]
  %v35 = vld [vmem:[%s1 + $0x8] sm:$0xff]
  %v36 = vld [vmem:[%s1 + $0x10] sm:$0xff]
  %v37 = vld [vmem:[%s1 + $0x18] sm:$0xff]
  %v38 = vld [vmem:[%s1 + $0x20] sm:$0xff]
  %v39 = vld [vmem:[%s1 + $0x28] sm:$0xff]
  %v40 = vld [vmem:[%s1 + $0x30] sm:$0xff]
  %v41 = vld [vmem:[%s1 + $0x38] sm:$0xff]
  %v42 = vpack.c.bf16 %v35, %v34
  %v43 = vpack.c.bf16 %v37, %v36
  %v44 = vpack.c.bf16 %v39, %v38
  %v45 = vpack.c.bf16 %v41, %v40
  %v46 = vld [vmem:[%s3] sm:$0x3]
  %vm47 = vcmask 31744
  %v49 = vsel %vm47, %v42, 0
  %v52 = vsel %vm47, %v43, 0
  %v55 = vsel %vm47, %v44, 0
  %v58 = vsel %vm47, %v45, 0
  %vm60 = vcmask 1041408
  %v62 = vsel %vm60, %v46, 0
  %64 = vmatpush.bf16.msra.mxu0 0
  %65 = vmatpush.bf16.msra.mxu0 0
  %66 = vmatpush.bf16.msra.mxu0 0
  %67 = vmatpush.bf16.msra.mxu0 0
  %68 = vmatpush.bf16.msra.mxu0 0
  %69 = vmatpush.bf16.msra.mxu0 0
  %70 = vmatpush.bf16.msra.mxu0 0
  %71 = vmatpush.bf16.msra.mxu0 %v62
  %72 = vmatmul.bf16.gmra.mxu0 %v49
  %v73 = vpop.f32.mrf.mxu0
  %v74 = vadd.f32 0.0, %v73
  %v75 = vpop.f32.mrf.mxu0
  %v76 = vadd.f32 0.0, %v75
  %77 = vmatmul.bf16.gmra.mxu0 %v52
  %v78 = vpop.f32.mrf.mxu0
  %v79 = vadd.f32 0.0, %v78
  %v80 = vpop.f32.mrf.mxu0
  %v81 = vadd.f32 0.0, %v80
  %82 = vmatmul.bf16.gmra.mxu0 %v55
  %v83 = vpop.f32.mrf.mxu0
  %v84 = vadd.f32 0.0, %v83
  %v85 = vpop.f32.mrf.mxu0
  %v86 = vadd.f32 0.0, %v85
  %87 = vmatmul.bf16.gmra.mxu0 %v58
  %v88 = vpop.f32.mrf.mxu0
  %v89 = vadd.f32 0.0, %v88
  %v90 = vpop.f32.mrf.mxu0
  %v91 = vadd.f32 0.0, %v90
  %92 = vdwg.mxu0
  %vm93 = vcmask 64512
  %v95 = vsel %vm93, %v29, 0
  %v98 = vsel %vm93, %v30, 0
  %v101 = vsel %vm93, %v31, 0
  %v104 = vsel %vm93, %v32, 0
  %vm106 = vcmask 1043456
  %v108 = vsel %vm106, %v33, 0
  %110 = vmatpush.bf16.msra.mxu0 0
  %111 = vmatpush.bf16.msra.mxu0 0
  %112 = vmatpush.bf16.msra.mxu0 0
  %113 = vmatpush.bf16.msra.mxu0 0
  %114 = vmatpush.bf16.msra.mxu0 0
  %115 = vmatpush.bf16.msra.mxu0 0
  %116 = vmatpush.bf16.msra.mxu0 0
  %117 = vmatpush.bf16.msra.mxu0 %v108
  %118 = vmatmul.bf16.gmra.mxu0 %v95
  %v119 = vpop.f32.mrf.mxu0
  %v120 = vadd.f32 %v74, %v119
  %v121 = vpop.f32.mrf.mxu0
  %v122 = vadd.f32 %v76, %v121
  %123 = vmatmul.bf16.gmra.mxu0 %v98
  %v124 = vpop.f32.mrf.mxu0
  %v125 = vadd.f32 %v79, %v124
  %v126 = vpop.f32.mrf.mxu0
  %v127 = vadd.f32 %v81, %v126
  %128 = vmatmul.bf16.gmra.mxu0 %v101
  %v129 = vpop.f32.mrf.mxu0
  %v130 = vadd.f32 %v84, %v129
  %v131 = vpop.f32.mrf.mxu0
  %v132 = vadd.f32 %v86, %v131
  %133 = vmatmul.bf16.gmra.mxu0 %v104
  %v134 = vpop.f32.mrf.mxu0
  %v135 = vadd.f32 %v89, %v134
  %v136 = vpop.f32.mrf.mxu0
  %v137 = vadd.f32 %v91, %v136
  %138 = vdwg.mxu0
  %v139 = vld [vmem:[%s4] sm:$0x1]
  %v141 = vperm.slane %v139, 0
  %v143 = vadd.f32 %v120, %v141
  %v144 = vadd.f32 %v122, %v141
  %v145 = vadd.f32 %v125, %v141
  %v146 = vadd.f32 %v127, %v141
  %v147 = vadd.f32 %v130, %v141
  %v148 = vadd.f32 %v132, %v141
  %v149 = vadd.f32 %v135, %v141
  %v150 = vadd.f32 %v137, %v141
  %151 = vst.msk [vmem:[%s5] sm:$0xff] %vm93, %v143
  %152 = vst.msk [vmem:[%s5 + $0x8] sm:$0xff] %vm93, %v144
  %153 = vst.msk [vmem:[%s5 + $0x10] sm:$0xff] %vm93, %v145
  %154 = vst.msk [vmem:[%s5 + $0x18] sm:$0xff] %vm93, %v146
  %155 = vst.msk [vmem:[%s5 + $0x20] sm:$0xff] %vm93, %v147
  %156 = vst.msk [vmem:[%s5 + $0x28] sm:$0xff] %vm93, %v148
  %157 = vst.msk [vmem:[%s5 + $0x30] sm:$0xff] %vm93, %v149
  %158 = vst.msk [vmem:[%s5 + $0x38] sm:$0xff] %vm93, %v150
  // Predicated region
  $region22: #{_lambda_.8} parent=0 // pred_check
    _
  $region23: #{_lambda_.8} parent=0 // pred_check_branch
    %160 = sbr.rel (0) target = $region25
  $region24: #{_lambda_.8} parent=0 // pred_region
    _
  $region25: #{_lambda_.8} parent=0 // pred_fallthru
    _
  // Predicated region
  $region26: #{_lambda_.8} parent=0 // pred_check
    _
  $region27: #{_lambda_.8} parent=0 // pred_check_branch
    %162 = sbr.rel (0) target = $region29
  $region28: #{_lambda_.8} parent=0 // pred_region
    _
  $region29: #{_lambda_.8} parent=0 // pred_fallthru
    _

// kernel: _lambda_.9
$region0: #{_lambda_.9}
  #allocation0 [shape = 'u32[]', space=smem, size = 0x4, offset = 0x4, fixed_abs, tag = 'smem constant byte address 0x4 - core index']
  #allocation1 [shape = 'u32[72,128]{1,0:T(1,128)}', space=vmem, size = 0x9000, scoped, tag = 'internal scratch']
  %s0 = inlined_call_operand.vmem [shape: f32[2,1,34,8], index: 0, kind: input, shape index: {}]
  %s1 = inlined_call_operand.vmem [shape: bf16[8,16], index: 1, kind: input, shape index: {}]
  %s2 = inlined_call_operand.vmem [shape: f32[1,16], index: 2, kind: input, shape index: {}]
  %s3 = inlined_call_operand.vmem [shape: f32[3,1,16], index: 3, kind: input, shape index: {}]
  %s4 = inlined_call_operand.vmem [shape: f32[1,16], index: 4, kind: input, shape index: {}]
  %s5 = inlined_call_operand.vmem [shape: bf16[16,8], index: 5, kind: input, shape index: {}]
  %s6 = inlined_call_operand.vmem [shape: f32[1,8], index: 6, kind: input, shape index: {}]
  %s7 = inlined_call_operand.vmem [shape: f32[2,32,8], index: 7, kind: output, shape index: {}]
  %s8 = sld [smem:[#allocation0]]
  $region61: #{_lambda_.9} parent=0
    _
  %s10 = ssub.s32 1, %s8
  %s11 = scalar_select 0, %s10, %s8
  loop: start=0, step=1, limit=4
  $region2: #{_lambda_.9} parent=0 // loop_pre_header
    _
  $region3: #{_lambda_.9} parent=0 // loop_header
    %s13 = sphi 0, %s17
    %p14 = scmp.ge.s32.totalorder %s13, 4
    %s20 = sphi 0, %s32
    %s21 = sphi 0, %s28
    %s22 = sphi 0, %s20
    %s23 = sphi 0, %s21
    %s24 = sphi 0, %s22
    %s25 = sphi 0, %s23
    %s37 = sphi 0, %s39
    %s40 = sphi 0, %s37
    %s41 = sphi 0, %s40
    %s57 = sphi 0, %s41
    %s61 = sphi 0, %s61
    %s63 = sphi 0, %s61
    %s64 = sphi 0, %s63
    %s78 = sphi 0, %s64
    %s82 = sphi 0, %s82
    %s84 = sphi 0, %s82
    %s85 = sphi 0, %s84
    %s99 = sphi 0, %s85
    %s103 = sphi 0, %s103
    %s105 = sphi 0, %s103
    %s106 = sphi 0, %s105
    %s120 = sphi 0, %s106
    %s124 = sphi 0, %s124
    %s126 = sphi 0, %s124
    %s127 = sphi 0, %s126
    %s141 = sphi 0, %s127
    %s145 = sphi 0, %s145
    %s147 = sphi 0, %s145
    %s148 = sphi 0, %s147
    %s162 = sphi 0, %s148
    %s166 = sphi 0, %s166
    %s168 = sphi 0, %s166
    %s169 = sphi 0, %s168
    %s183 = sphi 0, %s169
    %s191 = sphi 0, %s193
    %s194 = sphi 0, %s191
    %s195 = sphi 0, %s194
    %s211 = sphi 0, %s195
  $region4: #{_lambda_.9} parent=0 // loop_header_branch
    %16 = sbr.rel (%p14) target = $region8
  $region5: #{_lambda_.9} parent=0 // loop_body
    %s18 = ssub.s32 %s13, 1
    %s19 = ssub.s32 %s13, 2
    %s26 = sadd.s32 1, %s21
    %p27 = scmp.ge.s32.totalorder %s26, 1
    %s28 = scalar_select %p27, 0, %s26
    %s29 = sadd.s32 1, %s20
    %s30 = scalar_select %p27, %s29, %s20
    %p31 = scmp.ge.s32.totalorder %s30, 2
    %s32 = scalar_select %p31, 0, %s30
    %s33 = ssub.s32 %s20, %s32
    %s34 = ssub.s32 %s21, %s28
    %s35 = sor.u32 %s33, %s34
    %p36 = scmp.eq.s32.totalorder %s35, 0
    %s38 = sadd.s32 %s37, 1
    %s39 = scalar_select %p36, %s37, %s38
    %p42 = pneg %p36
    %p43 = scmp.eq.s32.totalorder %s13, 1
    %p44 = por %p42, %p43
    %p45 = scmp.ne.s32.totalorder %s37, %s40
    %p46 = scmp.eq.s32.totalorder %s13, 0
    %p47 = por %p45, %p46
    %p48 = scmp.ne.s32.totalorder %s37, %s40
    %p49 = scmp.eq.s32.totalorder %s18, 1
    %p50 = por %p48, %p49
    %p51 = scmp.ne.s32.totalorder %s40, %s41
    %p52 = scmp.eq.s32.totalorder %s18, 0
    %p53 = por %p51, %p52
    %p54 = scmp.ne.s32.totalorder %s40, %s41
    %p55 = scmp.eq.s32.totalorder %s19, 1
    %p56 = por %p54, %p55
    %p58 = scmp.ne.s32.totalorder %s41, %s57
    %p59 = scmp.eq.s32.totalorder %s19, 0
    %p60 = por %p58, %p59
    %s62 = sadd.s32 %s61, 1
    %p65 = scmp.eq.s32.totalorder %s13, 1
    %p66 = scmp.ne.s32.totalorder %s61, %s63
    %p67 = scmp.eq.s32.totalorder %s13, 0
    %p68 = por %p66, %p67
    %p69 = scmp.ne.s32.totalorder %s61, %s63
    %p70 = scmp.eq.s32.totalorder %s18, 1
    %p71 = por %p69, %p70
    %p72 = scmp.ne.s32.totalorder %s63, %s64
    %p73 = scmp.eq.s32.totalorder %s18, 0
    %p74 = por %p72, %p73
    %p75 = scmp.ne.s32.totalorder %s63, %s64
    %p76 = scmp.eq.s32.totalorder %s19, 1
    %p77 = por %p75, %p76
    %p79 = scmp.ne.s32.totalorder %s64, %s78
    %p80 = scmp.eq.s32.totalorder %s19, 0
    %p81 = por %p79, %p80
    %s83 = sadd.s32 %s82, 1
    %p86 = scmp.eq.s32.totalorder %s13, 1
    %p87 = scmp.ne.s32.totalorder %s82, %s84
    %p88 = scmp.eq.s32.totalorder %s13, 0
    %p89 = por %p87, %p88
    %p90 = scmp.ne.s32.totalorder %s82, %s84
    %p91 = scmp.eq.s32.totalorder %s18, 1
    %p92 = por %p90, %p91
    %p93 = scmp.ne.s32.totalorder %s84, %s85
    %p94 = scmp.eq.s32.totalorder %s18, 0
    %p95 = por %p93, %p94
    %p96 = scmp.ne.s32.totalorder %s84, %s85
    %p97 = scmp.eq.s32.totalorder %s19, 1
    %p98 = por %p96, %p97
    %p100 = scmp.ne.s32.totalorder %s85, %s99
    %p101 = scmp.eq.s32.totalorder %s19, 0
    %p102 = por %p100, %p101
    %s104 = sadd.s32 %s103, 1
    %p107 = scmp.eq.s32.totalorder %s13, 1
    %p108 = scmp.ne.s32.totalorder %s103, %s105
    %p109 = scmp.eq.s32.totalorder %s13, 0
    %p110 = por %p108, %p109
    %p111 = scmp.ne.s32.totalorder %s103, %s105
    %p112 = scmp.eq.s32.totalorder %s18, 1
    %p113 = por %p111, %p112
    %p114 = scmp.ne.s32.totalorder %s105, %s106
    %p115 = scmp.eq.s32.totalorder %s18, 0
    %p116 = por %p114, %p115
    %p117 = scmp.ne.s32.totalorder %s105, %s106
    %p118 = scmp.eq.s32.totalorder %s19, 1
    %p119 = por %p117, %p118
    %p121 = scmp.ne.s32.totalorder %s106, %s120
    %p122 = scmp.eq.s32.totalorder %s19, 0
    %p123 = por %p121, %p122
    %s125 = sadd.s32 %s124, 1
    %p128 = scmp.eq.s32.totalorder %s13, 1
    %p129 = scmp.ne.s32.totalorder %s124, %s126
    %p130 = scmp.eq.s32.totalorder %s13, 0
    %p131 = por %p129, %p130
    %p132 = scmp.ne.s32.totalorder %s124, %s126
    %p133 = scmp.eq.s32.totalorder %s18, 1
    %p134 = por %p132, %p133
    %p135 = scmp.ne.s32.totalorder %s126, %s127
    %p136 = scmp.eq.s32.totalorder %s18, 0
    %p137 = por %p135, %p136
    %p138 = scmp.ne.s32.totalorder %s126, %s127
    %p139 = scmp.eq.s32.totalorder %s19, 1
    %p140 = por %p138, %p139
    %p142 = scmp.ne.s32.totalorder %s127, %s141
    %p143 = scmp.eq.s32.totalorder %s19, 0
    %p144 = por %p142, %p143
    %s146 = sadd.s32 %s145, 1
    %p149 = scmp.eq.s32.totalorder %s13, 1
    %p150 = scmp.ne.s32.totalorder %s145, %s147
    %p151 = scmp.eq.s32.totalorder %s13, 0
    %p152 = por %p150, %p151
    %p153 = scmp.ne.s32.totalorder %s145, %s147
    %p154 = scmp.eq.s32.totalorder %s18, 1
    %p155 = por %p153, %p154
    %p156 = scmp.ne.s32.totalorder %s147, %s148
    %p157 = scmp.eq.s32.totalorder %s18, 0
    %p158 = por %p156, %p157
    %p159 = scmp.ne.s32.totalorder %s147, %s148
    %p160 = scmp.eq.s32.totalorder %s19, 1
    %p161 = por %p159, %p160
    %p163 = scmp.ne.s32.totalorder %s148, %s162
    %p164 = scmp.eq.s32.totalorder %s19, 0
    %p165 = por %p163, %p164
    %s167 = sadd.s32 %s166, 1
    %p170 = scmp.eq.s32.totalorder %s13, 1
    %p171 = scmp.ne.s32.totalorder %s166, %s168
    %p172 = scmp.eq.s32.totalorder %s13, 0
    %p173 = por %p171, %p172
    %p174 = scmp.ne.s32.totalorder %s166, %s168
    %p175 = scmp.eq.s32.totalorder %s18, 1
    %p176 = por %p174, %p175
    %p177 = scmp.ne.s32.totalorder %s168, %s169
    %p178 = scmp.eq.s32.totalorder %s18, 0
    %p179 = por %p177, %p178
    %p180 = scmp.ne.s32.totalorder %s168, %s169
    %p181 = scmp.eq.s32.totalorder %s19, 1
    %p182 = por %p180, %p181
    %p184 = scmp.ne.s32.totalorder %s169, %s183
    %p185 = scmp.eq.s32.totalorder %s19, 0
    %p186 = por %p184, %p185
    %s187 = ssub.s32 %s20, %s32
    %s188 = ssub.s32 %s21, %s28
    %s189 = sor.u32 %s187, %s188
    %p190 = scmp.eq.s32.totalorder %s189, 0
    %s192 = sadd.s32 %s191, 1
    %s193 = scalar_select %p190, %s191, %s192
    %p196 = pneg %p190
    %p197 = scmp.eq.s32.totalorder %s13, 1
    %p198 = por %p196, %p197
    %p199 = scmp.ne.s32.totalorder %s191, %s194
    %p200 = scmp.eq.s32.totalorder %s13, 0
    %p201 = por %p199, %p200
    %p202 = scmp.ne.s32.totalorder %s191, %s194
    %p203 = scmp.eq.s32.totalorder %s18, 1
    %p204 = por %p202, %p203
    %p205 = scmp.ne.s32.totalorder %s194, %s195
    %p206 = scmp.eq.s32.totalorder %s18, 0
    %p207 = por %p205, %p206
    %p208 = scmp.ne.s32.totalorder %s194, %s195
    %p209 = scmp.eq.s32.totalorder %s19, 1
    %p210 = por %p208, %p209
    %p212 = scmp.ne.s32.totalorder %s195, %s211
    %p213 = scmp.eq.s32.totalorder %s19, 0
    %p214 = por %p212, %p213
    %p215 = scmp.le.s32.totalorder 1, %s13
    %p216 = scmp.lt.s32.totalorder %s13, 3
    %p217 = pnand %p215, %p216
    %p218 = pneg %p217
    // Predicated region
    $region9: #{_lambda_.9} parent=5 // pred_check
      _
    $region10: #{_lambda_.9} parent=5 // pred_check_branch
      %220 = sbr.rel (%p217) target = $region12
    $region11: #{_lambda_.9} parent=5 // pred_region
      %s221 = ssub.s32 %s13, 1
      // Predicated region
      $region13: #{_lambda_.9} parent=11 // pred_check
        %p222 = pneg %p74
      $region14: #{_lambda_.9} parent=11 // pred_check_branch
        %224 = sbr.rel (%p222) target = $region16
      $region15: #{_lambda_.9} parent=11 // pred_region
        _
      $region16: #{_lambda_.9} parent=11 // pred_fallthru
        _
      // Predicated region
      $region17: #{_lambda_.9} parent=11 // pred_check
        %p225 = pneg %p95
      $region18: #{_lambda_.9} parent=11 // pred_check_branch
        %227 = sbr.rel (%p225) target = $region20
      $region19: #{_lambda_.9} parent=11 // pred_region
        _
      $region20: #{_lambda_.9} parent=11 // pred_fallthru
        _
      // Predicated region
      $region21: #{_lambda_.9} parent=11 // pred_check
        %p228 = pneg %p116
      $region22: #{_lambda_.9} parent=11 // pred_check_branch
        %230 = sbr.rel (%p228) target = $region24
      $region23: #{_lambda_.9} parent=11 // pred_region
        _
      $region24: #{_lambda_.9} parent=11 // pred_fallthru
        _
      // Predicated region
      $region25: #{_lambda_.9} parent=11 // pred_check
        %p231 = pneg %p137
      $region26: #{_lambda_.9} parent=11 // pred_check_branch
        %233 = sbr.rel (%p231) target = $region28
      $region27: #{_lambda_.9} parent=11 // pred_region
        _
      $region28: #{_lambda_.9} parent=11 // pred_fallthru
        _
      // Predicated region
      $region29: #{_lambda_.9} parent=11 // pred_check
        %p234 = pneg %p158
      $region30: #{_lambda_.9} parent=11 // pred_check_branch
        %236 = sbr.rel (%p234) target = $region32
      $region31: #{_lambda_.9} parent=11 // pred_region
        _
      $region32: #{_lambda_.9} parent=11 // pred_fallthru
        _
      // Predicated region
      $region33: #{_lambda_.9} parent=11 // pred_check
        %p237 = pneg %p179
      $region34: #{_lambda_.9} parent=11 // pred_check_branch
        %239 = sbr.rel (%p237) target = $region36
      $region35: #{_lambda_.9} parent=11 // pred_region
        _
      $region36: #{_lambda_.9} parent=11 // pred_fallthru
        _
    $region12: #{_lambda_.9} parent=5 // pred_fallthru
      _
    %p240 = scmp.lt.s32.totalorder %s13, 2
    // Predicated region
    $region37: #{_lambda_.9} parent=5 // pred_check
      %p241 = pneg %p240
    $region38: #{_lambda_.9} parent=5 // pred_check_branch
      %243 = sbr.rel (%p241) target = $region40
    $region39: #{_lambda_.9} parent=5 // pred_region
      // Predicated region
      $region41: #{_lambda_.9} parent=39 // pred_check
        %p244 = pneg %p47
      $region42: #{_lambda_.9} parent=39 // pred_check_branch
        %246 = sbr.rel (%p244) target = $region44
      $region43: #{_lambda_.9} parent=39 // pred_region
        %p247 = scmp.lt.s32.totalorder %s20, 1
        %s248 = scalar_select %p247, %s20, 1
        %p249 = scmp.lt.s32.totalorder %s21, 0
        %s250 = scalar_select %p249, %s21, 0
        %s251 = smul.addr %s250, 5
        %s252 = smul.addr %s248, 5
        %s253 = sadd.s32 %s251, %s252
        %s254 = smul.addr %s253, 8
        %s255 = scalar_lea.vmem %s0, %s254
      $region44: #{_lambda_.9} parent=39 // pred_fallthru
        _
    $region40: #{_lambda_.9} parent=5 // pred_fallthru
      _
    %p256 = scmp.le.s32.totalorder 1, %s13
    %p257 = scmp.lt.s32.totalorder %s13, 3
    %p258 = pnand %p256, %p257
    %p259 = pneg %p258
    // Predicated region
    $region45: #{_lambda_.9} parent=5 // pred_check
      _
    $region46: #{_lambda_.9} parent=5 // pred_check_branch
      %261 = sbr.rel (%p258) target = $region48
    $region47: #{_lambda_.9} parent=5 // pred_region
      %s262 = ssub.s32 %s13, 1
      %p263 = scmp.lt.s32.totalorder %s22, 1
      %s264 = scalar_select %p263, %s22, 1
      %p265 = scmp.lt.s32.totalorder %s23, 0
      %s266 = scalar_select %p265, %s23, 0
      %s267 = smul.addr %s266, 5
      %s268 = smul.addr %s264, 5
      %s269 = sadd.s32 %s267, %s268
      %s270 = smul.addr %s269, 8
      %s271 = scalar_lea.vmem %s0, %s270
      %p272 = pneg %p53
      %p273 = pneg %p50
      %p274 = pneg %p74
      %p275 = pneg %p71
      %p276 = pneg %p95
      %p277 = pneg %p92
      %p278 = pneg %p116
      %p279 = pneg %p113
      %p280 = pneg %p137
      %p281 = pneg %p134
      %p282 = pneg %p158
      %p283 = pneg %p155
      %p284 = pneg %p179
      %p285 = pneg %p176
      %p286 = pneg %p207
      %p287 = pneg %p204
      %s288 = smul.u32 4, %s23
      %p289 = scmp.lt.s32.totalorder %s22, 1
      %s290 = scalar_select %p289, %s22, 1
      %p291 = scmp.lt.s32.totalorder %s288, 3
      %s292 = scalar_select %p291, %s288, 3
      %s293 = smul.addr %s290, 4
      %s294 = sadd.s32 %s292, %s293
      %s295 = smul.addr %s294, 8
      %s296 = scalar_lea.vmem %s7, %s295
      %p297 = scmp.lt.s32.totalorder %s22, 1
      %s298 = scalar_select %p297, %s22, 1
      %p299 = scmp.lt.s32.totalorder %s23, 0
      %s300 = scalar_select %p299, %s23, 0
      %s301 = smul.addr %s300, 5
      %s302 = smul.addr %s298, 5
      %s303 = sadd.s32 %s301, %s302
      %s304 = smul.addr %s303, 8
      %s305 = scalar_lea.vmem %s0, %s304
      %s306 = smul.u32 4, %s23
      %p307 = scmp.lt.s32.totalorder %s22, 1
      %s308 = scalar_select %p307, %s22, 1
      %p309 = scmp.lt.s32.totalorder %s306, 3
      %s310 = scalar_select %p309, %s306, 3
      %s311 = smul.addr %s308, 4
      %s312 = sadd.s32 %s310, %s311
      %s313 = smul.addr %s312, 8
      %s314 = scalar_lea.vmem %s7, %s313
      %s315 = smul.u32 4, %s23
      %v317 = vld [vmem:[%s305] sm:$0xff]
      %v318 = vld [vmem:[%s305 + $0x8] sm:$0xff]
      %v319 = vld [vmem:[%s305 + $0x10] sm:$0xff]
      %v320 = vld [vmem:[%s305 + $0x18] sm:$0xff]
      %v321 = vld [vmem:[%s305 + $0x20] sm:$0x3]
      %v322 = vpack.c.bf16 %v318, %v317
      %v323 = vpack.c.bf16 %v320, %v319
      %v324 = vpack.c.bf16 %v321, %v321
      %v325 = vld [vmem:[%s1] sm:$0xf]
      %v326 = vld [vmem:[%s2] sm:$0x1]
      %v328 = vperm.slane %v326, 0
      %vm330 = vcmask 64512
      %v332 = vsel %vm330, %v322, 0
      %v335 = vsel %vm330, %v323, 0
      %v338 = vsel %vm330, %v324, 0
      %vm340 = vcmask 1043456
      %v342 = vsel %vm340, %v325, 0
      %344 = vmatpush.bf16.msra.mxu0 0
      %345 = vmatpush.bf16.msra.mxu0 0
      %346 = vmatpush.bf16.msra.mxu0 0
      %347 = vmatpush.bf16.msra.mxu0 0
      %348 = vmatpush.bf16.msra.mxu0 0
      %349 = vmatpush.bf16.msra.mxu0 0
      %350 = vmatpush.bf16.msra.mxu0 0
      %351 = vmatpush.bf16.msra.mxu0 %v342
      %352 = vmatmul.bf16.gmra.mxu0 %v332
      %v353 = vpop.f32.mrf.mxu0
      %v354 = vadd.f32 %v328, %v353
      %v355 = vpop.f32.mrf.mxu0
      %v356 = vadd.f32 %v328, %v355
      %357 = vmatmul.bf16.gmra.mxu0 %v335
      %v358 = vpop.f32.mrf.mxu0
      %v359 = vadd.f32 %v328, %v358
      %v360 = vpop.f32.mrf.mxu0
      %v361 = vadd.f32 %v328, %v360
      %362 = vmatmul.bf16.gmra.mxu0 %v338
      %v363 = vpop.f32.mrf.mxu0
      %v364 = vadd.f32 %v328, %v363
      %v365 = vpop.f32.mrf.mxu0
      %366 = vdwg.mxu0
      %v367 = vxor.u32 %v354, 2147483648
      %v368 = vxor.u32 %v356, 2147483648
      %v369 = vxor.u32 %v359, 2147483648
      %v370 = vxor.u32 %v361, 2147483648
      %v371 = vxor.u32 %v364, 2147483648
      %v372 = vmul.f32 %v367, 1.442695
      %v373 = vpow.pop %v372
      %v374 = vmul.f32 %v368, 1.442695
      %v375 = vpow.pop %v374
      %v376 = vmul.f32 %v369, 1.442695
      %v377 = vpow.pop %v376
      %v378 = vmul.f32 %v370, 1.442695
      %v379 = vpow.pop %v378
      %v380 = vmul.f32 %v371, 1.442695
      %v381 = vpow.pop %v380
      %v382 = vadd.f32 %v373, 1.0
      %v383 = vadd.f32 %v375, 1.0
      %v384 = vadd.f32 %v377, 1.0
      %v385 = vadd.f32 %v379, 1.0
      %v386 = vadd.f32 %v381, 1.0
      %v387 = vrcp.pop %v382
      %v388 = vmul.f32 %v382, %v387
      %v389 = vsub.f32 1.0, %v388
      %v390 = vmul.f32 %v387, %v389
      %v391 = vadd.f32 %v387, %v390
      %vm392 = vweird.f32 %v382
      %vm393 = vweird.f32 %v387
      %vm394 = vmor %vm392, %vm393
      %v395 = vsel %vm394, %v387, %v391
      %v396 = vand.u32 2147483647, %v382
      %vm397 = vcmp.eq.f32.partialorder %v396, 8.507059e+37
      %v398 = vand.u32 %v382, 2147483648
      %v399 = vor.u32 1.1754944e-38, %v398
      %v400 = vsel %vm397, %v399, %v395
      %v401 = vmul.f32 1.0, %v400
      %v402 = vrcp.pop %v383
      %v403 = vmul.f32 %v383, %v402
      %v404 = vsub.f32 1.0, %v403
      %v405 = vmul.f32 %v402, %v404
      %v406 = vadd.f32 %v402, %v405
      %vm407 = vweird.f32 %v383
      %vm408 = vweird.f32 %v402
      %vm409 = vmor %vm407, %vm408
      %v410 = vsel %vm409, %v402, %v406
      %v411 = vand.u32 2147483647, %v383
      %vm412 = vcmp.eq.f32.partialorder %v411, 8.507059e+37
      %v413 = vand.u32 %v383, 2147483648
      %v414 = vor.u32 1.1754944e-38, %v413
      %v415 = vsel %vm412, %v414, %v410
      %v416 = vmul.f32 1.0, %v415
      %v417 = vrcp.pop %v384
      %v418 = vmul.f32 %v384, %v417
      %v419 = vsub.f32 1.0, %v418
      %v420 = vmul.f32 %v417, %v419
      %v421 = vadd.f32 %v417, %v420
      %vm422 = vweird.f32 %v384
      %vm423 = vweird.f32 %v417
      %vm424 = vmor %vm422, %vm423
      %v425 = vsel %vm424, %v417, %v421
      %v426 = vand.u32 2147483647, %v384
      %vm427 = vcmp.eq.f32.partialorder %v426, 8.507059e+37
      %v428 = vand.u32 %v384, 2147483648
      %v429 = vor.u32 1.1754944e-38, %v428
      %v430 = vsel %vm427, %v429, %v425
      %v431 = vmul.f32 1.0, %v430
      %v432 = vrcp.pop %v385
      %v433 = vmul.f32 %v385, %v432
      %v434 = vsub.f32 1.0, %v433
      %v435 = vmul.f32 %v432, %v434
      %v436 = vadd.f32 %v432, %v435
      %vm437 = vweird.f32 %v385
      %vm438 = vweird.f32 %v432
      %vm439 = vmor %vm437, %vm438
      %v440 = vsel %vm439, %v432, %v436
      %v441 = vand.u32 2147483647, %v385
      %vm442 = vcmp.eq.f32.partialorder %v441, 8.507059e+37
      %v443 = vand.u32 %v385, 2147483648
      %v444 = vor.u32 1.1754944e-38, %v443
      %v445 = vsel %vm442, %v444, %v440
      %v446 = vmul.f32 1.0, %v445
      %v447 = vrcp.pop %v386
      %v448 = vmul.f32 %v386, %v447
      %v449 = vsub.f32 1.0, %v448
      %v450 = vmul.f32 %v447, %v449
      %v451 = vadd.f32 %v447, %v450
      %vm452 = vweird.f32 %v386
      %vm453 = vweird.f32 %v447
      %vm454 = vmor %vm452, %vm453
      %v455 = vsel %vm454, %v447, %v451
      %v456 = vand.u32 2147483647, %v386
      %vm457 = vcmp.eq.f32.partialorder %v456, 8.507059e+37
      %v458 = vand.u32 %v386, 2147483648
      %v459 = vor.u32 1.1754944e-38, %v458
      %v460 = vsel %vm457, %v459, %v455
      %v461 = vmul.f32 1.0, %v460
      %v462 = vmul.f32 %v354, %v401
      %v463 = vmul.f32 %v356, %v416
      %v464 = vmul.f32 %v359, %v431
      %v465 = vmul.f32 %v361, %v446
      %v466 = vmul.f32 %v364, %v461
      %s467 = smul.u32 %s23, 32
      %v468 = vlaneseq
      %v469 = vshrl.u32 %v468, 7
      %v470 = vadd.s32 %v469, 8
      %v471 = vadd.s32 %v469, 16
      %v472 = vadd.s32 %v469, 24
      %v473 = vadd.s32 %v469, 32
      %v474 = vstv %s467
      %v475 = vadd.s32 %v474, %v469
      %v476 = vadd.s32 %v474, %v470
      %v477 = vadd.s32 %v474, %v471
      %v478 = vadd.s32 %v474, %v472
      %v479 = vadd.s32 %v474, %v473
      %vm480 = vcmp.ge.s32.totalorder %v475, 1
      %vm481 = vcmp.ge.s32.totalorder %v476, 1
      %vm482 = vcmp.ge.s32.totalorder %v477, 1
      %vm483 = vcmp.ge.s32.totalorder %v478, 1
      %vm484 = vcmp.ge.s32.totalorder %v479, 1
      %vm485 = vcmp.lt.s32.totalorder %v475, 33
      %vm486 = vcmp.lt.s32.totalorder %v476, 33
      %vm487 = vcmp.lt.s32.totalorder %v477, 33
      %vm488 = vcmp.lt.s32.totalorder %v478, 33
      %vm489 = vcmp.lt.s32.totalorder %v479, 33
      %vm490 = vmand %vm480, %vm485
      %vm491 = vmand %vm481, %vm486
      %vm492 = vmand %vm482, %vm487
      %vm493 = vmand %vm483, %vm488
      %vm494 = vmand %vm484, %vm489
      %v495 = vsel %vm490, 1, 0
      %v496 = vsel %vm491, 1, 0
      %v497 = vsel %vm492, 1, 0
      %v498 = vsel %vm493, 1, 0
      %v499 = vsel %vm494, 1, 0
      %vm500 = vcmp.eq.s32.totalorder %v495, 1
      %vm501 = vcmp.eq.s32.totalorder %v496, 1
      %vm502 = vcmp.eq.s32.totalorder %v497, 1
      %vm503 = vcmp.eq.s32.totalorder %v498, 1
      %vm504 = vcmp.eq.s32.totalorder %v499, 1
      %v505 = vsel %vm500, %v462, 0.0
      %v506 = vsel %vm501, %v463, 0.0
      %v507 = vsel %vm502, %v464, 0.0
      %v508 = vsel %vm503, %v465, 0.0
      %v509 = vsel %vm504, %v466, 0.0
      %v510 = vld [vmem:[%s3] sm:$0x1]
      %v512 = vperm.slane %v510, 0
      %v514 = vmul.f32 %v505, %v512
      %v515 = vmul.f32 %v506, %v512
      %v516 = vmul.f32 %v507, %v512
      %v517 = vmul.f32 %v508, %v512
      %v518 = vadd.f32 %v514, 0.0
      %v519 = vadd.f32 %v515, 0.0
      %v520 = vadd.f32 %v516, 0.0
      %v521 = vadd.f32 %v517, 0.0
      %s522 = scalar_lea.vmem %s3, 1
      %v523 = vld [vmem:[%s522] sm:$0x1]
      %v525 = vperm.slane %v523, 0
      %v527 = vmul.f32 %v505, %v525
      %v528 = vmul.f32 %v506, %v525
      %v529 = vmul.f32 %v507, %v525
      %v530 = vmul.f32 %v508, %v525
      %v531 = vmul.f32 %v509, %v525
      %vm537 = vcmask 1046528
      %v538 = vrot.slane %v527, 1
      %v539 = vrot.slane %v528, 1
      %v540 = vsel %vm537, %v538, %v539
      %v541 = vrot.slane %v529, 1
      %v542 = vsel %vm537, %v539, %v541
      %v543 = vrot.slane %v530, 1
      %v544 = vsel %vm537, %v541, %v543
      %v545 = vrot.slane %v531, 1
      %v546 = vsel %vm537, %v543, %v545
      %v551 = vadd.f32 %v518, %v540
      %v552 = vadd.f32 %v519, %v542
      %v553 = vadd.f32 %v520, %v544
      %v554 = vadd.f32 %v521, %v546
      %s555 = scalar_lea.vmem %s3, 2
      %v556 = vld [vmem:[%s555] sm:$0x1]
      %v558 = vperm.slane %v556, 0
      %v560 = vmul.f32 %v505, %v558
      %v561 = vmul.f32 %v506, %v558
      %v562 = vmul.f32 %v507, %v558
      %v563 = vmul.f32 %v508, %v558
      %v564 = vmul.f32 %v509, %v558
      %vm570 = vcmask 1045504
      %v571 = vrot.slane %v560, 2
      %v572 = vrot.slane %v561, 2
      %v573 = vsel %vm570, %v571, %v572
      %v574 = vrot.slane %v562, 2
      %v575 = vsel %vm570, %v572, %v574
      %v576 = vrot.slane %v563, 2
      %v577 = vsel %vm570, %v574, %v576
      %v578 = vrot.slane %v564, 2
      %v579 = vsel %vm570, %v576, %v578
      %v584 = vadd.f32 %v551, %v573
      %v585 = vadd.f32 %v552, %v575
      %v586 = vadd.f32 %v553, %v577
      %v587 = vadd.f32 %v554, %v579
      %v588 = vld [vmem:[%s4] sm:$0x1]
      %v590 = vperm.slane %v588, 0
      %v592 = vadd.f32 %v584, %v590
      %v593 = vadd.f32 %v585, %v590
      %v594 = vadd.f32 %v586, %v590
      %v595 = vadd.f32 %v587, %v590
      %v596 = vxor.u32 %v592, 2147483648
      %v597 = vxor.u32 %v593, 2147483648
      %v598 = vxor.u32 %v594, 2147483648
      %v599 = vxor.u32 %v595, 2147483648
      %v600 = vmul.f32 %v596, 1.442695
      %v601 = vpow.pop %v600
      %v602 = vmul.f32 %v597, 1.442695
      %v603 = vpow.pop %v602
      %v604 = vmul.f32 %v598, 1.442695
      %v605 = vpow.pop %v604
      %v606 = vmul.f32 %v599, 1.442695
      %v607 = vpow.pop %v606
      %v608 = vadd.f32 %v601, 1.0
      %v609 = vadd.f32 %v603, 1.0
      %v610 = vadd.f32 %v605, 1.0
      %v611 = vadd.f32 %v607, 1.0
      %v612 = vrcp.pop %v608
      %v613 = vmul.f32 %v608, %v612
      %v614 = vsub.f32 1.0, %v613
      %v615 = vmul.f32 %v612, %v614
      %v616 = vadd.f32 %v612, %v615
      %vm617 = vweird.f32 %v608
      %vm618 = vweird.f32 %v612
      %vm619 = vmor %vm617, %vm618
      %v620 = vsel %vm619, %v612, %v616
      %v621 = vand.u32 2147483647, %v608
      %vm622 = vcmp.eq.f32.partialorder %v621, 8.507059e+37
      %v623 = vand.u32 %v608, 2147483648
      %v624 = vor.u32 1.1754944e-38, %v623
      %v625 = vsel %vm622, %v624, %v620
      %v626 = vmul.f32 1.0, %v625
      %v627 = vrcp.pop %v609
      %v628 = vmul.f32 %v609, %v627
      %v629 = vsub.f32 1.0, %v628
      %v630 = vmul.f32 %v627, %v629
      %v631 = vadd.f32 %v627, %v630
      %vm632 = vweird.f32 %v609
      %vm633 = vweird.f32 %v627
      %vm634 = vmor %vm632, %vm633
      %v635 = vsel %vm634, %v627, %v631
      %v636 = vand.u32 2147483647, %v609
      %vm637 = vcmp.eq.f32.partialorder %v636, 8.507059e+37
      %v638 = vand.u32 %v609, 2147483648
      %v639 = vor.u32 1.1754944e-38, %v638
      %v640 = vsel %vm637, %v639, %v635
      %v641 = vmul.f32 1.0, %v640
      %v642 = vrcp.pop %v610
      %v643 = vmul.f32 %v610, %v642
      %v644 = vsub.f32 1.0, %v643
      %v645 = vmul.f32 %v642, %v644
      %v646 = vadd.f32 %v642, %v645
      %vm647 = vweird.f32 %v610
      %vm648 = vweird.f32 %v642
      %vm649 = vmor %vm647, %vm648
      %v650 = vsel %vm649, %v642, %v646
      %v651 = vand.u32 2147483647, %v610
      %vm652 = vcmp.eq.f32.partialorder %v651, 8.507059e+37
      %v653 = vand.u32 %v610, 2147483648
      %v654 = vor.u32 1.1754944e-38, %v653
      %v655 = vsel %vm652, %v654, %v650
      %v656 = vmul.f32 1.0, %v655
      %v657 = vrcp.pop %v611
      %v658 = vmul.f32 %v611, %v657
      %v659 = vsub.f32 1.0, %v658
      %v660 = vmul.f32 %v657, %v659
      %v661 = vadd.f32 %v657, %v660
      %vm662 = vweird.f32 %v611
      %vm663 = vweird.f32 %v657
      %vm664 = vmor %vm662, %vm663
      %v665 = vsel %vm664, %v657, %v661
      %v666 = vand.u32 2147483647, %v611
      %vm667 = vcmp.eq.f32.partialorder %v666, 8.507059e+37
      %v668 = vand.u32 %v611, 2147483648
      %v669 = vor.u32 1.1754944e-38, %v668
      %v670 = vsel %vm667, %v669, %v665
      %v671 = vmul.f32 1.0, %v670
      %v672 = vmul.f32 %v592, %v626
      %v673 = vmul.f32 %v593, %v641
      %v674 = vmul.f32 %v594, %v656
      %v675 = vmul.f32 %v595, %v671
      %v676 = vpack.c.bf16 %v673, %v672
      %v677 = vpack.c.bf16 %v675, %v674
      %v678 = vld [vmem:[%s5] sm:$0xf]
      %v679 = vld [vmem:[%s5 + $0x4] sm:$0xf]
      %v680 = vld [vmem:[%s6] sm:$0x1]
      %v682 = vperm.slane %v680, 0
      %v686 = vunpack.c.l.b16 %v678
      %v687 = vunpack.c.l.b16 %v679
      %v688 = vpack.c.b16 %v687, %v686
      %vm690 = vcmask 130048
      %v692 = vsel %vm690, %v676, 0
      %v695 = vsel %vm690, %v677, 0
      %697 = vmatpush.bf16.msra.mxu0 0
      %698 = vmatpush.bf16.msra.mxu0 0
      %699 = vmatpush.bf16.msra.mxu0 0
      %700 = vmatpush.bf16.msra.mxu0 0
      %701 = vmatpush.bf16.msra.mxu0 0
      %702 = vmatpush.bf16.msra.mxu0 0
      %703 = vmatpush.bf16.msra.mxu0 0
      %704 = vmatpush.bf16.msra.mxu0 %v688
      %705 = vmatmul.bf16.gmra.mxu0 %v692
      %v706 = vpop.f32.mrf.mxu0
      %v707 = vadd.f32 %v682, %v706
      %v708 = vpop.f32.mrf.mxu0
      %v709 = vadd.f32 %v682, %v708
      %710 = vmatmul.bf16.gmra.mxu0 %v695
      %v711 = vpop.f32.mrf.mxu0
      %v712 = vadd.f32 %v682, %v711
      %v713 = vpop.f32.mrf.mxu0
      %v714 = vadd.f32 %v682, %v713
      %715 = vdwg.mxu0
      %vm720 = vcmask 1040384
      %v721 = vrot.slane %v707, 7
      %v722 = vrot.slane %v709, 7
      %v723 = vsel %vm720, %v721, %v722
      %v724 = vrot.slane %v712, 7
      %v725 = vsel %vm720, %v722, %v724
      %v726 = vrot.slane %v714, 7
      %v727 = vsel %vm720, %v724, %v726
      %v733 = vadd.f32 %v317, %v721
      %v734 = vadd.f32 %v318, %v723
      %v735 = vadd.f32 %v319, %v725
      %v736 = vadd.f32 %v320, %v727
      %v737 = vadd.f32 %v321, %v726
      %vm738 = vcmask 64513
      %739 = vst.msk [vmem:[%s314 - $0x1] sm:$0xfe] %vm738, %v733
      %740 = vst.msk [vmem:[%s314 + $0x7] sm:$0xff] %vm330, %v734
      %741 = vst.msk [vmem:[%s314 + $0xf] sm:$0xff] %vm330, %v735
      %742 = vst.msk [vmem:[%s314 + $0x17] sm:$0xff] %vm330, %v736
      %vm743 = vcmask 57344
      %744 = vst.msk [vmem:[%s314 + $0x1f] sm:$0x1] %vm743, %v737
      %s745 = smul.u32 4, %s23
      %p746 = scmp.lt.s32.totalorder %s22, 1
      %s747 = scalar_select %p746, %s22, 1
      %p748 = scmp.lt.s32.totalorder %s745, 3
      %s749 = scalar_select %p748, %s745, 3
      %s750 = smul.addr %s747, 4
      %s751 = sadd.s32 %s749, %s750
      %s752 = smul.addr %s751, 8
      %s753 = scalar_lea.vmem %s7, %s752
      // Predicated region
      $region49: #{_lambda_.9} parent=47 // pred_check
        %p754 = pneg %p204
      $region50: #{_lambda_.9} parent=47 // pred_check_branch
        %756 = sbr.rel (%p754) target = $region52
      $region51: #{_lambda_.9} parent=47 // pred_region
        %s757 = smul.u32 4, %s23
      $region52: #{_lambda_.9} parent=47 // pred_fallthru
        _
    $region48: #{_lambda_.9} parent=5 // pred_fallthru
      _
    %p758 = scmp.le.s32.totalorder 2, %s13
    // Predicated region
    $region53: #{_lambda_.9} parent=5 // pred_check
      %p759 = pneg %p758
    $region54: #{_lambda_.9} parent=5 // pred_check_branch
      %761 = sbr.rel (%p759) target = $region56
    $region55: #{_lambda_.9} parent=5 // pred_region
      %s762 = ssub.s32 %s13, 2
      // Predicated region
      $region57: #{_lambda_.9} parent=55 // pred_check
        %p763 = pneg %p210
      $region58: #{_lambda_.9} parent=55 // pred_check_branch
        %765 = sbr.rel (%p763) target = $region60
      $region59: #{_lambda_.9} parent=55 // pred_region
        %s766 = smul.u32 4, %s25
        %p767 = scmp.lt.s32.totalorder %s24, 1
        %s768 = scalar_select %p767, %s24, 1
        %p769 = scmp.lt.s32.totalorder %s766, 3
        %s770 = scalar_select %p769, %s766, 3
        %s771 = smul.addr %s768, 4
        %s772 = sadd.s32 %s770, %s771
        %s773 = smul.addr %s772, 8
        %s774 = scalar_lea.vmem %s7, %s773
      $region60: #{_lambda_.9} parent=55 // pred_fallthru
        _
    $region56: #{_lambda_.9} parent=5 // pred_fallthru
      _
  $region6: #{_lambda_.9} parent=0 // loop_footer
    %s17 = sadd.s32 1, %s13
  $region7: #{_lambda_.9} parent=0 // loop_footer_branch
    %12 = sbr.rel target = $region3
  $region8: #{_lambda_.9} parent=0 // loop_exit
    _

// kernel: _lambda_.12
$region0: #{_lambda_.12}
  #allocation0 [shape = 'u32[]', space=smem, size = 0x4, offset = 0x4, fixed_abs, tag = 'smem constant byte address 0x4 - core index']
  #allocation1 [shape = 'u32[72,128]{1,0:T(1,128)}', space=vmem, size = 0x9000, scoped, tag = 'internal scratch']
  %s0 = inlined_call_operand.vmem [shape: f32[2,1,18,16], index: 0, kind: input, shape index: {}]
  %s1 = inlined_call_operand.vmem [shape: bf16[16,32], index: 1, kind: input, shape index: {}]
  %s2 = inlined_call_operand.vmem [shape: f32[1,32], index: 2, kind: input, shape index: {}]
  %s3 = inlined_call_operand.vmem [shape: f32[3,1,32], index: 3, kind: input, shape index: {}]
  %s4 = inlined_call_operand.vmem [shape: f32[1,32], index: 4, kind: input, shape index: {}]
  %s5 = inlined_call_operand.vmem [shape: bf16[32,16], index: 5, kind: input, shape index: {}]
  %s6 = inlined_call_operand.vmem [shape: f32[1,16], index: 6, kind: input, shape index: {}]
  %s7 = inlined_call_operand.vmem [shape: f32[2,16,16], index: 7, kind: output, shape index: {}]
  %s8 = sld [smem:[#allocation0]]
  $region61: #{_lambda_.12} parent=0
    _
  %s10 = ssub.s32 1, %s8
  %s11 = scalar_select 0, %s10, %s8
  loop: start=0, step=1, limit=4
  $region2: #{_lambda_.12} parent=0 // loop_pre_header
    _
  $region3: #{_lambda_.12} parent=0 // loop_header
    %s13 = sphi 0, %s17
    %p14 = scmp.ge.s32.totalorder %s13, 4
    %s20 = sphi 0, %s32
    %s21 = sphi 0, %s28
    %s22 = sphi 0, %s20
    %s23 = sphi 0, %s21
    %s24 = sphi 0, %s22
    %s25 = sphi 0, %s23
    %s37 = sphi 0, %s39
    %s40 = sphi 0, %s37
    %s41 = sphi 0, %s40
    %s57 = sphi 0, %s41
    %s61 = sphi 0, %s61
    %s63 = sphi 0, %s61
    %s64 = sphi 0, %s63
    %s78 = sphi 0, %s64
    %s82 = sphi 0, %s82
    %s84 = sphi 0, %s82
    %s85 = sphi 0, %s84
    %s99 = sphi 0, %s85
    %s103 = sphi 0, %s103
    %s105 = sphi 0, %s103
    %s106 = sphi 0, %s105
    %s120 = sphi 0, %s106
    %s124 = sphi 0, %s124
    %s126 = sphi 0, %s124
    %s127 = sphi 0, %s126
    %s141 = sphi 0, %s127
    %s145 = sphi 0, %s145
    %s147 = sphi 0, %s145
    %s148 = sphi 0, %s147
    %s162 = sphi 0, %s148
    %s166 = sphi 0, %s166
    %s168 = sphi 0, %s166
    %s169 = sphi 0, %s168
    %s183 = sphi 0, %s169
    %s191 = sphi 0, %s193
    %s194 = sphi 0, %s191
    %s195 = sphi 0, %s194
    %s211 = sphi 0, %s195
  $region4: #{_lambda_.12} parent=0 // loop_header_branch
    %16 = sbr.rel (%p14) target = $region8
  $region5: #{_lambda_.12} parent=0 // loop_body
    %s18 = ssub.s32 %s13, 1
    %s19 = ssub.s32 %s13, 2
    %s26 = sadd.s32 1, %s21
    %p27 = scmp.ge.s32.totalorder %s26, 1
    %s28 = scalar_select %p27, 0, %s26
    %s29 = sadd.s32 1, %s20
    %s30 = scalar_select %p27, %s29, %s20
    %p31 = scmp.ge.s32.totalorder %s30, 2
    %s32 = scalar_select %p31, 0, %s30
    %s33 = ssub.s32 %s20, %s32
    %s34 = ssub.s32 %s21, %s28
    %s35 = sor.u32 %s33, %s34
    %p36 = scmp.eq.s32.totalorder %s35, 0
    %s38 = sadd.s32 %s37, 1
    %s39 = scalar_select %p36, %s37, %s38
    %p42 = pneg %p36
    %p43 = scmp.eq.s32.totalorder %s13, 1
    %p44 = por %p42, %p43
    %p45 = scmp.ne.s32.totalorder %s37, %s40
    %p46 = scmp.eq.s32.totalorder %s13, 0
    %p47 = por %p45, %p46
    %p48 = scmp.ne.s32.totalorder %s37, %s40
    %p49 = scmp.eq.s32.totalorder %s18, 1
    %p50 = por %p48, %p49
    %p51 = scmp.ne.s32.totalorder %s40, %s41
    %p52 = scmp.eq.s32.totalorder %s18, 0
    %p53 = por %p51, %p52
    %p54 = scmp.ne.s32.totalorder %s40, %s41
    %p55 = scmp.eq.s32.totalorder %s19, 1
    %p56 = por %p54, %p55
    %p58 = scmp.ne.s32.totalorder %s41, %s57
    %p59 = scmp.eq.s32.totalorder %s19, 0
    %p60 = por %p58, %p59
    %s62 = sadd.s32 %s61, 1
    %p65 = scmp.eq.s32.totalorder %s13, 1
    %p66 = scmp.ne.s32.totalorder %s61, %s63
    %p67 = scmp.eq.s32.totalorder %s13, 0
    %p68 = por %p66, %p67
    %p69 = scmp.ne.s32.totalorder %s61, %s63
    %p70 = scmp.eq.s32.totalorder %s18, 1
    %p71 = por %p69, %p70
    %p72 = scmp.ne.s32.totalorder %s63, %s64
    %p73 = scmp.eq.s32.totalorder %s18, 0
    %p74 = por %p72, %p73
    %p75 = scmp.ne.s32.totalorder %s63, %s64
    %p76 = scmp.eq.s32.totalorder %s19, 1
    %p77 = por %p75, %p76
    %p79 = scmp.ne.s32.totalorder %s64, %s78
    %p80 = scmp.eq.s32.totalorder %s19, 0
    %p81 = por %p79, %p80
    %s83 = sadd.s32 %s82, 1
    %p86 = scmp.eq.s32.totalorder %s13, 1
    %p87 = scmp.ne.s32.totalorder %s82, %s84
    %p88 = scmp.eq.s32.totalorder %s13, 0
    %p89 = por %p87, %p88
    %p90 = scmp.ne.s32.totalorder %s82, %s84
    %p91 = scmp.eq.s32.totalorder %s18, 1
    %p92 = por %p90, %p91
    %p93 = scmp.ne.s32.totalorder %s84, %s85
    %p94 = scmp.eq.s32.totalorder %s18, 0
    %p95 = por %p93, %p94
    %p96 = scmp.ne.s32.totalorder %s84, %s85
    %p97 = scmp.eq.s32.totalorder %s19, 1
    %p98 = por %p96, %p97
    %p100 = scmp.ne.s32.totalorder %s85, %s99
    %p101 = scmp.eq.s32.totalorder %s19, 0
    %p102 = por %p100, %p101
    %s104 = sadd.s32 %s103, 1
    %p107 = scmp.eq.s32.totalorder %s13, 1
    %p108 = scmp.ne.s32.totalorder %s103, %s105
    %p109 = scmp.eq.s32.totalorder %s13, 0
    %p110 = por %p108, %p109
    %p111 = scmp.ne.s32.totalorder %s103, %s105
    %p112 = scmp.eq.s32.totalorder %s18, 1
    %p113 = por %p111, %p112
    %p114 = scmp.ne.s32.totalorder %s105, %s106
    %p115 = scmp.eq.s32.totalorder %s18, 0
    %p116 = por %p114, %p115
    %p117 = scmp.ne.s32.totalorder %s105, %s106
    %p118 = scmp.eq.s32.totalorder %s19, 1
    %p119 = por %p117, %p118
    %p121 = scmp.ne.s32.totalorder %s106, %s120
    %p122 = scmp.eq.s32.totalorder %s19, 0
    %p123 = por %p121, %p122
    %s125 = sadd.s32 %s124, 1
    %p128 = scmp.eq.s32.totalorder %s13, 1
    %p129 = scmp.ne.s32.totalorder %s124, %s126
    %p130 = scmp.eq.s32.totalorder %s13, 0
    %p131 = por %p129, %p130
    %p132 = scmp.ne.s32.totalorder %s124, %s126
    %p133 = scmp.eq.s32.totalorder %s18, 1
    %p134 = por %p132, %p133
    %p135 = scmp.ne.s32.totalorder %s126, %s127
    %p136 = scmp.eq.s32.totalorder %s18, 0
    %p137 = por %p135, %p136
    %p138 = scmp.ne.s32.totalorder %s126, %s127
    %p139 = scmp.eq.s32.totalorder %s19, 1
    %p140 = por %p138, %p139
    %p142 = scmp.ne.s32.totalorder %s127, %s141
    %p143 = scmp.eq.s32.totalorder %s19, 0
    %p144 = por %p142, %p143
    %s146 = sadd.s32 %s145, 1
    %p149 = scmp.eq.s32.totalorder %s13, 1
    %p150 = scmp.ne.s32.totalorder %s145, %s147
    %p151 = scmp.eq.s32.totalorder %s13, 0
    %p152 = por %p150, %p151
    %p153 = scmp.ne.s32.totalorder %s145, %s147
    %p154 = scmp.eq.s32.totalorder %s18, 1
    %p155 = por %p153, %p154
    %p156 = scmp.ne.s32.totalorder %s147, %s148
    %p157 = scmp.eq.s32.totalorder %s18, 0
    %p158 = por %p156, %p157
    %p159 = scmp.ne.s32.totalorder %s147, %s148
    %p160 = scmp.eq.s32.totalorder %s19, 1
    %p161 = por %p159, %p160
    %p163 = scmp.ne.s32.totalorder %s148, %s162
    %p164 = scmp.eq.s32.totalorder %s19, 0
    %p165 = por %p163, %p164
    %s167 = sadd.s32 %s166, 1
    %p170 = scmp.eq.s32.totalorder %s13, 1
    %p171 = scmp.ne.s32.totalorder %s166, %s168
    %p172 = scmp.eq.s32.totalorder %s13, 0
    %p173 = por %p171, %p172
    %p174 = scmp.ne.s32.totalorder %s166, %s168
    %p175 = scmp.eq.s32.totalorder %s18, 1
    %p176 = por %p174, %p175
    %p177 = scmp.ne.s32.totalorder %s168, %s169
    %p178 = scmp.eq.s32.totalorder %s18, 0
    %p179 = por %p177, %p178
    %p180 = scmp.ne.s32.totalorder %s168, %s169
    %p181 = scmp.eq.s32.totalorder %s19, 1
    %p182 = por %p180, %p181
    %p184 = scmp.ne.s32.totalorder %s169, %s183
    %p185 = scmp.eq.s32.totalorder %s19, 0
    %p186 = por %p184, %p185
    %s187 = ssub.s32 %s20, %s32
    %s188 = ssub.s32 %s21, %s28
    %s189 = sor.u32 %s187, %s188
    %p190 = scmp.eq.s32.totalorder %s189, 0
    %s192 = sadd.s32 %s191, 1
    %s193 = scalar_select %p190, %s191, %s192
    %p196 = pneg %p190
    %p197 = scmp.eq.s32.totalorder %s13, 1
    %p198 = por %p196, %p197
    %p199 = scmp.ne.s32.totalorder %s191, %s194
    %p200 = scmp.eq.s32.totalorder %s13, 0
    %p201 = por %p199, %p200
    %p202 = scmp.ne.s32.totalorder %s191, %s194
    %p203 = scmp.eq.s32.totalorder %s18, 1
    %p204 = por %p202, %p203
    %p205 = scmp.ne.s32.totalorder %s194, %s195
    %p206 = scmp.eq.s32.totalorder %s18, 0
    %p207 = por %p205, %p206
    %p208 = scmp.ne.s32.totalorder %s194, %s195
    %p209 = scmp.eq.s32.totalorder %s19, 1
    %p210 = por %p208, %p209
    %p212 = scmp.ne.s32.totalorder %s195, %s211
    %p213 = scmp.eq.s32.totalorder %s19, 0
    %p214 = por %p212, %p213
    %p215 = scmp.le.s32.totalorder 1, %s13
    %p216 = scmp.lt.s32.totalorder %s13, 3
    %p217 = pnand %p215, %p216
    %p218 = pneg %p217
    // Predicated region
    $region9: #{_lambda_.12} parent=5 // pred_check
      _
    $region10: #{_lambda_.12} parent=5 // pred_check_branch
      %220 = sbr.rel (%p217) target = $region12
    $region11: #{_lambda_.12} parent=5 // pred_region
      %s221 = ssub.s32 %s13, 1
      // Predicated region
      $region13: #{_lambda_.12} parent=11 // pred_check
        %p222 = pneg %p74
      $region14: #{_lambda_.12} parent=11 // pred_check_branch
        %224 = sbr.rel (%p222) target = $region16
      $region15: #{_lambda_.12} parent=11 // pred_region
        _
      $region16: #{_lambda_.12} parent=11 // pred_fallthru
        _
      // Predicated region
      $region17: #{_lambda_.12} parent=11 // pred_check
        %p225 = pneg %p95
      $region18: #{_lambda_.12} parent=11 // pred_check_branch
        %227 = sbr.rel (%p225) target = $region20
      $region19: #{_lambda_.12} parent=11 // pred_region
        _
      $region20: #{_lambda_.12} parent=11 // pred_fallthru
        _
      // Predicated region
      $region21: #{_lambda_.12} parent=11 // pred_check
        %p228 = pneg %p116
      $region22: #{_lambda_.12} parent=11 // pred_check_branch
        %230 = sbr.rel (%p228) target = $region24
      $region23: #{_lambda_.12} parent=11 // pred_region
        _
      $region24: #{_lambda_.12} parent=11 // pred_fallthru
        _
      // Predicated region
      $region25: #{_lambda_.12} parent=11 // pred_check
        %p231 = pneg %p137
      $region26: #{_lambda_.12} parent=11 // pred_check_branch
        %233 = sbr.rel (%p231) target = $region28
      $region27: #{_lambda_.12} parent=11 // pred_region
        _
      $region28: #{_lambda_.12} parent=11 // pred_fallthru
        _
      // Predicated region
      $region29: #{_lambda_.12} parent=11 // pred_check
        %p234 = pneg %p158
      $region30: #{_lambda_.12} parent=11 // pred_check_branch
        %236 = sbr.rel (%p234) target = $region32
      $region31: #{_lambda_.12} parent=11 // pred_region
        _
      $region32: #{_lambda_.12} parent=11 // pred_fallthru
        _
      // Predicated region
      $region33: #{_lambda_.12} parent=11 // pred_check
        %p237 = pneg %p179
      $region34: #{_lambda_.12} parent=11 // pred_check_branch
        %239 = sbr.rel (%p237) target = $region36
      $region35: #{_lambda_.12} parent=11 // pred_region
        _
      $region36: #{_lambda_.12} parent=11 // pred_fallthru
        _
    $region12: #{_lambda_.12} parent=5 // pred_fallthru
      _
    %p240 = scmp.lt.s32.totalorder %s13, 2
    // Predicated region
    $region37: #{_lambda_.12} parent=5 // pred_check
      %p241 = pneg %p240
    $region38: #{_lambda_.12} parent=5 // pred_check_branch
      %243 = sbr.rel (%p241) target = $region40
    $region39: #{_lambda_.12} parent=5 // pred_region
      // Predicated region
      $region41: #{_lambda_.12} parent=39 // pred_check
        %p244 = pneg %p47
      $region42: #{_lambda_.12} parent=39 // pred_check_branch
        %246 = sbr.rel (%p244) target = $region44
      $region43: #{_lambda_.12} parent=39 // pred_region
        %p247 = scmp.lt.s32.totalorder %s20, 1
        %s248 = scalar_select %p247, %s20, 1
        %p249 = scmp.lt.s32.totalorder %s21, 0
        %s250 = scalar_select %p249, %s21, 0
        %s251 = smul.addr %s250, 3
        %s252 = smul.addr %s248, 3
        %s253 = sadd.s32 %s251, %s252
        %s254 = smul.addr %s253, 8
        %s255 = scalar_lea.vmem %s0, %s254
      $region44: #{_lambda_.12} parent=39 // pred_fallthru
        _
    $region40: #{_lambda_.12} parent=5 // pred_fallthru
      _
    %p256 = scmp.le.s32.totalorder 1, %s13
    %p257 = scmp.lt.s32.totalorder %s13, 3
    %p258 = pnand %p256, %p257
    %p259 = pneg %p258
    // Predicated region
    $region45: #{_lambda_.12} parent=5 // pred_check
      _
    $region46: #{_lambda_.12} parent=5 // pred_check_branch
      %261 = sbr.rel (%p258) target = $region48
    $region47: #{_lambda_.12} parent=5 // pred_region
      %s262 = ssub.s32 %s13, 1
      %p263 = scmp.lt.s32.totalorder %s22, 1
      %s264 = scalar_select %p263, %s22, 1
      %p265 = scmp.lt.s32.totalorder %s23, 0
      %s266 = scalar_select %p265, %s23, 0
      %s267 = smul.addr %s266, 3
      %s268 = smul.addr %s264, 3
      %s269 = sadd.s32 %s267, %s268
      %s270 = smul.addr %s269, 8
      %s271 = scalar_lea.vmem %s0, %s270
      %p272 = pneg %p53
      %p273 = pneg %p50
      %p274 = pneg %p74
      %p275 = pneg %p71
      %p276 = pneg %p95
      %p277 = pneg %p92
      %p278 = pneg %p116
      %p279 = pneg %p113
      %p280 = pneg %p137
      %p281 = pneg %p134
      %p282 = pneg %p158
      %p283 = pneg %p155
      %p284 = pneg %p179
      %p285 = pneg %p176
      %p286 = pneg %p207
      %p287 = pneg %p204
      %s288 = smul.u32 2, %s23
      %p289 = scmp.lt.s32.totalorder %s22, 1
      %s290 = scalar_select %p289, %s22, 1
      %p291 = scmp.lt.s32.totalorder %s288, 1
      %s292 = scalar_select %p291, %s288, 1
      %s293 = smul.addr %s290, 2
      %s294 = sadd.s32 %s292, %s293
      %s295 = smul.addr %s294, 8
      %s296 = scalar_lea.vmem %s7, %s295
      %p297 = scmp.lt.s32.totalorder %s22, 1
      %s298 = scalar_select %p297, %s22, 1
      %p299 = scmp.lt.s32.totalorder %s23, 0
      %s300 = scalar_select %p299, %s23, 0
      %s301 = smul.addr %s300, 3
      %s302 = smul.addr %s298, 3
      %s303 = sadd.s32 %s301, %s302
      %s304 = smul.addr %s303, 8
      %s305 = scalar_lea.vmem %s0, %s304
      %s306 = smul.u32 2, %s23
      %p307 = scmp.lt.s32.totalorder %s22, 1
      %s308 = scalar_select %p307, %s22, 1
      %p309 = scmp.lt.s32.totalorder %s306, 1
      %s310 = scalar_select %p309, %s306, 1
      %s311 = smul.addr %s308, 2
      %s312 = sadd.s32 %s310, %s311
      %s313 = smul.addr %s312, 8
      %s314 = scalar_lea.vmem %s7, %s313
      %s315 = smul.u32 2, %s23
      %v317 = vld [vmem:[%s305] sm:$0xff]
      %v318 = vld [vmem:[%s305 + $0x8] sm:$0xff]
      %v319 = vld [vmem:[%s305 + $0x10] sm:$0x3]
      %v320 = vpack.c.bf16 %v318, %v317
      %v321 = vpack.c.bf16 %v319, %v319
      %v322 = vld [vmem:[%s1] sm:$0xf]
      %v323 = vld [vmem:[%s1 + $0x4] sm:$0xf]
      %v324 = vld [vmem:[%s2] sm:$0x1]
      %v326 = vperm.slane %v324, 0
      %v330 = vunpack.c.l.b16 %v322
      %v331 = vunpack.c.l.b16 %v323
      %v332 = vpack.c.b16 %v331, %v330
      %vm334 = vcmask 130048
      %v336 = vsel %vm334, %v320, 0
      %v339 = vsel %vm334, %v321, 0
      %341 = vmatpush.bf16.msra.mxu0 0
      %342 = vmatpush.bf16.msra.mxu0 0
      %343 = vmatpush.bf16.msra.mxu0 0
      %344 = vmatpush.bf16.msra.mxu0 0
      %345 = vmatpush.bf16.msra.mxu0 0
      %346 = vmatpush.bf16.msra.mxu0 0
      %347 = vmatpush.bf16.msra.mxu0 0
      %348 = vmatpush.bf16.msra.mxu0 %v332
      %349 = vmatmul.bf16.gmra.mxu0 %v336
      %v350 = vpop.f32.mrf.mxu0
      %v351 = vadd.f32 %v326, %v350
      %v352 = vpop.f32.mrf.mxu0
      %v353 = vadd.f32 %v326, %v352
      %354 = vmatmul.bf16.gmra.mxu0 %v339
      %v355 = vpop.f32.mrf.mxu0
      %v356 = vadd.f32 %v326, %v355
      %v357 = vpop.f32.mrf.mxu0
      %358 = vdwg.mxu0
      %v359 = vxor.u32 %v351, 2147483648
      %v360 = vxor.u32 %v353, 2147483648
      %v361 = vxor.u32 %v356, 2147483648
      %v362 = vmul.f32 %v359, 1.442695
      %v363 = vpow.pop %v362
      %v364 = vmul.f32 %v360, 1.442695
      %v365 = vpow.pop %v364
      %v366 = vmul.f32 %v361, 1.442695
      %v367 = vpow.pop %v366
      %v368 = vadd.f32 %v363, 1.0
      %v369 = vadd.f32 %v365, 1.0
      %v370 = vadd.f32 %v367, 1.0
      %v371 = vrcp.pop %v368
      %v372 = vmul.f32 %v368, %v371
      %v373 = vsub.f32 1.0, %v372
      %v374 = vmul.f32 %v371, %v373
      %v375 = vadd.f32 %v371, %v374
      %vm376 = vweird.f32 %v368
      %vm377 = vweird.f32 %v371
      %vm378 = vmor %vm376, %vm377
      %v379 = vsel %vm378, %v371, %v375
      %v380 = vand.u32 2147483647, %v368
      %vm381 = vcmp.eq.f32.partialorder %v380, 8.507059e+37
      %v382 = vand.u32 %v368, 2147483648
      %v383 = vor.u32 1.1754944e-38, %v382
      %v384 = vsel %vm381, %v383, %v379
      %v385 = vmul.f32 1.0, %v384
      %v386 = vrcp.pop %v369
      %v387 = vmul.f32 %v369, %v386
      %v388 = vsub.f32 1.0, %v387
      %v389 = vmul.f32 %v386, %v388
      %v390 = vadd.f32 %v386, %v389
      %vm391 = vweird.f32 %v369
      %vm392 = vweird.f32 %v386
      %vm393 = vmor %vm391, %vm392
      %v394 = vsel %vm393, %v386, %v390
      %v395 = vand.u32 2147483647, %v369
      %vm396 = vcmp.eq.f32.partialorder %v395, 8.507059e+37
      %v397 = vand.u32 %v369, 2147483648
      %v398 = vor.u32 1.1754944e-38, %v397
      %v399 = vsel %vm396, %v398, %v394
      %v400 = vmul.f32 1.0, %v399
      %v401 = vrcp.pop %v370
      %v402 = vmul.f32 %v370, %v401
      %v403 = vsub.f32 1.0, %v402
      %v404 = vmul.f32 %v401, %v403
      %v405 = vadd.f32 %v401, %v404
      %vm406 = vweird.f32 %v370
      %vm407 = vweird.f32 %v401
      %vm408 = vmor %vm406, %vm407
      %v409 = vsel %vm408, %v401, %v405
      %v410 = vand.u32 2147483647, %v370
      %vm411 = vcmp.eq.f32.partialorder %v410, 8.507059e+37
      %v412 = vand.u32 %v370, 2147483648
      %v413 = vor.u32 1.1754944e-38, %v412
      %v414 = vsel %vm411, %v413, %v409
      %v415 = vmul.f32 1.0, %v414
      %v416 = vmul.f32 %v351, %v385
      %v417 = vmul.f32 %v353, %v400
      %v418 = vmul.f32 %v356, %v415
      %s419 = smul.u32 %s23, 16
      %v420 = vlaneseq
      %v421 = vshrl.u32 %v420, 7
      %v422 = vadd.s32 %v421, 8
      %v423 = vadd.s32 %v421, 16
      %v424 = vstv %s419
      %v425 = vadd.s32 %v424, %v421
      %v426 = vadd.s32 %v424, %v422
      %v427 = vadd.s32 %v424, %v423
      %vm428 = vcmp.ge.s32.totalorder %v425, 1
      %vm429 = vcmp.ge.s32.totalorder %v426, 1
      %vm430 = vcmp.ge.s32.totalorder %v427, 1
      %vm431 = vcmp.lt.s32.totalorder %v425, 17
      %vm432 = vcmp.lt.s32.totalorder %v426, 17
      %vm433 = vcmp.lt.s32.totalorder %v427, 17
      %vm434 = vmand %vm428, %vm431
      %vm435 = vmand %vm429, %vm432
      %vm436 = vmand %vm430, %vm433
      %v437 = vsel %vm434, 1, 0
      %v438 = vsel %vm435, 1, 0
      %v439 = vsel %vm436, 1, 0
      %vm440 = vcmp.eq.s32.totalorder %v437, 1
      %vm441 = vcmp.eq.s32.totalorder %v438, 1
      %vm442 = vcmp.eq.s32.totalorder %v439, 1
      %v443 = vsel %vm440, %v416, 0.0
      %v444 = vsel %vm441, %v417, 0.0
      %v445 = vsel %vm442, %v418, 0.0
      %v446 = vld [vmem:[%s3] sm:$0x1]
      %v448 = vperm.slane %v446, 0
      %v450 = vmul.f32 %v443, %v448
      %v451 = vmul.f32 %v444, %v448
      %v452 = vadd.f32 %v450, 0.0
      %v453 = vadd.f32 %v451, 0.0
      %s454 = scalar_lea.vmem %s3, 1
      %v455 = vld [vmem:[%s454] sm:$0x1]
      %v457 = vperm.slane %v455, 0
      %v459 = vmul.f32 %v443, %v457
      %v460 = vmul.f32 %v444, %v457
      %v461 = vmul.f32 %v445, %v457
      %vm465 = vcmask 1046528
      %v466 = vrot.slane %v459, 1
      %v467 = vrot.slane %v460, 1
      %v468 = vsel %vm465, %v466, %v467
      %v469 = vrot.slane %v461, 1
      %v470 = vsel %vm465, %v467, %v469
      %v473 = vadd.f32 %v452, %v468
      %v474 = vadd.f32 %v453, %v470
      %s475 = scalar_lea.vmem %s3, 2
      %v476 = vld [vmem:[%s475] sm:$0x1]
      %v478 = vperm.slane %v476, 0
      %v480 = vmul.f32 %v443, %v478
      %v481 = vmul.f32 %v444, %v478
      %v482 = vmul.f32 %v445, %v478
      %vm486 = vcmask 1045504
      %v487 = vrot.slane %v480, 2
      %v488 = vrot.slane %v481, 2
      %v489 = vsel %vm486, %v487, %v488
      %v490 = vrot.slane %v482, 2
      %v491 = vsel %vm486, %v488, %v490
      %v494 = vadd.f32 %v473, %v489
      %v495 = vadd.f32 %v474, %v491
      %v496 = vld [vmem:[%s4] sm:$0x1]
      %v498 = vperm.slane %v496, 0
      %v500 = vadd.f32 %v494, %v498
      %v501 = vadd.f32 %v495, %v498
      %v502 = vxor.u32 %v500, 2147483648
      %v503 = vxor.u32 %v501, 2147483648
      %v504 = vmul.f32 %v502, 1.442695
      %v505 = vpow.pop %v504
      %v506 = vmul.f32 %v503, 1.442695
      %v507 = vpow.pop %v506
      %v508 = vadd.f32 %v505, 1.0
      %v509 = vadd.f32 %v507, 1.0
      %v510 = vrcp.pop %v508
      %v511 = vmul.f32 %v508, %v510
      %v512 = vsub.f32 1.0, %v511
      %v513 = vmul.f32 %v510, %v512
      %v514 = vadd.f32 %v510, %v513
      %vm515 = vweird.f32 %v508
      %vm516 = vweird.f32 %v510
      %vm517 = vmor %vm515, %vm516
      %v518 = vsel %vm517, %v510, %v514
      %v519 = vand.u32 2147483647, %v508
      %vm520 = vcmp.eq.f32.partialorder %v519, 8.507059e+37
      %v521 = vand.u32 %v508, 2147483648
      %v522 = vor.u32 1.1754944e-38, %v521
      %v523 = vsel %vm520, %v522, %v518
      %v524 = vmul.f32 1.0, %v523
      %v525 = vrcp.pop %v509
      %v526 = vmul.f32 %v509, %v525
      %v527 = vsub.f32 1.0, %v526
      %v528 = vmul.f32 %v525, %v527
      %v529 = vadd.f32 %v525, %v528
      %vm530 = vweird.f32 %v509
      %vm531 = vweird.f32 %v525
      %vm532 = vmor %vm530, %vm531
      %v533 = vsel %vm532, %v525, %v529
      %v534 = vand.u32 2147483647, %v509
      %vm535 = vcmp.eq.f32.partialorder %v534, 8.507059e+37
      %v536 = vand.u32 %v509, 2147483648
      %v537 = vor.u32 1.1754944e-38, %v536
      %v538 = vsel %vm535, %v537, %v533
      %v539 = vmul.f32 1.0, %v538
      %v540 = vmul.f32 %v500, %v524
      %v541 = vmul.f32 %v501, %v539
      %v542 = vpack.c.bf16 %v541, %v540
      %v543 = vld [vmem:[%s5] sm:$0xf]
      %v544 = vld [vmem:[%s5 + $0x4] sm:$0xf]
      %v545 = vld [vmem:[%s5 + $0x8] sm:$0xf]
      %v546 = vld [vmem:[%s5 + $0xc] sm:$0xf]
      %v547 = vld [vmem:[%s6] sm:$0x1]
      %v549 = vperm.slane %v547, 0
      %v555 = vunpack.c.l.b16 %v543
      %v556 = vunpack.c.l.b16 %v544
      %v557 = vunpack.c.l.b16 %v545
      %v558 = vunpack.c.l.b16 %v546
      %v559 = vpack.c.b16 %v556, %v555
      %v560 = vpack.c.b16 %v558, %v557
      %vm563 = vcmask 261120
      %v565 = vsel %vm563, %v542, 0
      %567 = vmatpush.bf16.msra.mxu0 0
      %568 = vmatpush.bf16.msra.mxu0 0
      %569 = vmatpush.bf16.msra.mxu0 0
      %570 = vmatpush.bf16.msra.mxu0 0
      %571 = vmatpush.bf16.msra.mxu0 0
      %572 = vmatpush.bf16.msra.mxu0 0
      %573 = vmatpush.bf16.msra.mxu0 %v560
      %574 = vmatpush.bf16.msra.mxu0 %v559
      %575 = vmatmul.bf16.gmra.mxu0 %v565
      %v576 = vpop.f32.mrf.mxu0
      %v577 = vadd.f32 %v549, %v576
      %v578 = vpop.f32.mrf.mxu0
      %v579 = vadd.f32 %v549, %v578
      %580 = vdwg.mxu0
      %vm583 = vcmask 1040384
      %v584 = vrot.slane %v577, 7
      %v585 = vrot.slane %v579, 7
      %v586 = vsel %vm583, %v584, %v585
      %v590 = vadd.f32 %v317, %v584
      %v591 = vadd.f32 %v318, %v586
      %v592 = vadd.f32 %v319, %v585
      %vm593 = vcmask 130049
      %594 = vst.msk [vmem:[%s314 - $0x1] sm:$0xfe] %vm593, %v590
      %595 = vst.msk [vmem:[%s314 + $0x7] sm:$0xff] %vm334, %v591
      %vm596 = vcmask 122880
      %597 = vst.msk [vmem:[%s314 + $0xf] sm:$0x1] %vm596, %v592
      %s598 = smul.u32 2, %s23
      %p599 = scmp.lt.s32.totalorder %s22, 1
      %s600 = scalar_select %p599, %s22, 1
      %p601 = scmp.lt.s32.totalorder %s598, 1
      %s602 = scalar_select %p601, %s598, 1
      %s603 = smul.addr %s600, 2
      %s604 = sadd.s32 %s602, %s603
      %s605 = smul.addr %s604, 8
      %s606 = scalar_lea.vmem %s7, %s605
      // Predicated region
      $region49: #{_lambda_.12} parent=47 // pred_check
        %p607 = pneg %p204
      $region50: #{_lambda_.12} parent=47 // pred_check_branch
        %609 = sbr.rel (%p607) target = $region52
      $region51: #{_lambda_.12} parent=47 // pred_region
        %s610 = smul.u32 2, %s23
      $region52: #{_lambda_.12} parent=47 // pred_fallthru
        _
    $region48: #{_lambda_.12} parent=5 // pred_fallthru
      _
    %p611 = scmp.le.s32.totalorder 2, %s13
    // Predicated region
    $region53: #{_lambda_.12} parent=5 // pred_check
      %p612 = pneg %p611
    $region54: #{_lambda_.12} parent=5 // pred_check_branch
      %614 = sbr.rel (%p612) target = $region56
    $region55: #{_lambda_.12} parent=5 // pred_region
      %s615 = ssub.s32 %s13, 2
      // Predicated region
      $region57: #{_lambda_.12} parent=55 // pred_check
        %p616 = pneg %p210
      $region58: #{_lambda_.12} parent=55 // pred_check_branch
        %618 = sbr.rel (%p616) target = $region60
      $region59: #{_lambda_.12} parent=55 // pred_region
        %s619 = smul.u32 2, %s25
        %p620 = scmp.lt.s32.totalorder %s24, 1
        %s621 = scalar_select %p620, %s24, 1
        %p622 = scmp.lt.s32.totalorder %s619, 1
        %s623 = scalar_select %p622, %s619, 1
        %s624 = smul.addr %s621, 2
        %s625 = sadd.s32 %s623, %s624
        %s626 = smul.addr %s625, 8
        %s627 = scalar_lea.vmem %s7, %s626
      $region60: #{_lambda_.12} parent=55 // pred_fallthru
        _
    $region56: #{_lambda_.12} parent=5 // pred_fallthru
      _
  $region6: #{_lambda_.12} parent=0 // loop_footer
    %s17 = sadd.s32 1, %s13
  $region7: #{_lambda_.12} parent=0 // loop_footer_branch
    %12 = sbr.rel target = $region3
  $region8: #{_lambda_.12} parent=0 // loop_exit
    _

// kernel: _lambda_.14
$region0: #{_lambda_.14}
  #allocation0 [shape = 'u32[]', space=smem, size = 0x4, offset = 0x4, fixed_abs, tag = 'smem constant byte address 0x4 - core index']
  #allocation1 [shape = 'u32[72,128]{1,0:T(1,128)}', space=vmem, size = 0x9000, scoped, tag = 'internal scratch']
  %s0 = inlined_call_operand.vmem [shape: f32[2,1,18,16], index: 0, kind: input, shape index: {}]
  %s1 = inlined_call_operand.vmem [shape: bf16[16,32], index: 1, kind: input, shape index: {}]
  %s2 = inlined_call_operand.vmem [shape: f32[1,32], index: 2, kind: input, shape index: {}]
  %s3 = inlined_call_operand.vmem [shape: f32[3,1,32], index: 3, kind: input, shape index: {}]
  %s4 = inlined_call_operand.vmem [shape: f32[1,32], index: 4, kind: input, shape index: {}]
  %s5 = inlined_call_operand.vmem [shape: bf16[32,16], index: 5, kind: input, shape index: {}]
  %s6 = inlined_call_operand.vmem [shape: f32[1,16], index: 6, kind: input, shape index: {}]
  %s7 = inlined_call_operand.vmem [shape: f32[2,16,16], index: 7, kind: output, shape index: {}]
  %s8 = sld [smem:[#allocation0]]
  $region61: #{_lambda_.14} parent=0
    _
  %s10 = ssub.s32 1, %s8
  %s11 = scalar_select 0, %s10, %s8
  loop: start=0, step=1, limit=4
  $region2: #{_lambda_.14} parent=0 // loop_pre_header
    _
  $region3: #{_lambda_.14} parent=0 // loop_header
    %s13 = sphi 0, %s17
    %p14 = scmp.ge.s32.totalorder %s13, 4
    %s20 = sphi 0, %s32
    %s21 = sphi 0, %s28
    %s22 = sphi 0, %s20
    %s23 = sphi 0, %s21
    %s24 = sphi 0, %s22
    %s25 = sphi 0, %s23
    %s37 = sphi 0, %s39
    %s40 = sphi 0, %s37
    %s41 = sphi 0, %s40
    %s57 = sphi 0, %s41
    %s61 = sphi 0, %s61
    %s63 = sphi 0, %s61
    %s64 = sphi 0, %s63
    %s78 = sphi 0, %s64
    %s82 = sphi 0, %s82
    %s84 = sphi 0, %s82
    %s85 = sphi 0, %s84
    %s99 = sphi 0, %s85
    %s103 = sphi 0, %s103
    %s105 = sphi 0, %s103
    %s106 = sphi 0, %s105
    %s120 = sphi 0, %s106
    %s124 = sphi 0, %s124
    %s126 = sphi 0, %s124
    %s127 = sphi 0, %s126
    %s141 = sphi 0, %s127
    %s145 = sphi 0, %s145
    %s147 = sphi 0, %s145
    %s148 = sphi 0, %s147
    %s162 = sphi 0, %s148
    %s166 = sphi 0, %s166
    %s168 = sphi 0, %s166
    %s169 = sphi 0, %s168
    %s183 = sphi 0, %s169
    %s191 = sphi 0, %s193
    %s194 = sphi 0, %s191
    %s195 = sphi 0, %s194
    %s211 = sphi 0, %s195
  $region4: #{_lambda_.14} parent=0 // loop_header_branch
    %16 = sbr.rel (%p14) target = $region8
  $region5: #{_lambda_.14} parent=0 // loop_body
    %s18 = ssub.s32 %s13, 1
    %s19 = ssub.s32 %s13, 2
    %s26 = sadd.s32 1, %s21
    %p27 = scmp.ge.s32.totalorder %s26, 1
    %s28 = scalar_select %p27, 0, %s26
    %s29 = sadd.s32 1, %s20
    %s30 = scalar_select %p27, %s29, %s20
    %p31 = scmp.ge.s32.totalorder %s30, 2
    %s32 = scalar_select %p31, 0, %s30
    %s33 = ssub.s32 %s20, %s32
    %s34 = ssub.s32 %s21, %s28
    %s35 = sor.u32 %s33, %s34
    %p36 = scmp.eq.s32.totalorder %s35, 0
    %s38 = sadd.s32 %s37, 1
    %s39 = scalar_select %p36, %s37, %s38
    %p42 = pneg %p36
    %p43 = scmp.eq.s32.totalorder %s13, 1
    %p44 = por %p42, %p43
    %p45 = scmp.ne.s32.totalorder %s37, %s40
    %p46 = scmp.eq.s32.totalorder %s13, 0
    %p47 = por %p45, %p46
    %p48 = scmp.ne.s32.totalorder %s37, %s40
    %p49 = scmp.eq.s32.totalorder %s18, 1
    %p50 = por %p48, %p49
    %p51 = scmp.ne.s32.totalorder %s40, %s41
    %p52 = scmp.eq.s32.totalorder %s18, 0
    %p53 = por %p51, %p52
    %p54 = scmp.ne.s32.totalorder %s40, %s41
    %p55 = scmp.eq.s32.totalorder %s19, 1
    %p56 = por %p54, %p55
    %p58 = scmp.ne.s32.totalorder %s41, %s57
    %p59 = scmp.eq.s32.totalorder %s19, 0
    %p60 = por %p58, %p59
    %s62 = sadd.s32 %s61, 1
    %p65 = scmp.eq.s32.totalorder %s13, 1
    %p66 = scmp.ne.s32.totalorder %s61, %s63
    %p67 = scmp.eq.s32.totalorder %s13, 0
    %p68 = por %p66, %p67
    %p69 = scmp.ne.s32.totalorder %s61, %s63
    %p70 = scmp.eq.s32.totalorder %s18, 1
    %p71 = por %p69, %p70
    %p72 = scmp.ne.s32.totalorder %s63, %s64
    %p73 = scmp.eq.s32.totalorder %s18, 0
    %p74 = por %p72, %p73
    %p75 = scmp.ne.s32.totalorder %s63, %s64
    %p76 = scmp.eq.s32.totalorder %s19, 1
    %p77 = por %p75, %p76
    %p79 = scmp.ne.s32.totalorder %s64, %s78
    %p80 = scmp.eq.s32.totalorder %s19, 0
    %p81 = por %p79, %p80
    %s83 = sadd.s32 %s82, 1
    %p86 = scmp.eq.s32.totalorder %s13, 1
    %p87 = scmp.ne.s32.totalorder %s82, %s84
    %p88 = scmp.eq.s32.totalorder %s13, 0
    %p89 = por %p87, %p88
    %p90 = scmp.ne.s32.totalorder %s82, %s84
    %p91 = scmp.eq.s32.totalorder %s18, 1
    %p92 = por %p90, %p91
    %p93 = scmp.ne.s32.totalorder %s84, %s85
    %p94 = scmp.eq.s32.totalorder %s18, 0
    %p95 = por %p93, %p94
    %p96 = scmp.ne.s32.totalorder %s84, %s85
    %p97 = scmp.eq.s32.totalorder %s19, 1
    %p98 = por %p96, %p97
    %p100 = scmp.ne.s32.totalorder %s85, %s99
    %p101 = scmp.eq.s32.totalorder %s19, 0
    %p102 = por %p100, %p101
    %s104 = sadd.s32 %s103, 1
    %p107 = scmp.eq.s32.totalorder %s13, 1
    %p108 = scmp.ne.s32.totalorder %s103, %s105
    %p109 = scmp.eq.s32.totalorder %s13, 0
    %p110 = por %p108, %p109
    %p111 = scmp.ne.s32.totalorder %s103, %s105
    %p112 = scmp.eq.s32.totalorder %s18, 1
    %p113 = por %p111, %p112
    %p114 = scmp.ne.s32.totalorder %s105, %s106
    %p115 = scmp.eq.s32.totalorder %s18, 0
    %p116 = por %p114, %p115
    %p117 = scmp.ne.s32.totalorder %s105, %s106
    %p118 = scmp.eq.s32.totalorder %s19, 1
    %p119 = por %p117, %p118
    %p121 = scmp.ne.s32.totalorder %s106, %s120
    %p122 = scmp.eq.s32.totalorder %s19, 0
    %p123 = por %p121, %p122
    %s125 = sadd.s32 %s124, 1
    %p128 = scmp.eq.s32.totalorder %s13, 1
    %p129 = scmp.ne.s32.totalorder %s124, %s126
    %p130 = scmp.eq.s32.totalorder %s13, 0
    %p131 = por %p129, %p130
    %p132 = scmp.ne.s32.totalorder %s124, %s126
    %p133 = scmp.eq.s32.totalorder %s18, 1
    %p134 = por %p132, %p133
    %p135 = scmp.ne.s32.totalorder %s126, %s127
    %p136 = scmp.eq.s32.totalorder %s18, 0
    %p137 = por %p135, %p136
    %p138 = scmp.ne.s32.totalorder %s126, %s127
    %p139 = scmp.eq.s32.totalorder %s19, 1
    %p140 = por %p138, %p139
    %p142 = scmp.ne.s32.totalorder %s127, %s141
    %p143 = scmp.eq.s32.totalorder %s19, 0
    %p144 = por %p142, %p143
    %s146 = sadd.s32 %s145, 1
    %p149 = scmp.eq.s32.totalorder %s13, 1
    %p150 = scmp.ne.s32.totalorder %s145, %s147
    %p151 = scmp.eq.s32.totalorder %s13, 0
    %p152 = por %p150, %p151
    %p153 = scmp.ne.s32.totalorder %s145, %s147
    %p154 = scmp.eq.s32.totalorder %s18, 1
    %p155 = por %p153, %p154
    %p156 = scmp.ne.s32.totalorder %s147, %s148
    %p157 = scmp.eq.s32.totalorder %s18, 0
    %p158 = por %p156, %p157
    %p159 = scmp.ne.s32.totalorder %s147, %s148
    %p160 = scmp.eq.s32.totalorder %s19, 1
    %p161 = por %p159, %p160
    %p163 = scmp.ne.s32.totalorder %s148, %s162
    %p164 = scmp.eq.s32.totalorder %s19, 0
    %p165 = por %p163, %p164
    %s167 = sadd.s32 %s166, 1
    %p170 = scmp.eq.s32.totalorder %s13, 1
    %p171 = scmp.ne.s32.totalorder %s166, %s168
    %p172 = scmp.eq.s32.totalorder %s13, 0
    %p173 = por %p171, %p172
    %p174 = scmp.ne.s32.totalorder %s166, %s168
    %p175 = scmp.eq.s32.totalorder %s18, 1
    %p176 = por %p174, %p175
    %p177 = scmp.ne.s32.totalorder %s168, %s169
    %p178 = scmp.eq.s32.totalorder %s18, 0
    %p179 = por %p177, %p178
    %p180 = scmp.ne.s32.totalorder %s168, %s169
    %p181 = scmp.eq.s32.totalorder %s19, 1
    %p182 = por %p180, %p181
    %p184 = scmp.ne.s32.totalorder %s169, %s183
    %p185 = scmp.eq.s32.totalorder %s19, 0
    %p186 = por %p184, %p185
    %s187 = ssub.s32 %s20, %s32
    %s188 = ssub.s32 %s21, %s28
    %s189 = sor.u32 %s187, %s188
    %p190 = scmp.eq.s32.totalorder %s189, 0
    %s192 = sadd.s32 %s191, 1
    %s193 = scalar_select %p190, %s191, %s192
    %p196 = pneg %p190
    %p197 = scmp.eq.s32.totalorder %s13, 1
    %p198 = por %p196, %p197
    %p199 = scmp.ne.s32.totalorder %s191, %s194
    %p200 = scmp.eq.s32.totalorder %s13, 0
    %p201 = por %p199, %p200
    %p202 = scmp.ne.s32.totalorder %s191, %s194
    %p203 = scmp.eq.s32.totalorder %s18, 1
    %p204 = por %p202, %p203
    %p205 = scmp.ne.s32.totalorder %s194, %s195
    %p206 = scmp.eq.s32.totalorder %s18, 0
    %p207 = por %p205, %p206
    %p208 = scmp.ne.s32.totalorder %s194, %s195
    %p209 = scmp.eq.s32.totalorder %s19, 1
    %p210 = por %p208, %p209
    %p212 = scmp.ne.s32.totalorder %s195, %s211
    %p213 = scmp.eq.s32.totalorder %s19, 0
    %p214 = por %p212, %p213
    %p215 = scmp.le.s32.totalorder 1, %s13
    %p216 = scmp.lt.s32.totalorder %s13, 3
    %p217 = pnand %p215, %p216
    %p218 = pneg %p217
    // Predicated region
    $region9: #{_lambda_.14} parent=5 // pred_check
      _
    $region10: #{_lambda_.14} parent=5 // pred_check_branch
      %220 = sbr.rel (%p217) target = $region12
    $region11: #{_lambda_.14} parent=5 // pred_region
      %s221 = ssub.s32 %s13, 1
      // Predicated region
      $region13: #{_lambda_.14} parent=11 // pred_check
        %p222 = pneg %p74
      $region14: #{_lambda_.14} parent=11 // pred_check_branch
        %224 = sbr.rel (%p222) target = $region16
      $region15: #{_lambda_.14} parent=11 // pred_region
        _
      $region16: #{_lambda_.14} parent=11 // pred_fallthru
        _
      // Predicated region
      $region17: #{_lambda_.14} parent=11 // pred_check
        %p225 = pneg %p95
      $region18: #{_lambda_.14} parent=11 // pred_check_branch
        %227 = sbr.rel (%p225) target = $region20
      $region19: #{_lambda_.14} parent=11 // pred_region
        _
      $region20: #{_lambda_.14} parent=11 // pred_fallthru
        _
      // Predicated region
      $region21: #{_lambda_.14} parent=11 // pred_check
        %p228 = pneg %p116
      $region22: #{_lambda_.14} parent=11 // pred_check_branch
        %230 = sbr.rel (%p228) target = $region24
      $region23: #{_lambda_.14} parent=11 // pred_region
        _
      $region24: #{_lambda_.14} parent=11 // pred_fallthru
        _
      // Predicated region
      $region25: #{_lambda_.14} parent=11 // pred_check
        %p231 = pneg %p137
      $region26: #{_lambda_.14} parent=11 // pred_check_branch
        %233 = sbr.rel (%p231) target = $region28
      $region27: #{_lambda_.14} parent=11 // pred_region
        _
      $region28: #{_lambda_.14} parent=11 // pred_fallthru
        _
      // Predicated region
      $region29: #{_lambda_.14} parent=11 // pred_check
        %p234 = pneg %p158
      $region30: #{_lambda_.14} parent=11 // pred_check_branch
        %236 = sbr.rel (%p234) target = $region32
      $region31: #{_lambda_.14} parent=11 // pred_region
        _
      $region32: #{_lambda_.14} parent=11 // pred_fallthru
        _
      // Predicated region
      $region33: #{_lambda_.14} parent=11 // pred_check
        %p237 = pneg %p179
      $region34: #{_lambda_.14} parent=11 // pred_check_branch
        %239 = sbr.rel (%p237) target = $region36
      $region35: #{_lambda_.14} parent=11 // pred_region
        _
      $region36: #{_lambda_.14} parent=11 // pred_fallthru
        _
    $region12: #{_lambda_.14} parent=5 // pred_fallthru
      _
    %p240 = scmp.lt.s32.totalorder %s13, 2
    // Predicated region
    $region37: #{_lambda_.14} parent=5 // pred_check
      %p241 = pneg %p240
    $region38: #{_lambda_.14} parent=5 // pred_check_branch
      %243 = sbr.rel (%p241) target = $region40
    $region39: #{_lambda_.14} parent=5 // pred_region
      // Predicated region
      $region41: #{_lambda_.14} parent=39 // pred_check
        %p244 = pneg %p47
      $region42: #{_lambda_.14} parent=39 // pred_check_branch
        %246 = sbr.rel (%p244) target = $region44
      $region43: #{_lambda_.14} parent=39 // pred_region
        %p247 = scmp.lt.s32.totalorder %s20, 1
        %s248 = scalar_select %p247, %s20, 1
        %p249 = scmp.lt.s32.totalorder %s21, 0
        %s250 = scalar_select %p249, %s21, 0
        %s251 = smul.addr %s250, 3
        %s252 = smul.addr %s248, 3
        %s253 = sadd.s32 %s251, %s252
        %s254 = smul.addr %s253, 8
        %s255 = scalar_lea.vmem %s0, %s254
      $region44: #{_lambda_.14} parent=39 // pred_fallthru
        _
    $region40: #{_lambda_.14} parent=5 // pred_fallthru
      _
    %p256 = scmp.le.s32.totalorder 1, %s13
    %p257 = scmp.lt.s32.totalorder %s13, 3
    %p258 = pnand %p256, %p257
    %p259 = pneg %p258
    // Predicated region
    $region45: #{_lambda_.14} parent=5 // pred_check
      _
    $region46: #{_lambda_.14} parent=5 // pred_check_branch
      %261 = sbr.rel (%p258) target = $region48
    $region47: #{_lambda_.14} parent=5 // pred_region
      %s262 = ssub.s32 %s13, 1
      %p263 = scmp.lt.s32.totalorder %s22, 1
      %s264 = scalar_select %p263, %s22, 1
      %p265 = scmp.lt.s32.totalorder %s23, 0
      %s266 = scalar_select %p265, %s23, 0
      %s267 = smul.addr %s266, 3
      %s268 = smul.addr %s264, 3
      %s269 = sadd.s32 %s267, %s268
      %s270 = smul.addr %s269, 8
      %s271 = scalar_lea.vmem %s0, %s270
      %p272 = pneg %p53
      %p273 = pneg %p50
      %p274 = pneg %p74
      %p275 = pneg %p71
      %p276 = pneg %p95
      %p277 = pneg %p92
      %p278 = pneg %p116
      %p279 = pneg %p113
      %p280 = pneg %p137
      %p281 = pneg %p134
      %p282 = pneg %p158
      %p283 = pneg %p155
      %p284 = pneg %p179
      %p285 = pneg %p176
      %p286 = pneg %p207
      %p287 = pneg %p204
      %s288 = smul.u32 2, %s23
      %p289 = scmp.lt.s32.totalorder %s22, 1
      %s290 = scalar_select %p289, %s22, 1
      %p291 = scmp.lt.s32.totalorder %s288, 1
      %s292 = scalar_select %p291, %s288, 1
      %s293 = smul.addr %s290, 2
      %s294 = sadd.s32 %s292, %s293
      %s295 = smul.addr %s294, 8
      %s296 = scalar_lea.vmem %s7, %s295
      %p297 = scmp.lt.s32.totalorder %s22, 1
      %s298 = scalar_select %p297, %s22, 1
      %p299 = scmp.lt.s32.totalorder %s23, 0
      %s300 = scalar_select %p299, %s23, 0
      %s301 = smul.addr %s300, 3
      %s302 = smul.addr %s298, 3
      %s303 = sadd.s32 %s301, %s302
      %s304 = smul.addr %s303, 8
      %s305 = scalar_lea.vmem %s0, %s304
      %s306 = smul.u32 2, %s23
      %p307 = scmp.lt.s32.totalorder %s22, 1
      %s308 = scalar_select %p307, %s22, 1
      %p309 = scmp.lt.s32.totalorder %s306, 1
      %s310 = scalar_select %p309, %s306, 1
      %s311 = smul.addr %s308, 2
      %s312 = sadd.s32 %s310, %s311
      %s313 = smul.addr %s312, 8
      %s314 = scalar_lea.vmem %s7, %s313
      %s315 = smul.u32 2, %s23
      %v317 = vld [vmem:[%s305] sm:$0xff]
      %v318 = vld [vmem:[%s305 + $0x8] sm:$0xff]
      %v319 = vld [vmem:[%s305 + $0x10] sm:$0x3]
      %v320 = vpack.c.bf16 %v318, %v317
      %v321 = vpack.c.bf16 %v319, %v319
      %v322 = vld [vmem:[%s1] sm:$0xf]
      %v323 = vld [vmem:[%s1 + $0x4] sm:$0xf]
      %v324 = vld [vmem:[%s2] sm:$0x1]
      %v326 = vperm.slane %v324, 0
      %v330 = vunpack.c.l.b16 %v322
      %v331 = vunpack.c.l.b16 %v323
      %v332 = vpack.c.b16 %v331, %v330
      %vm334 = vcmask 130048
      %v336 = vsel %vm334, %v320, 0
      %v339 = vsel %vm334, %v321, 0
      %341 = vmatpush.bf16.msra.mxu0 0
      %342 = vmatpush.bf16.msra.mxu0 0
      %343 = vmatpush.bf16.msra.mxu0 0
      %344 = vmatpush.bf16.msra.mxu0 0
      %345 = vmatpush.bf16.msra.mxu0 0
      %346 = vmatpush.bf16.msra.mxu0 0
      %347 = vmatpush.bf16.msra.mxu0 0
      %348 = vmatpush.bf16.msra.mxu0 %v332
      %349 = vmatmul.bf16.gmra.mxu0 %v336
      %v350 = vpop.f32.mrf.mxu0
      %v351 = vadd.f32 %v326, %v350
      %v352 = vpop.f32.mrf.mxu0
      %v353 = vadd.f32 %v326, %v352
      %354 = vmatmul.bf16.gmra.mxu0 %v339
      %v355 = vpop.f32.mrf.mxu0
      %v356 = vadd.f32 %v326, %v355
      %v357 = vpop.f32.mrf.mxu0
      %358 = vdwg.mxu0
      %v359 = vxor.u32 %v351, 2147483648
      %v360 = vxor.u32 %v353, 2147483648
      %v361 = vxor.u32 %v356, 2147483648
      %v362 = vmul.f32 %v359, 1.442695
      %v363 = vpow.pop %v362
      %v364 = vmul.f32 %v360, 1.442695
      %v365 = vpow.pop %v364
      %v366 = vmul.f32 %v361, 1.442695
      %v367 = vpow.pop %v366
      %v368 = vadd.f32 %v363, 1.0
      %v369 = vadd.f32 %v365, 1.0
      %v370 = vadd.f32 %v367, 1.0
      %v371 = vrcp.pop %v368
      %v372 = vmul.f32 %v368, %v371
      %v373 = vsub.f32 1.0, %v372
      %v374 = vmul.f32 %v371, %v373
      %v375 = vadd.f32 %v371, %v374
      %vm376 = vweird.f32 %v368
      %vm377 = vweird.f32 %v371
      %vm378 = vmor %vm376, %vm377
      %v379 = vsel %vm378, %v371, %v375
      %v380 = vand.u32 2147483647, %v368
      %vm381 = vcmp.eq.f32.partialorder %v380, 8.507059e+37
      %v382 = vand.u32 %v368, 2147483648
      %v383 = vor.u32 1.1754944e-38, %v382
      %v384 = vsel %vm381, %v383, %v379
      %v385 = vmul.f32 1.0, %v384
      %v386 = vrcp.pop %v369
      %v387 = vmul.f32 %v369, %v386
      %v388 = vsub.f32 1.0, %v387
      %v389 = vmul.f32 %v386, %v388
      %v390 = vadd.f32 %v386, %v389
      %vm391 = vweird.f32 %v369
      %vm392 = vweird.f32 %v386
      %vm393 = vmor %vm391, %vm392
      %v394 = vsel %vm393, %v386, %v390
      %v395 = vand.u32 2147483647, %v369
      %vm396 = vcmp.eq.f32.partialorder %v395, 8.507059e+37
      %v397 = vand.u32 %v369, 2147483648
      %v398 = vor.u32 1.1754944e-38, %v397
      %v399 = vsel %vm396, %v398, %v394
      %v400 = vmul.f32 1.0, %v399
      %v401 = vrcp.pop %v370
      %v402 = vmul.f32 %v370, %v401
      %v403 = vsub.f32 1.0, %v402
      %v404 = vmul.f32 %v401, %v403
      %v405 = vadd.f32 %v401, %v404
      %vm406 = vweird.f32 %v370
      %vm407 = vweird.f32 %v401
      %vm408 = vmor %vm406, %vm407
      %v409 = vsel %vm408, %v401, %v405
      %v410 = vand.u32 2147483647, %v370
      %vm411 = vcmp.eq.f32.partialorder %v410, 8.507059e+37
      %v412 = vand.u32 %v370, 2147483648
      %v413 = vor.u32 1.1754944e-38, %v412
      %v414 = vsel %vm411, %v413, %v409
      %v415 = vmul.f32 1.0, %v414
      %v416 = vmul.f32 %v351, %v385
      %v417 = vmul.f32 %v353, %v400
      %v418 = vmul.f32 %v356, %v415
      %s419 = smul.u32 %s23, 16
      %v420 = vlaneseq
      %v421 = vshrl.u32 %v420, 7
      %v422 = vadd.s32 %v421, 8
      %v423 = vadd.s32 %v421, 16
      %v424 = vstv %s419
      %v425 = vadd.s32 %v424, %v421
      %v426 = vadd.s32 %v424, %v422
      %v427 = vadd.s32 %v424, %v423
      %vm428 = vcmp.ge.s32.totalorder %v425, 1
      %vm429 = vcmp.ge.s32.totalorder %v426, 1
      %vm430 = vcmp.ge.s32.totalorder %v427, 1
      %vm431 = vcmp.lt.s32.totalorder %v425, 17
      %vm432 = vcmp.lt.s32.totalorder %v426, 17
      %vm433 = vcmp.lt.s32.totalorder %v427, 17
      %vm434 = vmand %vm428, %vm431
      %vm435 = vmand %vm429, %vm432
      %vm436 = vmand %vm430, %vm433
      %v437 = vsel %vm434, 1, 0
      %v438 = vsel %vm435, 1, 0
      %v439 = vsel %vm436, 1, 0
      %vm440 = vcmp.eq.s32.totalorder %v437, 1
      %vm441 = vcmp.eq.s32.totalorder %v438, 1
      %vm442 = vcmp.eq.s32.totalorder %v439, 1
      %v443 = vsel %vm440, %v416, 0.0
      %v444 = vsel %vm441, %v417, 0.0
      %v445 = vsel %vm442, %v418, 0.0
      %v446 = vld [vmem:[%s3] sm:$0x1]
      %v448 = vperm.slane %v446, 0
      %v450 = vmul.f32 %v443, %v448
      %v451 = vmul.f32 %v444, %v448
      %v452 = vadd.f32 %v450, 0.0
      %v453 = vadd.f32 %v451, 0.0
      %s454 = scalar_lea.vmem %s3, 1
      %v455 = vld [vmem:[%s454] sm:$0x1]
      %v457 = vperm.slane %v455, 0
      %v459 = vmul.f32 %v443, %v457
      %v460 = vmul.f32 %v444, %v457
      %v461 = vmul.f32 %v445, %v457
      %vm465 = vcmask 1046528
      %v466 = vrot.slane %v459, 1
      %v467 = vrot.slane %v460, 1
      %v468 = vsel %vm465, %v466, %v467
      %v469 = vrot.slane %v461, 1
      %v470 = vsel %vm465, %v467, %v469
      %v473 = vadd.f32 %v452, %v468
      %v474 = vadd.f32 %v453, %v470
      %s475 = scalar_lea.vmem %s3, 2
      %v476 = vld [vmem:[%s475] sm:$0x1]
      %v478 = vperm.slane %v476, 0
      %v480 = vmul.f32 %v443, %v478
      %v481 = vmul.f32 %v444, %v478
      %v482 = vmul.f32 %v445, %v478
      %vm486 = vcmask 1045504
      %v487 = vrot.slane %v480, 2
      %v488 = vrot.slane %v481, 2
      %v489 = vsel %vm486, %v487, %v488
      %v490 = vrot.slane %v482, 2
      %v491 = vsel %vm486, %v488, %v490
      %v494 = vadd.f32 %v473, %v489
      %v495 = vadd.f32 %v474, %v491
      %v496 = vld [vmem:[%s4] sm:$0x1]
      %v498 = vperm.slane %v496, 0
      %v500 = vadd.f32 %v494, %v498
      %v501 = vadd.f32 %v495, %v498
      %v502 = vxor.u32 %v500, 2147483648
      %v503 = vxor.u32 %v501, 2147483648
      %v504 = vmul.f32 %v502, 1.442695
      %v505 = vpow.pop %v504
      %v506 = vmul.f32 %v503, 1.442695
      %v507 = vpow.pop %v506
      %v508 = vadd.f32 %v505, 1.0
      %v509 = vadd.f32 %v507, 1.0
      %v510 = vrcp.pop %v508
      %v511 = vmul.f32 %v508, %v510
      %v512 = vsub.f32 1.0, %v511
      %v513 = vmul.f32 %v510, %v512
      %v514 = vadd.f32 %v510, %v513
      %vm515 = vweird.f32 %v508
      %vm516 = vweird.f32 %v510
      %vm517 = vmor %vm515, %vm516
      %v518 = vsel %vm517, %v510, %v514
      %v519 = vand.u32 2147483647, %v508
      %vm520 = vcmp.eq.f32.partialorder %v519, 8.507059e+37
      %v521 = vand.u32 %v508, 2147483648
      %v522 = vor.u32 1.1754944e-38, %v521
      %v523 = vsel %vm520, %v522, %v518
      %v524 = vmul.f32 1.0, %v523
      %v525 = vrcp.pop %v509
      %v526 = vmul.f32 %v509, %v525
      %v527 = vsub.f32 1.0, %v526
      %v528 = vmul.f32 %v525, %v527
      %v529 = vadd.f32 %v525, %v528
      %vm530 = vweird.f32 %v509
      %vm531 = vweird.f32 %v525
      %vm532 = vmor %vm530, %vm531
      %v533 = vsel %vm532, %v525, %v529
      %v534 = vand.u32 2147483647, %v509
      %vm535 = vcmp.eq.f32.partialorder %v534, 8.507059e+37
      %v536 = vand.u32 %v509, 2147483648
      %v537 = vor.u32 1.1754944e-38, %v536
      %v538 = vsel %vm535, %v537, %v533
      %v539 = vmul.f32 1.0, %v538
      %v540 = vmul.f32 %v500, %v524
      %v541 = vmul.f32 %v501, %v539
      %v542 = vpack.c.bf16 %v541, %v540
      %v543 = vld [vmem:[%s5] sm:$0xf]
      %v544 = vld [vmem:[%s5 + $0x4] sm:$0xf]
      %v545 = vld [vmem:[%s5 + $0x8] sm:$0xf]
      %v546 = vld [vmem:[%s5 + $0xc] sm:$0xf]
      %v547 = vld [vmem:[%s6] sm:$0x1]
      %v549 = vperm.slane %v547, 0
      %v555 = vunpack.c.l.b16 %v543
      %v556 = vunpack.c.l.b16 %v544
      %v557 = vunpack.c.l.b16 %v545
      %v558 = vunpack.c.l.b16 %v546
      %v559 = vpack.c.b16 %v556, %v555
      %v560 = vpack.c.b16 %v558, %v557
      %vm563 = vcmask 261120
      %v565 = vsel %vm563, %v542, 0
      %567 = vmatpush.bf16.msra.mxu0 0
      %568 = vmatpush.bf16.msra.mxu0 0
      %569 = vmatpush.bf16.msra.mxu0 0
      %570 = vmatpush.bf16.msra.mxu0 0
      %571 = vmatpush.bf16.msra.mxu0 0
      %572 = vmatpush.bf16.msra.mxu0 0
      %573 = vmatpush.bf16.msra.mxu0 %v560
      %574 = vmatpush.bf16.msra.mxu0 %v559
      %575 = vmatmul.bf16.gmra.mxu0 %v565
      %v576 = vpop.f32.mrf.mxu0
      %v577 = vadd.f32 %v549, %v576
      %v578 = vpop.f32.mrf.mxu0
      %v579 = vadd.f32 %v549, %v578
      %580 = vdwg.mxu0
      %v581 = vtanh.pop %v577
      %v582 = vtanh.pop %v579
      %vm585 = vcmask 1040384
      %v586 = vrot.slane %v581, 7
      %v587 = vrot.slane %v582, 7
      %v588 = vsel %vm585, %v586, %v587
      %v592 = vadd.f32 %v317, %v586
      %v593 = vadd.f32 %v318, %v588
      %v594 = vadd.f32 %v319, %v587
      %vm595 = vcmask 130049
      %596 = vst.msk [vmem:[%s314 - $0x1] sm:$0xfe] %vm595, %v592
      %597 = vst.msk [vmem:[%s314 + $0x7] sm:$0xff] %vm334, %v593
      %vm598 = vcmask 122880
      %599 = vst.msk [vmem:[%s314 + $0xf] sm:$0x1] %vm598, %v594
      %s600 = smul.u32 2, %s23
      %p601 = scmp.lt.s32.totalorder %s22, 1
      %s602 = scalar_select %p601, %s22, 1
      %p603 = scmp.lt.s32.totalorder %s600, 1
      %s604 = scalar_select %p603, %s600, 1
      %s605 = smul.addr %s602, 2
      %s606 = sadd.s32 %s604, %s605
      %s607 = smul.addr %s606, 8
      %s608 = scalar_lea.vmem %s7, %s607
      // Predicated region
      $region49: #{_lambda_.14} parent=47 // pred_check
        %p609 = pneg %p204
      $region50: #{_lambda_.14} parent=47 // pred_check_branch
        %611 = sbr.rel (%p609) target = $region52
      $region51: #{_lambda_.14} parent=47 // pred_region
        %s612 = smul.u32 2, %s23
      $region52: #{_lambda_.14} parent=47 // pred_fallthru
        _
    $region48: #{_lambda_.14} parent=5 // pred_fallthru
      _
    %p613 = scmp.le.s32.totalorder 2, %s13
    // Predicated region
    $region53: #{_lambda_.14} parent=5 // pred_check
      %p614 = pneg %p613
    $region54: #{_lambda_.14} parent=5 // pred_check_branch
      %616 = sbr.rel (%p614) target = $region56
    $region55: #{_lambda_.14} parent=5 // pred_region
      %s617 = ssub.s32 %s13, 2
      // Predicated region
      $region57: #{_lambda_.14} parent=55 // pred_check
        %p618 = pneg %p210
      $region58: #{_lambda_.14} parent=55 // pred_check_branch
        %620 = sbr.rel (%p618) target = $region60
      $region59: #{_lambda_.14} parent=55 // pred_region
        %s621 = smul.u32 2, %s25
        %p622 = scmp.lt.s32.totalorder %s24, 1
        %s623 = scalar_select %p622, %s24, 1
        %p624 = scmp.lt.s32.totalorder %s621, 1
        %s625 = scalar_select %p624, %s621, 1
        %s626 = smul.addr %s623, 2
        %s627 = sadd.s32 %s625, %s626
        %s628 = smul.addr %s627, 8
        %s629 = scalar_lea.vmem %s7, %s628
      $region60: #{_lambda_.14} parent=55 // pred_fallthru
        _
    $region56: #{_lambda_.14} parent=5 // pred_fallthru
      _
  $region6: #{_lambda_.14} parent=0 // loop_footer
    %s17 = sadd.s32 1, %s13
  $region7: #{_lambda_.14} parent=0 // loop_footer_branch
    %12 = sbr.rel target = $region3
  $region8: #{_lambda_.14} parent=0 // loop_exit
    _

// kernel: _lambda_.13
$region0: #{_lambda_.13}
  #allocation0 [shape = 'u32[]', space=smem, size = 0x4, offset = 0x4, fixed_abs, tag = 'smem constant byte address 0x4 - core index']
  #allocation1 [shape = 'u32[72,128]{1,0:T(1,128)}', space=vmem, size = 0x9000, scoped, tag = 'internal scratch']
  %s0 = inlined_call_operand.vmem [shape: f32[2,1,20,16], index: 0, kind: input, shape index: {}]
  %s1 = inlined_call_operand.vmem [shape: bf16[16,32], index: 1, kind: input, shape index: {}]
  %s2 = inlined_call_operand.vmem [shape: f32[1,32], index: 2, kind: input, shape index: {}]
  %s3 = inlined_call_operand.vmem [shape: f32[3,1,32], index: 3, kind: input, shape index: {}]
  %s4 = inlined_call_operand.vmem [shape: f32[1,32], index: 4, kind: input, shape index: {}]
  %s5 = inlined_call_operand.vmem [shape: bf16[32,16], index: 5, kind: input, shape index: {}]
  %s6 = inlined_call_operand.vmem [shape: f32[1,16], index: 6, kind: input, shape index: {}]
  %s7 = inlined_call_operand.vmem [shape: f32[2,16,16], index: 7, kind: output, shape index: {}]
  %s8 = sld [smem:[#allocation0]]
  $region61: #{_lambda_.13} parent=0
    _
  %s10 = ssub.s32 1, %s8
  %s11 = scalar_select 0, %s10, %s8
  loop: start=0, step=1, limit=4
  $region2: #{_lambda_.13} parent=0 // loop_pre_header
    _
  $region3: #{_lambda_.13} parent=0 // loop_header
    %s13 = sphi 0, %s17
    %p14 = scmp.ge.s32.totalorder %s13, 4
    %s20 = sphi 0, %s32
    %s21 = sphi 0, %s28
    %s22 = sphi 0, %s20
    %s23 = sphi 0, %s21
    %s24 = sphi 0, %s22
    %s25 = sphi 0, %s23
    %s37 = sphi 0, %s39
    %s40 = sphi 0, %s37
    %s41 = sphi 0, %s40
    %s57 = sphi 0, %s41
    %s61 = sphi 0, %s61
    %s63 = sphi 0, %s61
    %s64 = sphi 0, %s63
    %s78 = sphi 0, %s64
    %s82 = sphi 0, %s82
    %s84 = sphi 0, %s82
    %s85 = sphi 0, %s84
    %s99 = sphi 0, %s85
    %s103 = sphi 0, %s103
    %s105 = sphi 0, %s103
    %s106 = sphi 0, %s105
    %s120 = sphi 0, %s106
    %s124 = sphi 0, %s124
    %s126 = sphi 0, %s124
    %s127 = sphi 0, %s126
    %s141 = sphi 0, %s127
    %s145 = sphi 0, %s145
    %s147 = sphi 0, %s145
    %s148 = sphi 0, %s147
    %s162 = sphi 0, %s148
    %s166 = sphi 0, %s166
    %s168 = sphi 0, %s166
    %s169 = sphi 0, %s168
    %s183 = sphi 0, %s169
    %s191 = sphi 0, %s193
    %s194 = sphi 0, %s191
    %s195 = sphi 0, %s194
    %s211 = sphi 0, %s195
  $region4: #{_lambda_.13} parent=0 // loop_header_branch
    %16 = sbr.rel (%p14) target = $region8
  $region5: #{_lambda_.13} parent=0 // loop_body
    %s18 = ssub.s32 %s13, 1
    %s19 = ssub.s32 %s13, 2
    %s26 = sadd.s32 1, %s21
    %p27 = scmp.ge.s32.totalorder %s26, 1
    %s28 = scalar_select %p27, 0, %s26
    %s29 = sadd.s32 1, %s20
    %s30 = scalar_select %p27, %s29, %s20
    %p31 = scmp.ge.s32.totalorder %s30, 2
    %s32 = scalar_select %p31, 0, %s30
    %s33 = ssub.s32 %s20, %s32
    %s34 = ssub.s32 %s21, %s28
    %s35 = sor.u32 %s33, %s34
    %p36 = scmp.eq.s32.totalorder %s35, 0
    %s38 = sadd.s32 %s37, 1
    %s39 = scalar_select %p36, %s37, %s38
    %p42 = pneg %p36
    %p43 = scmp.eq.s32.totalorder %s13, 1
    %p44 = por %p42, %p43
    %p45 = scmp.ne.s32.totalorder %s37, %s40
    %p46 = scmp.eq.s32.totalorder %s13, 0
    %p47 = por %p45, %p46
    %p48 = scmp.ne.s32.totalorder %s37, %s40
    %p49 = scmp.eq.s32.totalorder %s18, 1
    %p50 = por %p48, %p49
    %p51 = scmp.ne.s32.totalorder %s40, %s41
    %p52 = scmp.eq.s32.totalorder %s18, 0
    %p53 = por %p51, %p52
    %p54 = scmp.ne.s32.totalorder %s40, %s41
    %p55 = scmp.eq.s32.totalorder %s19, 1
    %p56 = por %p54, %p55
    %p58 = scmp.ne.s32.totalorder %s41, %s57
    %p59 = scmp.eq.s32.totalorder %s19, 0
    %p60 = por %p58, %p59
    %s62 = sadd.s32 %s61, 1
    %p65 = scmp.eq.s32.totalorder %s13, 1
    %p66 = scmp.ne.s32.totalorder %s61, %s63
    %p67 = scmp.eq.s32.totalorder %s13, 0
    %p68 = por %p66, %p67
    %p69 = scmp.ne.s32.totalorder %s61, %s63
    %p70 = scmp.eq.s32.totalorder %s18, 1
    %p71 = por %p69, %p70
    %p72 = scmp.ne.s32.totalorder %s63, %s64
    %p73 = scmp.eq.s32.totalorder %s18, 0
    %p74 = por %p72, %p73
    %p75 = scmp.ne.s32.totalorder %s63, %s64
    %p76 = scmp.eq.s32.totalorder %s19, 1
    %p77 = por %p75, %p76
    %p79 = scmp.ne.s32.totalorder %s64, %s78
    %p80 = scmp.eq.s32.totalorder %s19, 0
    %p81 = por %p79, %p80
    %s83 = sadd.s32 %s82, 1
    %p86 = scmp.eq.s32.totalorder %s13, 1
    %p87 = scmp.ne.s32.totalorder %s82, %s84
    %p88 = scmp.eq.s32.totalorder %s13, 0
    %p89 = por %p87, %p88
    %p90 = scmp.ne.s32.totalorder %s82, %s84
    %p91 = scmp.eq.s32.totalorder %s18, 1
    %p92 = por %p90, %p91
    %p93 = scmp.ne.s32.totalorder %s84, %s85
    %p94 = scmp.eq.s32.totalorder %s18, 0
    %p95 = por %p93, %p94
    %p96 = scmp.ne.s32.totalorder %s84, %s85
    %p97 = scmp.eq.s32.totalorder %s19, 1
    %p98 = por %p96, %p97
    %p100 = scmp.ne.s32.totalorder %s85, %s99
    %p101 = scmp.eq.s32.totalorder %s19, 0
    %p102 = por %p100, %p101
    %s104 = sadd.s32 %s103, 1
    %p107 = scmp.eq.s32.totalorder %s13, 1
    %p108 = scmp.ne.s32.totalorder %s103, %s105
    %p109 = scmp.eq.s32.totalorder %s13, 0
    %p110 = por %p108, %p109
    %p111 = scmp.ne.s32.totalorder %s103, %s105
    %p112 = scmp.eq.s32.totalorder %s18, 1
    %p113 = por %p111, %p112
    %p114 = scmp.ne.s32.totalorder %s105, %s106
    %p115 = scmp.eq.s32.totalorder %s18, 0
    %p116 = por %p114, %p115
    %p117 = scmp.ne.s32.totalorder %s105, %s106
    %p118 = scmp.eq.s32.totalorder %s19, 1
    %p119 = por %p117, %p118
    %p121 = scmp.ne.s32.totalorder %s106, %s120
    %p122 = scmp.eq.s32.totalorder %s19, 0
    %p123 = por %p121, %p122
    %s125 = sadd.s32 %s124, 1
    %p128 = scmp.eq.s32.totalorder %s13, 1
    %p129 = scmp.ne.s32.totalorder %s124, %s126
    %p130 = scmp.eq.s32.totalorder %s13, 0
    %p131 = por %p129, %p130
    %p132 = scmp.ne.s32.totalorder %s124, %s126
    %p133 = scmp.eq.s32.totalorder %s18, 1
    %p134 = por %p132, %p133
    %p135 = scmp.ne.s32.totalorder %s126, %s127
    %p136 = scmp.eq.s32.totalorder %s18, 0
    %p137 = por %p135, %p136
    %p138 = scmp.ne.s32.totalorder %s126, %s127
    %p139 = scmp.eq.s32.totalorder %s19, 1
    %p140 = por %p138, %p139
    %p142 = scmp.ne.s32.totalorder %s127, %s141
    %p143 = scmp.eq.s32.totalorder %s19, 0
    %p144 = por %p142, %p143
    %s146 = sadd.s32 %s145, 1
    %p149 = scmp.eq.s32.totalorder %s13, 1
    %p150 = scmp.ne.s32.totalorder %s145, %s147
    %p151 = scmp.eq.s32.totalorder %s13, 0
    %p152 = por %p150, %p151
    %p153 = scmp.ne.s32.totalorder %s145, %s147
    %p154 = scmp.eq.s32.totalorder %s18, 1
    %p155 = por %p153, %p154
    %p156 = scmp.ne.s32.totalorder %s147, %s148
    %p157 = scmp.eq.s32.totalorder %s18, 0
    %p158 = por %p156, %p157
    %p159 = scmp.ne.s32.totalorder %s147, %s148
    %p160 = scmp.eq.s32.totalorder %s19, 1
    %p161 = por %p159, %p160
    %p163 = scmp.ne.s32.totalorder %s148, %s162
    %p164 = scmp.eq.s32.totalorder %s19, 0
    %p165 = por %p163, %p164
    %s167 = sadd.s32 %s166, 1
    %p170 = scmp.eq.s32.totalorder %s13, 1
    %p171 = scmp.ne.s32.totalorder %s166, %s168
    %p172 = scmp.eq.s32.totalorder %s13, 0
    %p173 = por %p171, %p172
    %p174 = scmp.ne.s32.totalorder %s166, %s168
    %p175 = scmp.eq.s32.totalorder %s18, 1
    %p176 = por %p174, %p175
    %p177 = scmp.ne.s32.totalorder %s168, %s169
    %p178 = scmp.eq.s32.totalorder %s18, 0
    %p179 = por %p177, %p178
    %p180 = scmp.ne.s32.totalorder %s168, %s169
    %p181 = scmp.eq.s32.totalorder %s19, 1
    %p182 = por %p180, %p181
    %p184 = scmp.ne.s32.totalorder %s169, %s183
    %p185 = scmp.eq.s32.totalorder %s19, 0
    %p186 = por %p184, %p185
    %s187 = ssub.s32 %s20, %s32
    %s188 = ssub.s32 %s21, %s28
    %s189 = sor.u32 %s187, %s188
    %p190 = scmp.eq.s32.totalorder %s189, 0
    %s192 = sadd.s32 %s191, 1
    %s193 = scalar_select %p190, %s191, %s192
    %p196 = pneg %p190
    %p197 = scmp.eq.s32.totalorder %s13, 1
    %p198 = por %p196, %p197
    %p199 = scmp.ne.s32.totalorder %s191, %s194
    %p200 = scmp.eq.s32.totalorder %s13, 0
    %p201 = por %p199, %p200
    %p202 = scmp.ne.s32.totalorder %s191, %s194
    %p203 = scmp.eq.s32.totalorder %s18, 1
    %p204 = por %p202, %p203
    %p205 = scmp.ne.s32.totalorder %s194, %s195
    %p206 = scmp.eq.s32.totalorder %s18, 0
    %p207 = por %p205, %p206
    %p208 = scmp.ne.s32.totalorder %s194, %s195
    %p209 = scmp.eq.s32.totalorder %s19, 1
    %p210 = por %p208, %p209
    %p212 = scmp.ne.s32.totalorder %s195, %s211
    %p213 = scmp.eq.s32.totalorder %s19, 0
    %p214 = por %p212, %p213
    %p215 = scmp.le.s32.totalorder 1, %s13
    %p216 = scmp.lt.s32.totalorder %s13, 3
    %p217 = pnand %p215, %p216
    %p218 = pneg %p217
    // Predicated region
    $region9: #{_lambda_.13} parent=5 // pred_check
      _
    $region10: #{_lambda_.13} parent=5 // pred_check_branch
      %220 = sbr.rel (%p217) target = $region12
    $region11: #{_lambda_.13} parent=5 // pred_region
      %s221 = ssub.s32 %s13, 1
      // Predicated region
      $region13: #{_lambda_.13} parent=11 // pred_check
        %p222 = pneg %p74
      $region14: #{_lambda_.13} parent=11 // pred_check_branch
        %224 = sbr.rel (%p222) target = $region16
      $region15: #{_lambda_.13} parent=11 // pred_region
        _
      $region16: #{_lambda_.13} parent=11 // pred_fallthru
        _
      // Predicated region
      $region17: #{_lambda_.13} parent=11 // pred_check
        %p225 = pneg %p95
      $region18: #{_lambda_.13} parent=11 // pred_check_branch
        %227 = sbr.rel (%p225) target = $region20
      $region19: #{_lambda_.13} parent=11 // pred_region
        _
      $region20: #{_lambda_.13} parent=11 // pred_fallthru
        _
      // Predicated region
      $region21: #{_lambda_.13} parent=11 // pred_check
        %p228 = pneg %p116
      $region22: #{_lambda_.13} parent=11 // pred_check_branch
        %230 = sbr.rel (%p228) target = $region24
      $region23: #{_lambda_.13} parent=11 // pred_region
        _
      $region24: #{_lambda_.13} parent=11 // pred_fallthru
        _
      // Predicated region
      $region25: #{_lambda_.13} parent=11 // pred_check
        %p231 = pneg %p137
      $region26: #{_lambda_.13} parent=11 // pred_check_branch
        %233 = sbr.rel (%p231) target = $region28
      $region27: #{_lambda_.13} parent=11 // pred_region
        _
      $region28: #{_lambda_.13} parent=11 // pred_fallthru
        _
      // Predicated region
      $region29: #{_lambda_.13} parent=11 // pred_check
        %p234 = pneg %p158
      $region30: #{_lambda_.13} parent=11 // pred_check_branch
        %236 = sbr.rel (%p234) target = $region32
      $region31: #{_lambda_.13} parent=11 // pred_region
        _
      $region32: #{_lambda_.13} parent=11 // pred_fallthru
        _
      // Predicated region
      $region33: #{_lambda_.13} parent=11 // pred_check
        %p237 = pneg %p179
      $region34: #{_lambda_.13} parent=11 // pred_check_branch
        %239 = sbr.rel (%p237) target = $region36
      $region35: #{_lambda_.13} parent=11 // pred_region
        _
      $region36: #{_lambda_.13} parent=11 // pred_fallthru
        _
    $region12: #{_lambda_.13} parent=5 // pred_fallthru
      _
    %p240 = scmp.lt.s32.totalorder %s13, 2
    // Predicated region
    $region37: #{_lambda_.13} parent=5 // pred_check
      %p241 = pneg %p240
    $region38: #{_lambda_.13} parent=5 // pred_check_branch
      %243 = sbr.rel (%p241) target = $region40
    $region39: #{_lambda_.13} parent=5 // pred_region
      // Predicated region
      $region41: #{_lambda_.13} parent=39 // pred_check
        %p244 = pneg %p47
      $region42: #{_lambda_.13} parent=39 // pred_check_branch
        %246 = sbr.rel (%p244) target = $region44
      $region43: #{_lambda_.13} parent=39 // pred_region
        %p247 = scmp.lt.s32.totalorder %s20, 1
        %s248 = scalar_select %p247, %s20, 1
        %p249 = scmp.lt.s32.totalorder %s21, 0
        %s250 = scalar_select %p249, %s21, 0
        %s251 = smul.addr %s250, 3
        %s252 = smul.addr %s248, 3
        %s253 = sadd.s32 %s251, %s252
        %s254 = smul.addr %s253, 8
        %s255 = scalar_lea.vmem %s0, %s254
      $region44: #{_lambda_.13} parent=39 // pred_fallthru
        _
    $region40: #{_lambda_.13} parent=5 // pred_fallthru
      _
    %p256 = scmp.le.s32.totalorder 1, %s13
    %p257 = scmp.lt.s32.totalorder %s13, 3
    %p258 = pnand %p256, %p257
    %p259 = pneg %p258
    // Predicated region
    $region45: #{_lambda_.13} parent=5 // pred_check
      _
    $region46: #{_lambda_.13} parent=5 // pred_check_branch
      %261 = sbr.rel (%p258) target = $region48
    $region47: #{_lambda_.13} parent=5 // pred_region
      %s262 = ssub.s32 %s13, 1
      %p263 = scmp.lt.s32.totalorder %s22, 1
      %s264 = scalar_select %p263, %s22, 1
      %p265 = scmp.lt.s32.totalorder %s23, 0
      %s266 = scalar_select %p265, %s23, 0
      %s267 = smul.addr %s266, 3
      %s268 = smul.addr %s264, 3
      %s269 = sadd.s32 %s267, %s268
      %s270 = smul.addr %s269, 8
      %s271 = scalar_lea.vmem %s0, %s270
      %p272 = pneg %p53
      %p273 = pneg %p50
      %p274 = pneg %p74
      %p275 = pneg %p71
      %p276 = pneg %p95
      %p277 = pneg %p92
      %p278 = pneg %p116
      %p279 = pneg %p113
      %p280 = pneg %p137
      %p281 = pneg %p134
      %p282 = pneg %p158
      %p283 = pneg %p155
      %p284 = pneg %p179
      %p285 = pneg %p176
      %p286 = pneg %p207
      %p287 = pneg %p204
      %s288 = smul.u32 2, %s23
      %p289 = scmp.lt.s32.totalorder %s22, 1
      %s290 = scalar_select %p289, %s22, 1
      %p291 = scmp.lt.s32.totalorder %s288, 1
      %s292 = scalar_select %p291, %s288, 1
      %s293 = smul.addr %s290, 2
      %s294 = sadd.s32 %s292, %s293
      %s295 = smul.addr %s294, 8
      %s296 = scalar_lea.vmem %s7, %s295
      %p297 = scmp.lt.s32.totalorder %s22, 1
      %s298 = scalar_select %p297, %s22, 1
      %p299 = scmp.lt.s32.totalorder %s23, 0
      %s300 = scalar_select %p299, %s23, 0
      %s301 = smul.addr %s300, 3
      %s302 = smul.addr %s298, 3
      %s303 = sadd.s32 %s301, %s302
      %s304 = smul.addr %s303, 8
      %s305 = scalar_lea.vmem %s0, %s304
      %s306 = smul.u32 2, %s23
      %p307 = scmp.lt.s32.totalorder %s22, 1
      %s308 = scalar_select %p307, %s22, 1
      %p309 = scmp.lt.s32.totalorder %s306, 1
      %s310 = scalar_select %p309, %s306, 1
      %s311 = smul.addr %s308, 2
      %s312 = sadd.s32 %s310, %s311
      %s313 = smul.addr %s312, 8
      %s314 = scalar_lea.vmem %s7, %s313
      %s315 = smul.u32 2, %s23
      %v317 = vld [vmem:[%s305] sm:$0xff]
      %v318 = vld [vmem:[%s305 + $0x8] sm:$0xff]
      %v319 = vld [vmem:[%s305 + $0x10] sm:$0xf]
      %v320 = vpack.c.bf16 %v318, %v317
      %v321 = vpack.c.bf16 %v319, %v319
      %v322 = vld [vmem:[%s1] sm:$0xf]
      %v323 = vld [vmem:[%s1 + $0x4] sm:$0xf]
      %v324 = vld [vmem:[%s2] sm:$0x1]
      %v326 = vperm.slane %v324, 0
      %v330 = vunpack.c.l.b16 %v322
      %v331 = vunpack.c.l.b16 %v323
      %v332 = vpack.c.b16 %v331, %v330
      %vm334 = vcmask 130048
      %v336 = vsel %vm334, %v320, 0
      %v339 = vsel %vm334, %v321, 0
      %341 = vmatpush.bf16.msra.mxu0 0
      %342 = vmatpush.bf16.msra.mxu0 0
      %343 = vmatpush.bf16.msra.mxu0 0
      %344 = vmatpush.bf16.msra.mxu0 0
      %345 = vmatpush.bf16.msra.mxu0 0
      %346 = vmatpush.bf16.msra.mxu0 0
      %347 = vmatpush.bf16.msra.mxu0 0
      %348 = vmatpush.bf16.msra.mxu0 %v332
      %349 = vmatmul.bf16.gmra.mxu0 %v336
      %v350 = vpop.f32.mrf.mxu0
      %v351 = vadd.f32 %v326, %v350
      %v352 = vpop.f32.mrf.mxu0
      %v353 = vadd.f32 %v326, %v352
      %354 = vmatmul.bf16.gmra.mxu0 %v339
      %v355 = vpop.f32.mrf.mxu0
      %v356 = vadd.f32 %v326, %v355
      %v357 = vpop.f32.mrf.mxu0
      %358 = vdwg.mxu0
      %v359 = vxor.u32 %v351, 2147483648
      %v360 = vxor.u32 %v353, 2147483648
      %v361 = vxor.u32 %v356, 2147483648
      %v362 = vmul.f32 %v359, 1.442695
      %v363 = vpow.pop %v362
      %v364 = vmul.f32 %v360, 1.442695
      %v365 = vpow.pop %v364
      %v366 = vmul.f32 %v361, 1.442695
      %v367 = vpow.pop %v366
      %v368 = vadd.f32 %v363, 1.0
      %v369 = vadd.f32 %v365, 1.0
      %v370 = vadd.f32 %v367, 1.0
      %v371 = vrcp.pop %v368
      %v372 = vmul.f32 %v368, %v371
      %v373 = vsub.f32 1.0, %v372
      %v374 = vmul.f32 %v371, %v373
      %v375 = vadd.f32 %v371, %v374
      %vm376 = vweird.f32 %v368
      %vm377 = vweird.f32 %v371
      %vm378 = vmor %vm376, %vm377
      %v379 = vsel %vm378, %v371, %v375
      %v380 = vand.u32 2147483647, %v368
      %vm381 = vcmp.eq.f32.partialorder %v380, 8.507059e+37
      %v382 = vand.u32 %v368, 2147483648
      %v383 = vor.u32 1.1754944e-38, %v382
      %v384 = vsel %vm381, %v383, %v379
      %v385 = vmul.f32 1.0, %v384
      %v386 = vrcp.pop %v369
      %v387 = vmul.f32 %v369, %v386
      %v388 = vsub.f32 1.0, %v387
      %v389 = vmul.f32 %v386, %v388
      %v390 = vadd.f32 %v386, %v389
      %vm391 = vweird.f32 %v369
      %vm392 = vweird.f32 %v386
      %vm393 = vmor %vm391, %vm392
      %v394 = vsel %vm393, %v386, %v390
      %v395 = vand.u32 2147483647, %v369
      %vm396 = vcmp.eq.f32.partialorder %v395, 8.507059e+37
      %v397 = vand.u32 %v369, 2147483648
      %v398 = vor.u32 1.1754944e-38, %v397
      %v399 = vsel %vm396, %v398, %v394
      %v400 = vmul.f32 1.0, %v399
      %v401 = vrcp.pop %v370
      %v402 = vmul.f32 %v370, %v401
      %v403 = vsub.f32 1.0, %v402
      %v404 = vmul.f32 %v401, %v403
      %v405 = vadd.f32 %v401, %v404
      %vm406 = vweird.f32 %v370
      %vm407 = vweird.f32 %v401
      %vm408 = vmor %vm406, %vm407
      %v409 = vsel %vm408, %v401, %v405
      %v410 = vand.u32 2147483647, %v370
      %vm411 = vcmp.eq.f32.partialorder %v410, 8.507059e+37
      %v412 = vand.u32 %v370, 2147483648
      %v413 = vor.u32 1.1754944e-38, %v412
      %v414 = vsel %vm411, %v413, %v409
      %v415 = vmul.f32 1.0, %v414
      %v416 = vmul.f32 %v351, %v385
      %v417 = vmul.f32 %v353, %v400
      %v418 = vmul.f32 %v356, %v415
      %s419 = smul.u32 %s23, 16
      %v420 = vlaneseq
      %v421 = vshrl.u32 %v420, 7
      %v422 = vadd.s32 %v421, 8
      %v423 = vadd.s32 %v421, 16
      %v424 = vstv %s419
      %v425 = vadd.s32 %v424, %v421
      %v426 = vadd.s32 %v424, %v422
      %v427 = vadd.s32 %v424, %v423
      %vm428 = vcmp.ge.s32.totalorder %v425, 2
      %vm429 = vcmp.ge.s32.totalorder %v426, 2
      %vm430 = vcmp.ge.s32.totalorder %v427, 2
      %vm431 = vcmp.lt.s32.totalorder %v425, 18
      %vm432 = vcmp.lt.s32.totalorder %v426, 18
      %vm433 = vcmp.lt.s32.totalorder %v427, 18
      %vm434 = vmand %vm428, %vm431
      %vm435 = vmand %vm429, %vm432
      %vm436 = vmand %vm430, %vm433
      %v437 = vsel %vm434, 1, 0
      %v438 = vsel %vm435, 1, 0
      %v439 = vsel %vm436, 1, 0
      %vm440 = vcmp.eq.s32.totalorder %v437, 1
      %vm441 = vcmp.eq.s32.totalorder %v438, 1
      %vm442 = vcmp.eq.s32.totalorder %v439, 1
      %v443 = vsel %vm440, %v416, 0.0
      %v444 = vsel %vm441, %v417, 0.0
      %v445 = vsel %vm442, %v418, 0.0
      %v446 = vld [vmem:[%s3] sm:$0x1]
      %v448 = vperm.slane %v446, 0
      %v450 = vmul.f32 %v443, %v448
      %v451 = vmul.f32 %v444, %v448
      %v452 = vadd.f32 %v450, 0.0
      %v453 = vadd.f32 %v451, 0.0
      %s454 = scalar_lea.vmem %s3, 1
      %v455 = vld [vmem:[%s454] sm:$0x1]
      %v457 = vperm.slane %v455, 0
      %v459 = vmul.f32 %v443, %v457
      %v460 = vmul.f32 %v444, %v457
      %v461 = vmul.f32 %v445, %v457
      %vm465 = vcmask 1045504
      %v466 = vrot.slane %v459, 2
      %v467 = vrot.slane %v460, 2
      %v468 = vsel %vm465, %v466, %v467
      %v469 = vrot.slane %v461, 2
      %v470 = vsel %vm465, %v467, %v469
      %v473 = vadd.f32 %v452, %v468
      %v474 = vadd.f32 %v453, %v470
      %s475 = scalar_lea.vmem %s3, 2
      %v476 = vld [vmem:[%s475] sm:$0x1]
      %v478 = vperm.slane %v476, 0
      %v480 = vmul.f32 %v443, %v478
      %v481 = vmul.f32 %v444, %v478
      %v482 = vmul.f32 %v445, %v478
      %vm486 = vcmask 1043456
      %v487 = vrot.slane %v480, 4
      %v488 = vrot.slane %v481, 4
      %v489 = vsel %vm486, %v487, %v488
      %v490 = vrot.slane %v482, 4
      %v491 = vsel %vm486, %v488, %v490
      %v494 = vadd.f32 %v473, %v489
      %v495 = vadd.f32 %v474, %v491
      %v496 = vld [vmem:[%s4] sm:$0x1]
      %v498 = vperm.slane %v496, 0
      %v500 = vadd.f32 %v494, %v498
      %v501 = vadd.f32 %v495, %v498
      %v502 = vxor.u32 %v500, 2147483648
      %v503 = vxor.u32 %v501, 2147483648
      %v504 = vmul.f32 %v502, 1.442695
      %v505 = vpow.pop %v504
      %v506 = vmul.f32 %v503, 1.442695
      %v507 = vpow.pop %v506
      %v508 = vadd.f32 %v505, 1.0
      %v509 = vadd.f32 %v507, 1.0
      %v510 = vrcp.pop %v508
      %v511 = vmul.f32 %v508, %v510
      %v512 = vsub.f32 1.0, %v511
      %v513 = vmul.f32 %v510, %v512
      %v514 = vadd.f32 %v510, %v513
      %vm515 = vweird.f32 %v508
      %vm516 = vweird.f32 %v510
      %vm517 = vmor %vm515, %vm516
      %v518 = vsel %vm517, %v510, %v514
      %v519 = vand.u32 2147483647, %v508
      %vm520 = vcmp.eq.f32.partialorder %v519, 8.507059e+37
      %v521 = vand.u32 %v508, 2147483648
      %v522 = vor.u32 1.1754944e-38, %v521
      %v523 = vsel %vm520, %v522, %v518
      %v524 = vmul.f32 1.0, %v523
      %v525 = vrcp.pop %v509
      %v526 = vmul.f32 %v509, %v525
      %v527 = vsub.f32 1.0, %v526
      %v528 = vmul.f32 %v525, %v527
      %v529 = vadd.f32 %v525, %v528
      %vm530 = vweird.f32 %v509
      %vm531 = vweird.f32 %v525
      %vm532 = vmor %vm530, %vm531
      %v533 = vsel %vm532, %v525, %v529
      %v534 = vand.u32 2147483647, %v509
      %vm535 = vcmp.eq.f32.partialorder %v534, 8.507059e+37
      %v536 = vand.u32 %v509, 2147483648
      %v537 = vor.u32 1.1754944e-38, %v536
      %v538 = vsel %vm535, %v537, %v533
      %v539 = vmul.f32 1.0, %v538
      %v540 = vmul.f32 %v500, %v524
      %v541 = vmul.f32 %v501, %v539
      %v542 = vpack.c.bf16 %v541, %v540
      %v543 = vld [vmem:[%s5] sm:$0xf]
      %v544 = vld [vmem:[%s5 + $0x4] sm:$0xf]
      %v545 = vld [vmem:[%s5 + $0x8] sm:$0xf]
      %v546 = vld [vmem:[%s5 + $0xc] sm:$0xf]
      %v547 = vld [vmem:[%s6] sm:$0x1]
      %v549 = vperm.slane %v547, 0
      %v555 = vunpack.c.l.b16 %v543
      %v556 = vunpack.c.l.b16 %v544
      %v557 = vunpack.c.l.b16 %v545
      %v558 = vunpack.c.l.b16 %v546
      %v559 = vpack.c.b16 %v556, %v555
      %v560 = vpack.c.b16 %v558, %v557
      %vm563 = vcmask 261120
      %v565 = vsel %vm563, %v542, 0
      %567 = vmatpush.bf16.msra.mxu0 0
      %568 = vmatpush.bf16.msra.mxu0 0
      %569 = vmatpush.bf16.msra.mxu0 0
      %570 = vmatpush.bf16.msra.mxu0 0
      %571 = vmatpush.bf16.msra.mxu0 0
      %572 = vmatpush.bf16.msra.mxu0 0
      %573 = vmatpush.bf16.msra.mxu0 %v560
      %574 = vmatpush.bf16.msra.mxu0 %v559
      %575 = vmatmul.bf16.gmra.mxu0 %v565
      %v576 = vpop.f32.mrf.mxu0
      %v577 = vadd.f32 %v549, %v576
      %v578 = vpop.f32.mrf.mxu0
      %v579 = vadd.f32 %v549, %v578
      %580 = vdwg.mxu0
      %vm583 = vcmask 1041408
      %v584 = vrot.slane %v577, 6
      %v585 = vrot.slane %v579, 6
      %v586 = vsel %vm583, %v584, %v585
      %v590 = vadd.f32 %v317, %v584
      %v591 = vadd.f32 %v318, %v586
      %v592 = vadd.f32 %v319, %v585
      %vm593 = vcmask 130050
      %594 = vst.msk [vmem:[%s314 - $0x2] sm:$0xfc] %vm593, %v590
      %595 = vst.msk [vmem:[%s314 + $0x6] sm:$0xff] %vm334, %v591
      %vm596 = vcmask 123904
      %597 = vst.msk [vmem:[%s314 + $0xe] sm:$0x3] %vm596, %v592
      %s598 = smul.u32 2, %s23
      %p599 = scmp.lt.s32.totalorder %s22, 1
      %s600 = scalar_select %p599, %s22, 1
      %p601 = scmp.lt.s32.totalorder %s598, 1
      %s602 = scalar_select %p601, %s598, 1
      %s603 = smul.addr %s600, 2
      %s604 = sadd.s32 %s602, %s603
      %s605 = smul.addr %s604, 8
      %s606 = scalar_lea.vmem %s7, %s605
      // Predicated region
      $region49: #{_lambda_.13} parent=47 // pred_check
        %p607 = pneg %p204
      $region50: #{_lambda_.13} parent=47 // pred_check_branch
        %609 = sbr.rel (%p607) target = $region52
      $region51: #{_lambda_.13} parent=47 // pred_region
        %s610 = smul.u32 2, %s23
      $region52: #{_lambda_.13} parent=47 // pred_fallthru
        _
    $region48: #{_lambda_.13} parent=5 // pred_fallthru
      _
    %p611 = scmp.le.s32.totalorder 2, %s13
    // Predicated region
    $region53: #{_lambda_.13} parent=5 // pred_check
      %p612 = pneg %p611
    $region54: #{_lambda_.13} parent=5 // pred_check_branch
      %614 = sbr.rel (%p612) target = $region56
    $region55: #{_lambda_.13} parent=5 // pred_region
      %s615 = ssub.s32 %s13, 2
      // Predicated region
      $region57: #{_lambda_.13} parent=55 // pred_check
        %p616 = pneg %p210
      $region58: #{_lambda_.13} parent=55 // pred_check_branch
        %618 = sbr.rel (%p616) target = $region60
      $region59: #{_lambda_.13} parent=55 // pred_region
        %s619 = smul.u32 2, %s25
        %p620 = scmp.lt.s32.totalorder %s24, 1
        %s621 = scalar_select %p620, %s24, 1
        %p622 = scmp.lt.s32.totalorder %s619, 1
        %s623 = scalar_select %p622, %s619, 1
        %s624 = smul.addr %s621, 2
        %s625 = sadd.s32 %s623, %s624
        %s626 = smul.addr %s625, 8
        %s627 = scalar_lea.vmem %s7, %s626
      $region60: #{_lambda_.13} parent=55 // pred_fallthru
        _
    $region56: #{_lambda_.13} parent=5 // pred_fallthru
      _
  $region6: #{_lambda_.13} parent=0 // loop_footer
    %s17 = sadd.s32 1, %s13
  $region7: #{_lambda_.13} parent=0 // loop_footer_branch
    %12 = sbr.rel target = $region3
  $region8: #{_lambda_.13} parent=0 // loop_exit
    _

// kernel: _lambda_.15
$region0: #{_lambda_.15}
  #allocation0 [shape = 'u32[]', space=smem, size = 0x4, offset = 0x4, fixed_abs, tag = 'smem constant byte address 0x4 - core index']
  #allocation1 [shape = 'u32[72,128]{1,0:T(1,128)}', space=vmem, size = 0x9000, scoped, tag = 'internal scratch']
  %s0 = inlined_call_operand.vmem [shape: f32[32,16], index: 0, kind: input, shape index: {}]
  %s1 = inlined_call_operand.vmem [shape: bf16[16,16], index: 1, kind: input, shape index: {}]
  %s2 = inlined_call_operand.vmem [shape: f32[1,16], index: 2, kind: input, shape index: {}]
  %s3 = inlined_call_operand.vmem [shape: f32[32,16], index: 3, kind: input, shape index: {}]
  %s4 = inlined_call_operand.vmem [shape: f32[32,16], index: 4, kind: output, shape index: {0}]
  %s5 = inlined_call_operand.vmem [shape: f32[1,16], index: 5, kind: output, shape index: {1}]
  %s6 = inlined_call_operand.vmem [shape: f32[1,16], index: 6, kind: output, shape index: {2}]
  %7 = xla_tuple %s4, %s5, %s6
  %s8 = sld [smem:[#allocation0]]
  $region46: #{_lambda_.15} parent=0
    _
  %s10 = ssub.s32 1, %s8
  %s11 = scalar_select 0, %s10, %s8
  // Predicated region
  $region2: #{_lambda_.15} parent=0 // pred_check
    _
  $region3: #{_lambda_.15} parent=0 // pred_check_branch
    %13 = sbr.rel (0) target = $region5
  $region4: #{_lambda_.15} parent=0 // pred_region
    _
  $region5: #{_lambda_.15} parent=0 // pred_fallthru
    _
  // Predicated region
  $region6: #{_lambda_.15} parent=0 // pred_check
    _
  $region7: #{_lambda_.15} parent=0 // pred_check_branch
    %15 = sbr.rel (0) target = $region9
  $region8: #{_lambda_.15} parent=0 // pred_region
    _
  $region9: #{_lambda_.15} parent=0 // pred_fallthru
    _
  // Predicated region
  $region10: #{_lambda_.15} parent=0 // pred_check
    _
  $region11: #{_lambda_.15} parent=0 // pred_check_branch
    %17 = sbr.rel (0) target = $region13
  $region12: #{_lambda_.15} parent=0 // pred_region
    _
  $region13: #{_lambda_.15} parent=0 // pred_fallthru
    _
  // Predicated region
  $region14: #{_lambda_.15} parent=0 // pred_check
    _
  $region15: #{_lambda_.15} parent=0 // pred_check_branch
    %19 = sbr.rel (0) target = $region17
  $region16: #{_lambda_.15} parent=0 // pred_region
    _
  $region17: #{_lambda_.15} parent=0 // pred_fallthru
    _
  %p21 = scmp.eq.s32.totalorder 0, 0
  // Predicated region
  $region18: #{_lambda_.15} parent=0 // pred_check
    %p22 = pneg %p21
  $region19: #{_lambda_.15} parent=0 // pred_check_branch
    %24 = sbr.rel (%p22) target = $region21
  $region20: #{_lambda_.15} parent=0 // pred_region
    %vm25 = vcmask 122880
    %26 = vst.msk [vmem:[%s5] sm:$0x1] %vm25, 0.0
    %27 = vst.msk [vmem:[%s6] sm:$0x1] %vm25, 0.0
  $region21: #{_lambda_.15} parent=0 // pred_fallthru
    _
  %v28 = vld [vmem:[%s0] sm:$0xff]
  %v29 = vld [vmem:[%s0 + $0x8] sm:$0xff]
  %v30 = vld [vmem:[%s0 + $0x10] sm:$0xff]
  %v31 = vld [vmem:[%s0 + $0x18] sm:$0xff]
  %v32 = vpack.c.bf16 %v29, %v28
  %v33 = vpack.c.bf16 %v31, %v30
  %v34 = vld [vmem:[%s1] sm:$0xf]
  %v35 = vld [vmem:[%s1 + $0x4] sm:$0xf]
  %v38 = vunpack.c.l.b16 %v34
  %v39 = vunpack.c.l.b16 %v35
  %v40 = vpack.c.b16 %v39, %v38
  %vm41 = vcmask 130048
  %v43 = vsel %vm41, %v32, 0
  %v46 = vsel %vm41, %v33, 0
  %v49 = vsel %vm41, %v40, 0
  %51 = vmatpush.bf16.xpose.msra.mxu0 0
  %52 = vmatpush.bf16.xpose.msra.mxu0 0
  %53 = vmatpush.bf16.xpose.msra.mxu0 0
  %54 = vmatpush.bf16.xpose.msra.mxu0 0
  %55 = vmatpush.bf16.xpose.msra.mxu0 0
  %56 = vmatpush.bf16.xpose.msra.mxu0 0
  %57 = vmatpush.bf16.xpose.msra.mxu0 0
  %58 = vmatpush.bf16.xpose.msra.mxu0 %v49
  %59 = vmatmul.bf16.gmra.mxu0 %v43
  %v60 = vpop.f32.mrf.mxu0
  %v61 = vadd.f32 0.0, %v60
  %v62 = vpop.f32.mrf.mxu0
  %v63 = vadd.f32 0.0, %v62
  %64 = vmatmul.bf16.gmra.mxu0 %v46
  %v65 = vpop.f32.mrf.mxu0
  %v66 = vadd.f32 0.0, %v65
  %v67 = vpop.f32.mrf.mxu0
  %v68 = vadd.f32 0.0, %v67
  %69 = vdwg.mxu0
  %v70 = vmul.f32 %v61, 0.00990099
  %v71 = vmul.f32 %v63, 0.00990099
  %v72 = vmul.f32 %v66, 0.00990099
  %v73 = vmul.f32 %v68, 0.00990099
  %v74 = vld [vmem:[%s2] sm:$0x1]
  %v75 = vmul.f32 %v74, 0.004950495
  %v77 = vperm.slane %v75, 0
  %v79 = vsub.f32 %v70, %v77
  %v80 = vsub.f32 %v71, %v77
  %v81 = vsub.f32 %v72, %v77
  %v82 = vsub.f32 %v73, %v77
  %v83 = vsel %vm41, %v79, -inf
  %84 = vmax.xlane.f32.xlu0 %v83
  %v85 = vpop.xlane.xlu0 %84
  %v86 = vsel %vm41, %v80, -inf
  %87 = vmax.xlane.f32.xlu0 %v86
  %v88 = vpop.xlane.xlu0 %87
  %v89 = vsel %vm41, %v81, -inf
  %90 = vmax.xlane.f32.xlu0 %v89
  %v91 = vpop.xlane.xlu0 %90
  %v92 = vsel %vm41, %v82, -inf
  %93 = vmax.xlane.f32.xlu0 %v92
  %v94 = vpop.xlane.xlu0 %93
  %v95 = vsub.f32 %v79, %v85
  %v96 = vsub.f32 %v80, %v88
  %v97 = vsub.f32 %v81, %v91
  %v98 = vsub.f32 %v82, %v94
  %v99 = vmul.f32 %v95, 1.442695
  %v100 = vpow.pop %v99
  %v101 = vmul.f32 %v96, 1.442695
  %v102 = vpow.pop %v101
  %v103 = vmul.f32 %v97, 1.442695
  %v104 = vpow.pop %v103
  %v105 = vmul.f32 %v98, 1.442695
  %v106 = vpow.pop %v105
  %v107 = vsel %vm41, %v100, 0.0
  %108 = vadd.xlane.f32.xlu0 %v107
  %v109 = vpop.xlane.xlu0 %108
  %v110 = vsel %vm41, %v102, 0.0
  %111 = vadd.xlane.f32.xlu0 %v110
  %v112 = vpop.xlane.xlu0 %111
  %v113 = vsel %vm41, %v104, 0.0
  %114 = vadd.xlane.f32.xlu0 %v113
  %v115 = vpop.xlane.xlu0 %114
  %v116 = vsel %vm41, %v106, 0.0
  %117 = vadd.xlane.f32.xlu0 %v116
  %v118 = vpop.xlane.xlu0 %117
  %v119 = vrcp.pop %v109
  %v120 = vmul.f32 %v109, %v119
  %v121 = vsub.f32 1.0, %v120
  %v122 = vmul.f32 %v119, %v121
  %v123 = vadd.f32 %v119, %v122
  %vm124 = vweird.f32 %v109
  %vm125 = vweird.f32 %v119
  %vm126 = vmor %vm124, %vm125
  %v127 = vsel %vm126, %v119, %v123
  %v128 = vand.u32 2147483647, %v109
  %vm129 = vcmp.eq.f32.partialorder %v128, 8.507059e+37
  %v130 = vand.u32 %v109, 2147483648
  %v131 = vor.u32 1.1754944e-38, %v130
  %v132 = vsel %vm129, %v131, %v127
  %v133 = vmul.f32 %v100, %v132
  %v134 = vrcp.pop %v112
  %v135 = vmul.f32 %v112, %v134
  %v136 = vsub.f32 1.0, %v135
  %v137 = vmul.f32 %v134, %v136
  %v138 = vadd.f32 %v134, %v137
  %vm139 = vweird.f32 %v112
  %vm140 = vweird.f32 %v134
  %vm141 = vmor %vm139, %vm140
  %v142 = vsel %vm141, %v134, %v138
  %v143 = vand.u32 2147483647, %v112
  %vm144 = vcmp.eq.f32.partialorder %v143, 8.507059e+37
  %v145 = vand.u32 %v112, 2147483648
  %v146 = vor.u32 1.1754944e-38, %v145
  %v147 = vsel %vm144, %v146, %v142
  %v148 = vmul.f32 %v102, %v147
  %v149 = vrcp.pop %v115
  %v150 = vmul.f32 %v115, %v149
  %v151 = vsub.f32 1.0, %v150
  %v152 = vmul.f32 %v149, %v151
  %v153 = vadd.f32 %v149, %v152
  %vm154 = vweird.f32 %v115
  %vm155 = vweird.f32 %v149
  %vm156 = vmor %vm154, %vm155
  %v157 = vsel %vm156, %v149, %v153
  %v158 = vand.u32 2147483647, %v115
  %vm159 = vcmp.eq.f32.partialorder %v158, 8.507059e+37
  %v160 = vand.u32 %v115, 2147483648
  %v161 = vor.u32 1.1754944e-38, %v160
  %v162 = vsel %vm159, %v161, %v157
  %v163 = vmul.f32 %v104, %v162
  %v164 = vrcp.pop %v118
  %v165 = vmul.f32 %v118, %v164
  %v166 = vsub.f32 1.0, %v165
  %v167 = vmul.f32 %v164, %v166
  %v168 = vadd.f32 %v164, %v167
  %vm169 = vweird.f32 %v118
  %vm170 = vweird.f32 %v164
  %vm171 = vmor %vm169, %vm170
  %v172 = vsel %vm171, %v164, %v168
  %v173 = vand.u32 2147483647, %v118
  %vm174 = vcmp.eq.f32.partialorder %v173, 8.507059e+37
  %v175 = vand.u32 %v118, 2147483648
  %v176 = vor.u32 1.1754944e-38, %v175
  %v177 = vsel %vm174, %v176, %v172
  %v178 = vmul.f32 %v106, %v177
  %v179 = vlog2.pop %v109
  %v180 = vmul.f32 %v179, 0.6931472
  %v181 = vlog2.pop %v112
  %v182 = vmul.f32 %v181, 0.6931472
  %v183 = vlog2.pop %v115
  %v184 = vmul.f32 %v183, 0.6931472
  %v185 = vlog2.pop %v118
  %v186 = vmul.f32 %v185, 0.6931472
  %v187 = vsub.f32 %v95, %v180
  %v188 = vsub.f32 %v96, %v182
  %v189 = vsub.f32 %v97, %v184
  %v190 = vsub.f32 %v98, %v186
  %s191 = smul.u32 0, 32
  %v192 = vlaneseq
  %v193 = vshrl.u32 %v192, 7
  %v194 = vadd.s32 %v193, 8
  %v195 = vadd.s32 %v193, 16
  %v196 = vadd.s32 %v193, 24
  %v197 = vstv %s191
  %v198 = vadd.s32 %v197, %v193
  %v199 = vadd.s32 %v197, %v194
  %v200 = vadd.s32 %v197, %v195
  %v201 = vadd.s32 %v197, %v196
  %vm202 = vcmp.lt.s32.totalorder %v198, 32
  %vm203 = vcmp.lt.s32.totalorder %v199, 32
  %vm204 = vcmp.lt.s32.totalorder %v200, 32
  %vm205 = vcmp.lt.s32.totalorder %v201, 32
  %v206 = vsel %vm202, 1, 0
  %v207 = vsel %vm203, 1, 0
  %v208 = vsel %vm204, 1, 0
  %v209 = vsel %vm205, 1, 0
  %v210 = vcvt.s32.f32 %v206
  %v211 = vcvt.s32.f32 %v207
  %v212 = vcvt.s32.f32 %v208
  %v213 = vcvt.s32.f32 %v209
  %v214 = vmul.f32 %v133, %v210
  %v215 = vmul.f32 %v148, %v211
  %v216 = vmul.f32 %v163, %v212
  %v217 = vmul.f32 %v178, %v213
  %v218 = vld [vmem:[%s5] sm:$0x1]
  %v219 = vsel %vm41, %v214, 0.0
  %v220 = vsel %vm41, %v215, 0.0
  %v221 = vadd.f32 %v219, %v220
  %v222 = vsel %vm41, %v216, 0.0
  %v223 = vadd.f32 %v221, %v222
  %v224 = vsel %vm41, %v217, 0.0
  %v225 = vadd.f32 %v223, %v224
  %v226 = vrot.slane %v225, 4
  %v227 = vadd.f32 %v225, %v226
  %v228 = vrot.slane %v227, 2
  %v229 = vadd.f32 %v227, %v228
  %v230 = vrot.slane %v229, 1
  %v231 = vadd.f32 %v229, %v230
  %v232 = vadd.f32 %v218, %v231
  %vm233 = vcmask 122880
  %234 = vst.msk [vmem:[%s5] sm:$0x1] %vm233, %v232
  %v235 = vld [vmem:[%s6] sm:$0x1]
  %v236 = vmul.f32 %v214, %v187
  %v237 = vmul.f32 %v215, %v188
  %v238 = vmul.f32 %v216, %v189
  %v239 = vmul.f32 %v217, %v190
  %v240 = vsel %vm41, %v236, 0.0
  %v241 = vsel %vm41, %v237, 0.0
  %v242 = vadd.f32 %v240, %v241
  %v243 = vsel %vm41, %v238, 0.0
  %v244 = vadd.f32 %v242, %v243
  %v245 = vsel %vm41, %v239, 0.0
  %v246 = vadd.f32 %v244, %v245
  %v247 = vrot.slane %v246, 4
  %v248 = vadd.f32 %v246, %v247
  %v249 = vrot.slane %v248, 2
  %v250 = vadd.f32 %v248, %v249
  %v251 = vrot.slane %v250, 1
  %v252 = vadd.f32 %v250, %v251
  %v253 = vadd.f32 %v235, %v252
  %254 = vst.msk [vmem:[%s6] sm:$0x1] %vm233, %v253
  %v255 = vld [vmem:[%s3] sm:$0xff]
  %v256 = vld [vmem:[%s3 + $0x8] sm:$0xff]
  %v257 = vld [vmem:[%s3 + $0x10] sm:$0xff]
  %v258 = vld [vmem:[%s3 + $0x18] sm:$0xff]
  %v259 = vadd.f32 %v79, %v255
  %v260 = vadd.f32 %v80, %v256
  %v261 = vadd.f32 %v81, %v257
  %v262 = vadd.f32 %v82, %v258
  %v263 = vmul.f32 %v259, 2.0
  %v264 = vmul.f32 %v260, 2.0
  %v265 = vmul.f32 %v261, 2.0
  %v266 = vmul.f32 %v262, 2.0
  %v267 = vsel %vm41, %v263, -inf
  %268 = vmax.xlane.f32.xlu0 %v267
  %v269 = vpop.xlane.xlu0 %268
  %v270 = vsel %vm41, %v264, -inf
  %271 = vmax.xlane.f32.xlu0 %v270
  %v272 = vpop.xlane.xlu0 %271
  %v273 = vsel %vm41, %v265, -inf
  %274 = vmax.xlane.f32.xlu0 %v273
  %v275 = vpop.xlane.xlu0 %274
  %v276 = vsel %vm41, %v266, -inf
  %277 = vmax.xlane.f32.xlu0 %v276
  %v278 = vpop.xlane.xlu0 %277
  %v279 = vsub.f32 %v263, %v269
  %v280 = vsub.f32 %v264, %v272
  %v281 = vsub.f32 %v265, %v275
  %v282 = vsub.f32 %v266, %v278
  %v283 = vmul.f32 %v279, 1.442695
  %v284 = vpow.pop %v283
  %v285 = vmul.f32 %v280, 1.442695
  %v286 = vpow.pop %v285
  %v287 = vmul.f32 %v281, 1.442695
  %v288 = vpow.pop %v287
  %v289 = vmul.f32 %v282, 1.442695
  %v290 = vpow.pop %v289
  %v291 = vsel %vm41, %v284, 0.0
  %292 = vadd.xlane.f32.xlu0 %v291
  %v293 = vpop.xlane.xlu0 %292
  %v294 = vsel %vm41, %v286, 0.0
  %295 = vadd.xlane.f32.xlu0 %v294
  %v296 = vpop.xlane.xlu0 %295
  %v297 = vsel %vm41, %v288, 0.0
  %298 = vadd.xlane.f32.xlu0 %v297
  %v299 = vpop.xlane.xlu0 %298
  %v300 = vsel %vm41, %v290, 0.0
  %301 = vadd.xlane.f32.xlu0 %v300
  %v302 = vpop.xlane.xlu0 %301
  %v303 = vrcp.pop %v293
  %v304 = vmul.f32 %v293, %v303
  %v305 = vsub.f32 1.0, %v304
  %v306 = vmul.f32 %v303, %v305
  %v307 = vadd.f32 %v303, %v306
  %vm308 = vweird.f32 %v293
  %vm309 = vweird.f32 %v303
  %vm310 = vmor %vm308, %vm309
  %v311 = vsel %vm310, %v303, %v307
  %v312 = vand.u32 2147483647, %v293
  %vm313 = vcmp.eq.f32.partialorder %v312, 8.507059e+37
  %v314 = vand.u32 %v293, 2147483648
  %v315 = vor.u32 1.1754944e-38, %v314
  %v316 = vsel %vm313, %v315, %v311
  %v317 = vmul.f32 %v284, %v316
  %v318 = vrcp.pop %v296
  %v319 = vmul.f32 %v296, %v318
  %v320 = vsub.f32 1.0, %v319
  %v321 = vmul.f32 %v318, %v320
  %v322 = vadd.f32 %v318, %v321
  %vm323 = vweird.f32 %v296
  %vm324 = vweird.f32 %v318
  %vm325 = vmor %vm323, %vm324
  %v326 = vsel %vm325, %v318, %v322
  %v327 = vand.u32 2147483647, %v296
  %vm328 = vcmp.eq.f32.partialorder %v327, 8.507059e+37
  %v329 = vand.u32 %v296, 2147483648
  %v330 = vor.u32 1.1754944e-38, %v329
  %v331 = vsel %vm328, %v330, %v326
  %v332 = vmul.f32 %v286, %v331
  %v333 = vrcp.pop %v299
  %v334 = vmul.f32 %v299, %v333
  %v335 = vsub.f32 1.0, %v334
  %v336 = vmul.f32 %v333, %v335
  %v337 = vadd.f32 %v333, %v336
  %vm338 = vweird.f32 %v299
  %vm339 = vweird.f32 %v333
  %vm340 = vmor %vm338, %vm339
  %v341 = vsel %vm340, %v333, %v337
  %v342 = vand.u32 2147483647, %v299
  %vm343 = vcmp.eq.f32.partialorder %v342, 8.507059e+37
  %v344 = vand.u32 %v299, 2147483648
  %v345 = vor.u32 1.1754944e-38, %v344
  %v346 = vsel %vm343, %v345, %v341
  %v347 = vmul.f32 %v288, %v346
  %v348 = vrcp.pop %v302
  %v349 = vmul.f32 %v302, %v348
  %v350 = vsub.f32 1.0, %v349
  %v351 = vmul.f32 %v348, %v350
  %v352 = vadd.f32 %v348, %v351
  %vm353 = vweird.f32 %v302
  %vm354 = vweird.f32 %v348
  %vm355 = vmor %vm353, %vm354
  %v356 = vsel %vm355, %v348, %v352
  %v357 = vand.u32 2147483647, %v302
  %vm358 = vcmp.eq.f32.partialorder %v357, 8.507059e+37
  %v359 = vand.u32 %v302, 2147483648
  %v360 = vor.u32 1.1754944e-38, %v359
  %v361 = vsel %vm358, %v360, %v356
  %v362 = vmul.f32 %v290, %v361
  %v363 = vpack.c.bf16 %v332, %v317
  %v364 = vpack.c.bf16 %v362, %v347
  %v367 = vsel %vm41, %v363, 0
  %v370 = vsel %vm41, %v364, 0
  %372 = vmatpush.bf16.msra.mxu0 0
  %373 = vmatpush.bf16.msra.mxu0 0
  %374 = vmatpush.bf16.msra.mxu0 0
  %375 = vmatpush.bf16.msra.mxu0 0
  %376 = vmatpush.bf16.msra.mxu0 0
  %377 = vmatpush.bf16.msra.mxu0 0
  %378 = vmatpush.bf16.msra.mxu0 0
  %379 = vmatpush.bf16.msra.mxu0 %v40
  %380 = vmatmul.bf16.gmra.mxu0 %v367
  %v381 = vpop.f32.mrf.mxu0
  %v382 = vadd.f32 0.0, %v381
  %v383 = vpop.f32.mrf.mxu0
  %v384 = vadd.f32 0.0, %v383
  %385 = vmatmul.bf16.gmra.mxu0 %v370
  %v386 = vpop.f32.mrf.mxu0
  %v387 = vadd.f32 0.0, %v386
  %v388 = vpop.f32.mrf.mxu0
  %v389 = vadd.f32 0.0, %v388
  %390 = vdwg.mxu0
  %391 = vst.msk [vmem:[%s4] sm:$0xff] %vm41, %v382
  %392 = vst.msk [vmem:[%s4 + $0x8] sm:$0xff] %vm41, %v384
  %393 = vst.msk [vmem:[%s4 + $0x10] sm:$0xff] %vm41, %v387
  %394 = vst.msk [vmem:[%s4 + $0x18] sm:$0xff] %vm41, %v389
  // Predicated region
  $region22: #{_lambda_.15} parent=0 // pred_check
    _
  $region23: #{_lambda_.15} parent=0 // pred_check_branch
    %396 = sbr.rel (0) target = $region25
  $region24: #{_lambda_.15} parent=0 // pred_region
    _
  $region25: #{_lambda_.15} parent=0 // pred_fallthru
    _
  // Predicated region
  $region26: #{_lambda_.15} parent=0 // pred_check
    _
  $region27: #{_lambda_.15} parent=0 // pred_check_branch
    %398 = sbr.rel (0) target = $region29
  $region28: #{_lambda_.15} parent=0 // pred_region
    _
  $region29: #{_lambda_.15} parent=0 // pred_fallthru
    _
  // Predicated region
  $region30: #{_lambda_.15} parent=0 // pred_check
    _
  $region31: #{_lambda_.15} parent=0 // pred_check_branch
    %400 = sbr.rel (0) target = $region33
  $region32: #{_lambda_.15} parent=0 // pred_region
    _
  $region33: #{_lambda_.15} parent=0 // pred_fallthru
    _
  // Predicated region
  $region34: #{_lambda_.15} parent=0 // pred_check
    _
  $region35: #{_lambda_.15} parent=0 // pred_check_branch
    %402 = sbr.rel (0) target = $region37
  $region36: #{_lambda_.15} parent=0 // pred_region
    _
  $region37: #{_lambda_.15} parent=0 // pred_fallthru
    _
  // Predicated region
  $region38: #{_lambda_.15} parent=0 // pred_check
    _
  $region39: #{_lambda_.15} parent=0 // pred_check_branch
    %404 = sbr.rel (0) target = $region41
  $region40: #{_lambda_.15} parent=0 // pred_region
    _
  $region41: #{_lambda_.15} parent=0 // pred_fallthru
    _
  // Predicated region
  $region42: #{_lambda_.15} parent=0 // pred_check
    _
  $region43: #{_lambda_.15} parent=0 // pred_check_branch
    %406 = sbr.rel (0) target = $region45
  $region44: #{_lambda_.15} parent=0 // pred_region
    _
  $region45: #{_lambda_.15} parent=0 // pred_fallthru
    _

</llo_original>
